<compile_context>
chip_gen: v7x
topology: tpu7x:2x2x1
jax: 0.10.0
libtpu: 0.0.40
codegen_flags: <defaults>
</compile_context>

<pallas_src>
import math
import jax
import jax.numpy as jnp
from jax import lax
from jax.experimental import pallas as pl
from jax.experimental.pallas import tpu as pltpu

# -------------------- small, structure-preserving config --------------------
HIDDEN = 32
NUM_HEADS = 4
HEAD_DIM = HIDDEN // NUM_HEADS
INTERMEDIATE = 64
VOCAB = 128
NUM_LAYERS = 2
BATCH = 2
SEQ = 8
TOKENS = BATCH * SEQ
EPS = 1.1920928955078125e-07          # torch.finfo(float32).eps (nn.RMSNorm default)
SCALE = 1.0 / math.sqrt(HEAD_DIM)
assert SEQ & (SEQ - 1) == 0, "SEQ must be a power of two (mask uses a right shift)"
LOG2_SEQ = int(math.log2(SEQ))


# ============================ fused Pallas kernel ============================

def _rms(x):
    # nn.RMSNorm with the (all-ones) weight folded into the downstream matmul.
    ms = jnp.mean(x * x, axis=-1, keepdims=True)
    return x * lax.rsqrt(ms + EPS)


def _fused_forward_kernel(ids_ref, embed_ref,
                          wqkv_ref, bqkv_ref, wo_ref, bo_ref,
                          wgu_ref, bgu_ref, wd_ref, bd_ref,
                          lmhead_ref, logits_ref):
    # ---- fused embedding gather: one-hot(ids) @ embed (single MXU pass) ----
    ids = ids_ref[...]                                                   # (T, 1) int32
    vocab_iota = lax.broadcasted_iota(jnp.int32, (TOKENS, VOCAB), 1)
    onehot = (vocab_iota == ids).astype(jnp.float32)                     # (T, V)
    x = jnp.dot(onehot, embed_ref[...],
                preferred_element_type=jnp.float32)                      # (T, H)

    # ---- block-diagonal (per-batch) additive attention bias, built in-kernel ----
    row_b = lax.broadcasted_iota(jnp.int32, (TOKENS, TOKENS), 0) >> LOG2_SEQ
    col_b = lax.broadcasted_iota(jnp.int32, (TOKENS, TOKENS), 1) >> LOG2_SEQ
    attn_bias = jnp.where(row_b == col_b, 0.0, -1e30).astype(jnp.float32)  # (T, T)

    for l in range(NUM_LAYERS):          # tiny static layer loop, fully VMEM-resident
        # ---------------- attention block ----------------
        h = _rms(x)                                                       # (T, H)
        # fused + folded QKV projection (ln1 folded in): one (T,H)@(H,3H) MXU pass
        qkv = jnp.dot(h, wqkv_ref[l],
                      preferred_element_type=jnp.float32) + bqkv_ref[l]   # (T, 3H)

        o_heads = []
        for hd in range(NUM_HEADS):
            lo = hd * HEAD_DIM
            q_h = qkv[:, lo:lo + HEAD_DIM]                                # (T, D)
            k_h = qkv[:, HIDDEN + lo:HIDDEN + lo + HEAD_DIM]
            v_h = qkv[:, 2 * HIDDEN + lo:2 * HIDDEN + lo + HEAD_DIM]
            # scores q @ k^T (contraction on last dims, no explicit transpose)
            s = lax.dot_general(q_h, k_h, (((1,), (1,)), ((), ())),
                                preferred_element_type=jnp.float32) * SCALE
            s = s + attn_bias                                             # block-diag mask
            s = s - jnp.max(s, axis=-1, keepdims=True)
            p = jnp.exp(s)
            # approx reciprocal (EUP); rows sum to 1 up to ~1e-4 rel. error
            p = p * pl.reciprocal(jnp.sum(p, axis=-1, keepdims=True), approx=True)
            o_heads.append(jnp.dot(p, v_h, preferred_element_type=jnp.float32))

        # single fused (mha out_proj ∘ o_proj) matmul over the lane-concatenated heads
        o_cat = jnp.concatenate(o_heads, axis=1)                          # (T, H)
        x = x + jnp.dot(o_cat, wo_ref[l],
                        preferred_element_type=jnp.float32) + bo_ref[l]

        # ------------------- MLP block --------------------
        h = _rms(x)
        # fused gate/up (ln2 folded in): one (T,H)@(H,2I) lane-dense MXU pass
        gu = jnp.dot(h, wgu_ref[l],
                     preferred_element_type=jnp.float32) + bgu_ref[l]     # (T, 2I)
        g = gu[:, :INTERMEDIATE]
        u = gu[:, INTERMEDIATE:]
        sig = pl.reciprocal(1.0 + jnp.exp(-g), approx=True)               # EUP, not VPU divide
        m = g * sig * u                                                   # silu(g) * u
        x = x + jnp.dot(m, wd_ref[l],
                        preferred_element_type=jnp.float32) + bd_ref[l]

    # ---------------- final norm (weight folded) + lm_head (no bias) ----------------
    h = _rms(x)
    logits_ref[...] = jnp.dot(h, lmhead_ref[...],
                              preferred_element_type=jnp.float32)         # (T, V) lane-dense


# ============================ parameter init ================================

def _xavier_uniform(key, out_dim, in_dim):
    bound = math.sqrt(6.0 / (in_dim + out_dim))
    return jax.random.uniform(key, (out_dim, in_dim), jnp.float32, -bound, bound)


def init_params(key):
    keys = iter(jax.random.split(key, 2 + NUM_LAYERS * 11))
    embed = 0.02 * jax.random.normal(next(keys), (VOCAB, HIDDEN), jnp.float32)
    lm_head_w = _xavier_uniform(next(keys), VOCAB, HIDDEN)             # (V, H) torch layout

    wqkv, bqkv, wo, bo, wgu, bgu, wd, bd = ([] for _ in range(8))
    for _ in range(NUM_LAYERS):
        # module's explicit q/k/v/o projections (nn.Linear, zero bias)
        q_w = _xavier_uniform(next(keys), HIDDEN, HIDDEN); q_b = jnp.zeros((HIDDEN,), jnp.float32)
        k_w = _xavier_uniform(next(keys), HIDDEN, HIDDEN); k_b = jnp.zeros((HIDDEN,), jnp.float32)
        v_w = _xavier_uniform(next(keys), HIDDEN, HIDDEN); v_b = jnp.zeros((HIDDEN,), jnp.float32)
        o_w = _xavier_uniform(next(keys), HIDDEN, HIDDEN); o_b = jnp.zeros((HIDDEN,), jnp.float32)
        # nn.MultiheadAttention internals: in_proj (split q/k/v) + out_proj
        iq_w = _xavier_uniform(next(keys), HIDDEN, HIDDEN); iq_b = jnp.zeros((HIDDEN,), jnp.float32)
        ik_w = _xavier_uniform(next(keys), HIDDEN, HIDDEN); ik_b = jnp.zeros((HIDDEN,), jnp.float32)
        iv_w = _xavier_uniform(next(keys), HIDDEN, HIDDEN); iv_b = jnp.zeros((HIDDEN,), jnp.float32)
        mo_w = _xavier_uniform(next(keys), HIDDEN, HIDDEN); mo_b = jnp.zeros((HIDDEN,), jnp.float32)
        # MLP
        g_w = _xavier_uniform(next(keys), INTERMEDIATE, HIDDEN); g_b = jnp.zeros((INTERMEDIATE,), jnp.float32)
        u_w = _xavier_uniform(next(keys), INTERMEDIATE, HIDDEN); u_b = jnp.zeros((INTERMEDIATE,), jnp.float32)
        d_w = _xavier_uniform(next(keys), HIDDEN, INTERMEDIATE); d_b = jnp.zeros((HIDDEN,), jnp.float32)

        # RMSNorm weights (torch default init = ones) — folded into downstream matmuls.
        ln1_w = jnp.ones((HIDDEN,), jnp.float32)
        ln2_w = jnp.ones((HIDDEN,), jnp.float32)

        # ---- host-side algebraic folding + fusion + (K,N) transposition, done ONCE ----
        # (x @ Wq^T + bq) @ Wiq^T + biq == x @ (Wiq Wq)^T + (Wiq bq + biq)
        wq_t = (iq_w @ q_w).T; bq_t = iq_w @ q_b + iq_b
        wk_t = (ik_w @ k_w).T; bk_t = ik_w @ k_b + ik_b
        wv_t = (iv_w @ v_w).T; bv_t = iv_w @ v_b + iv_b
        wqkv_l = jnp.concatenate([wq_t, wk_t, wv_t], axis=1)            # (H, 3H)
        wqkv.append(ln1_w[:, None] * wqkv_l)                            # fold RMSNorm weight
        bqkv.append(jnp.concatenate([bq_t, bk_t, bv_t]).reshape(1, 3 * HIDDEN))
        # (attn @ Wmo^T + bmo) @ Wo^T + bo == attn @ (Wo Wmo)^T + (Wo bmo + bo)
        wo.append((o_w @ mo_w).T)                                       # (H, H)
        bo.append((o_w @ mo_b + o_b).reshape(1, HIDDEN))
        # fused gate/up, pre-transposed, ln2 folded in
        wgu_l = jnp.concatenate([g_w.T, u_w.T], axis=1)                 # (H, 2I) = (32, 128)
        wgu.append(ln2_w[:, None] * wgu_l)
        bgu.append(jnp.concatenate([g_b, u_b]).reshape(1, 2 * INTERMEDIATE))
        wd.append(d_w.T)                                                # (I, H)
        bd.append(d_b.reshape(1, HIDDEN))

    norm_w = jnp.ones((HIDDEN,), jnp.float32)                           # final RMSNorm weight
    return dict(
        embed=embed,
        wqkv=jnp.stack(wqkv), bqkv=jnp.stack(bqkv),
        wo=jnp.stack(wo), bo=jnp.stack(bo),
        wgu=jnp.stack(wgu), bgu=jnp.stack(bgu),
        wd=jnp.stack(wd), bd=jnp.stack(bd),
        lm_head_wt=norm_w[:, None] * lm_head_w.T,                       # (H, V), norm folded
    )


# ============================ model forward =================================

def mock_gemma_forward(params, input_ids):
    B, S = input_ids.shape
    ids = input_ids.reshape(B * S, 1).astype(jnp.int32)   # tiny int32 VMEM input

    vmem = pl.BlockSpec(memory_space=pltpu.MemorySpace.VMEM)
    cost = pl.CostEstimate(flops=1_000_000, transcendentals=5_000, bytes_accessed=150_000)
    logits = pl.pallas_call(
        _fused_forward_kernel,
        out_shape=jax.ShapeDtypeStruct((B * S, VOCAB), jnp.float32),
        in_specs=[vmem] * 11,
        out_specs=vmem,
        cost_estimate=cost,
    )(ids, params["embed"],
      params["wqkv"], params["bqkv"], params["wo"], params["bo"],
      params["wgu"], params["bgu"], params["wd"], params["bd"],
      params["lm_head_wt"])

    return {"logits": logits.reshape(B, S, VOCAB)}
    # TODO(synk): labels / CrossEntropyLoss path not implemented (labels=None case only).


# ================================ main ======================================

if __name__ == "__main__":
    key = jax.random.PRNGKey(0)
    pkey, dkey = jax.random.split(key)
    params = init_params(pkey)
    input_ids = jax.random.randint(dkey, (BATCH, SEQ), 0, VOCAB, dtype=jnp.int32)

    fwd = jax.jit(mock_gemma_forward)
    out = fwd(params, input_ids)
    logits = jax.block_until_ready(out["logits"])
    assert logits.shape == (BATCH, SEQ, VOCAB)
    assert bool(jnp.all(jnp.isfinite(logits)))
    print("KERNEL_OK")
</pallas_src>

<mosaic_0001>
module attributes {stable_mosaic.version = 11 : i64} {
  func.func @_fused_forward_kernel(%arg0: memref<16x1xi32, #tpu.memory_space<vmem>>, %arg1: memref<128x32xf32, #tpu.memory_space<vmem>>, %arg2: memref<2x32x96xf32, #tpu.memory_space<vmem>>, %arg3: memref<2x1x96xf32, #tpu.memory_space<vmem>>, %arg4: memref<2x32x32xf32, #tpu.memory_space<vmem>>, %arg5: memref<2x1x32xf32, #tpu.memory_space<vmem>>, %arg6: memref<2x32x128xf32, #tpu.memory_space<vmem>>, %arg7: memref<2x1x128xf32, #tpu.memory_space<vmem>>, %arg8: memref<2x64x32xf32, #tpu.memory_space<vmem>>, %arg9: memref<2x1x32xf32, #tpu.memory_space<vmem>>, %arg10: memref<32x128xf32, #tpu.memory_space<vmem>>, %arg11: memref<16x128xf32, #tpu.memory_space<vmem>>) attributes {dimension_semantics = [], scalar_prefetch = 0 : i64, scratch_operands = 0 : i64, tpu.core_type = #tpu.core_type<tc>} {
    %c0 = arith.constant 0 : index
    %c0_0 = arith.constant 0 : index
    %0 = vector.load %arg0[%c0, %c0_0] : memref<16x1xi32, #tpu.memory_space<vmem>>, vector<16x1xi32>
    %1 = tpu.iota {dimensions = array<i32: 1>} : vector<16x128xi32>
    %2 = vector.broadcast %0 : vector<16x1xi32> to vector<16x128xi32>
    %3 = arith.cmpi eq, %1, %2 : vector<16x128xi32>
    %4 = arith.extui %3 : vector<16x128xi1> to vector<16x128xi32>
    %5 = arith.sitofp %4 : vector<16x128xi32> to vector<16x128xf32>
    %c0_1 = arith.constant 0 : index
    %c0_2 = arith.constant 0 : index
    %6 = vector.load %arg1[%c0_1, %c0_2] : memref<128x32xf32, #tpu.memory_space<vmem>>, vector<128x32xf32>
    %cst = arith.constant dense<0.000000e+00> : vector<16x32xf32>
    %7 = tpu.matmul %5, %6, %cst {dimension_numbers = #tpu.dot_dimension_numbers<[1], [0], [0], [1], [0, 0, 1, 1], [], []>} : vector<16x128xf32>, vector<128x32xf32>, vector<16x32xf32> -> vector<16x32xf32>
    %8 = tpu.iota {dimensions = array<i32: 0>} : vector<16x16xi32>
    %c3_i32 = arith.constant 3 : i32
    %9 = vector.broadcast %c3_i32 : i32 to vector<16x16xi32>
    %10 = arith.shrsi %8, %9 : vector<16x16xi32>
    %11 = tpu.iota {dimensions = array<i32: 1>} : vector<16x16xi32>
    %c3_i32_3 = arith.constant 3 : i32
    %12 = vector.broadcast %c3_i32_3 : i32 to vector<16x16xi32>
    %13 = arith.shrsi %11, %12 : vector<16x16xi32>
    %14 = arith.cmpi eq, %10, %13 : vector<16x16xi32>
    %cst_4 = arith.constant 0.000000e+00 : f32
    %cst_5 = arith.constant -1.000000e+30 : f32
    %15 = vector.broadcast %cst_4 : f32 to vector<16x16xf32>
    %16 = vector.broadcast %cst_5 : f32 to vector<16x16xf32>
    %17 = arith.select %14, %15, %16 : vector<16x16xi1>, vector<16x16xf32>
    %18 = arith.mulf %7, %7 : vector<16x32xf32>
    %cst_6 = arith.constant dense<0.000000e+00> : vector<16xf32>
    %19 = vector.multi_reduction <add>, %18, %cst_6 [1] : vector<16x32xf32> to vector<16xf32>
    %20 = vector.shape_cast %19 : vector<16xf32> to vector<16x1xf32>
    %cst_7 = arith.constant 3.200000e+01 : f32
    %21 = vector.broadcast %cst_7 : f32 to vector<16x1xf32>
    %22 = arith.divf %20, %21 : vector<16x1xf32>
    %cst_8 = arith.constant 1.1920929E-7 : f32
    %23 = vector.broadcast %cst_8 : f32 to vector<16x1xf32>
    %24 = arith.addf %22, %23 : vector<16x1xf32>
    %25 = math.rsqrt %24 : vector<16x1xf32>
    %26 = vector.broadcast %25 : vector<16x1xf32> to vector<16x32xf32>
    %27 = arith.mulf %7, %26 : vector<16x32xf32>
    %c0_9 = arith.constant 0 : index
    %c0_10 = arith.constant 0 : index
    %c0_11 = arith.constant 0 : index
    %28 = vector.load %arg2[%c0_9, %c0_10, %c0_11] : memref<2x32x96xf32, #tpu.memory_space<vmem>>, vector<1x32x96xf32>
    %29 = vector.shape_cast %28 : vector<1x32x96xf32> to vector<32x96xf32>
    %cst_12 = arith.constant dense<0.000000e+00> : vector<16x96xf32>
    %30 = tpu.matmul %27, %29, %cst_12 {dimension_numbers = #tpu.dot_dimension_numbers<[1], [0], [0], [1], [0, 0, 1, 1], [], []>} : vector<16x32xf32>, vector<32x96xf32>, vector<16x96xf32> -> vector<16x96xf32>
    %c0_13 = arith.constant 0 : index
    %c0_14 = arith.constant 0 : index
    %c0_15 = arith.constant 0 : index
    %31 = vector.load %arg3[%c0_13, %c0_14, %c0_15] : memref<2x1x96xf32, #tpu.memory_space<vmem>>, vector<1x1x96xf32>
    %32 = vector.shape_cast %31 : vector<1x1x96xf32> to vector<1x96xf32>
    %33 = vector.broadcast %32 : vector<1x96xf32> to vector<16x96xf32>
    %34 = arith.addf %30, %33 : vector<16x96xf32>
    %35 = vector.extract_strided_slice %34 {offsets = [0, 0], sizes = [16, 8], strides = [1, 1]} : vector<16x96xf32> to vector<16x8xf32>
    %36 = vector.extract_strided_slice %34 {offsets = [0, 32], sizes = [16, 8], strides = [1, 1]} : vector<16x96xf32> to vector<16x8xf32>
    %37 = vector.extract_strided_slice %34 {offsets = [0, 64], sizes = [16, 8], strides = [1, 1]} : vector<16x96xf32> to vector<16x8xf32>
    %cst_16 = arith.constant dense<0.000000e+00> : vector<16x16xf32>
    %38 = tpu.matmul %35, %36, %cst_16 {dimension_numbers = #tpu.dot_dimension_numbers<[1], [1], [0], [0], [0, 0, 1, 0], [], []>} : vector<16x8xf32>, vector<16x8xf32>, vector<16x16xf32> -> vector<16x16xf32>
    %cst_17 = arith.constant 0.353553385 : f32
    %39 = vector.broadcast %cst_17 : f32 to vector<16x16xf32>
    %40 = arith.mulf %38, %39 : vector<16x16xf32>
    %41 = arith.addf %40, %17 : vector<16x16xf32>
    %cst_18 = arith.constant dense<0xFF800000> : vector<16xf32>
    %42 = vector.multi_reduction <maximumf>, %41, %cst_18 [1] : vector<16x16xf32> to vector<16xf32>
    %43 = vector.shape_cast %42 : vector<16xf32> to vector<16x1xf32>
    %44 = vector.broadcast %43 : vector<16x1xf32> to vector<16x16xf32>
    %45 = arith.subf %41, %44 : vector<16x16xf32>
    %46 = math.exp %45 : vector<16x16xf32>
    %cst_19 = arith.constant dense<0.000000e+00> : vector<16xf32>
    %47 = vector.multi_reduction <add>, %46, %cst_19 [1] : vector<16x16xf32> to vector<16xf32>
    %48 = vector.shape_cast %47 : vector<16xf32> to vector<16x1xf32>
    %49 = tpu.reciprocal %48 {approx = true} : vector<16x1xf32> -> vector<16x1xf32>
    %50 = vector.broadcast %49 : vector<16x1xf32> to vector<16x16xf32>
    %51 = arith.mulf %46, %50 : vector<16x16xf32>
    %cst_20 = arith.constant dense<0.000000e+00> : vector<16x8xf32>
    %52 = tpu.matmul %51, %37, %cst_20 {dimension_numbers = #tpu.dot_dimension_numbers<[1], [0], [0], [1], [0, 0, 1, 1], [], []>} : vector<16x16xf32>, vector<16x8xf32>, vector<16x8xf32> -> vector<16x8xf32>
    %53 = vector.extract_strided_slice %34 {offsets = [0, 8], sizes = [16, 8], strides = [1, 1]} : vector<16x96xf32> to vector<16x8xf32>
    %54 = vector.extract_strided_slice %34 {offsets = [0, 40], sizes = [16, 8], strides = [1, 1]} : vector<16x96xf32> to vector<16x8xf32>
    %55 = vector.extract_strided_slice %34 {offsets = [0, 72], sizes = [16, 8], strides = [1, 1]} : vector<16x96xf32> to vector<16x8xf32>
    %cst_21 = arith.constant dense<0.000000e+00> : vector<16x16xf32>
    %56 = tpu.matmul %53, %54, %cst_21 {dimension_numbers = #tpu.dot_dimension_numbers<[1], [1], [0], [0], [0, 0, 1, 0], [], []>} : vector<16x8xf32>, vector<16x8xf32>, vector<16x16xf32> -> vector<16x16xf32>
    %cst_22 = arith.constant 0.353553385 : f32
    %57 = vector.broadcast %cst_22 : f32 to vector<16x16xf32>
    %58 = arith.mulf %56, %57 : vector<16x16xf32>
    %59 = arith.addf %58, %17 : vector<16x16xf32>
    %cst_23 = arith.constant dense<0xFF800000> : vector<16xf32>
    %60 = vector.multi_reduction <maximumf>, %59, %cst_23 [1] : vector<16x16xf32> to vector<16xf32>
    %61 = vector.shape_cast %60 : vector<16xf32> to vector<16x1xf32>
    %62 = vector.broadcast %61 : vector<16x1xf32> to vector<16x16xf32>
    %63 = arith.subf %59, %62 : vector<16x16xf32>
    %64 = math.exp %63 : vector<16x16xf32>
    %cst_24 = arith.constant dense<0.000000e+00> : vector<16xf32>
    %65 = vector.multi_reduction <add>, %64, %cst_24 [1] : vector<16x16xf32> to vector<16xf32>
    %66 = vector.shape_cast %65 : vector<16xf32> to vector<16x1xf32>
    %67 = tpu.reciprocal %66 {approx = true} : vector<16x1xf32> -> vector<16x1xf32>
    %68 = vector.broadcast %67 : vector<16x1xf32> to vector<16x16xf32>
    %69 = arith.mulf %64, %68 : vector<16x16xf32>
    %cst_25 = arith.constant dense<0.000000e+00> : vector<16x8xf32>
    %70 = tpu.matmul %69, %55, %cst_25 {dimension_numbers = #tpu.dot_dimension_numbers<[1], [0], [0], [1], [0, 0, 1, 1], [], []>} : vector<16x16xf32>, vector<16x8xf32>, vector<16x8xf32> -> vector<16x8xf32>
    %71 = vector.extract_strided_slice %34 {offsets = [0, 16], sizes = [16, 8], strides = [1, 1]} : vector<16x96xf32> to vector<16x8xf32>
    %72 = vector.extract_strided_slice %34 {offsets = [0, 48], sizes = [16, 8], strides = [1, 1]} : vector<16x96xf32> to vector<16x8xf32>
    %73 = vector.extract_strided_slice %34 {offsets = [0, 80], sizes = [16, 8], strides = [1, 1]} : vector<16x96xf32> to vector<16x8xf32>
    %cst_26 = arith.constant dense<0.000000e+00> : vector<16x16xf32>
    %74 = tpu.matmul %71, %72, %cst_26 {dimension_numbers = #tpu.dot_dimension_numbers<[1], [1], [0], [0], [0, 0, 1, 0], [], []>} : vector<16x8xf32>, vector<16x8xf32>, vector<16x16xf32> -> vector<16x16xf32>
    %cst_27 = arith.constant 0.353553385 : f32
    %75 = vector.broadcast %cst_27 : f32 to vector<16x16xf32>
    %76 = arith.mulf %74, %75 : vector<16x16xf32>
    %77 = arith.addf %76, %17 : vector<16x16xf32>
    %cst_28 = arith.constant dense<0xFF800000> : vector<16xf32>
    %78 = vector.multi_reduction <maximumf>, %77, %cst_28 [1] : vector<16x16xf32> to vector<16xf32>
    %79 = vector.shape_cast %78 : vector<16xf32> to vector<16x1xf32>
    %80 = vector.broadcast %79 : vector<16x1xf32> to vector<16x16xf32>
    %81 = arith.subf %77, %80 : vector<16x16xf32>
    %82 = math.exp %81 : vector<16x16xf32>
    %cst_29 = arith.constant dense<0.000000e+00> : vector<16xf32>
    %83 = vector.multi_reduction <add>, %82, %cst_29 [1] : vector<16x16xf32> to vector<16xf32>
    %84 = vector.shape_cast %83 : vector<16xf32> to vector<16x1xf32>
    %85 = tpu.reciprocal %84 {approx = true} : vector<16x1xf32> -> vector<16x1xf32>
    %86 = vector.broadcast %85 : vector<16x1xf32> to vector<16x16xf32>
    %87 = arith.mulf %82, %86 : vector<16x16xf32>
    %cst_30 = arith.constant dense<0.000000e+00> : vector<16x8xf32>
    %88 = tpu.matmul %87, %73, %cst_30 {dimension_numbers = #tpu.dot_dimension_numbers<[1], [0], [0], [1], [0, 0, 1, 1], [], []>} : vector<16x16xf32>, vector<16x8xf32>, vector<16x8xf32> -> vector<16x8xf32>
    %89 = vector.extract_strided_slice %34 {offsets = [0, 24], sizes = [16, 8], strides = [1, 1]} : vector<16x96xf32> to vector<16x8xf32>
    %90 = vector.extract_strided_slice %34 {offsets = [0, 56], sizes = [16, 8], strides = [1, 1]} : vector<16x96xf32> to vector<16x8xf32>
    %91 = vector.extract_strided_slice %34 {offsets = [0, 88], sizes = [16, 8], strides = [1, 1]} : vector<16x96xf32> to vector<16x8xf32>
    %cst_31 = arith.constant dense<0.000000e+00> : vector<16x16xf32>
    %92 = tpu.matmul %89, %90, %cst_31 {dimension_numbers = #tpu.dot_dimension_numbers<[1], [1], [0], [0], [0, 0, 1, 0], [], []>} : vector<16x8xf32>, vector<16x8xf32>, vector<16x16xf32> -> vector<16x16xf32>
    %cst_32 = arith.constant 0.353553385 : f32
    %93 = vector.broadcast %cst_32 : f32 to vector<16x16xf32>
    %94 = arith.mulf %92, %93 : vector<16x16xf32>
    %95 = arith.addf %94, %17 : vector<16x16xf32>
    %cst_33 = arith.constant dense<0xFF800000> : vector<16xf32>
    %96 = vector.multi_reduction <maximumf>, %95, %cst_33 [1] : vector<16x16xf32> to vector<16xf32>
    %97 = vector.shape_cast %96 : vector<16xf32> to vector<16x1xf32>
    %98 = vector.broadcast %97 : vector<16x1xf32> to vector<16x16xf32>
    %99 = arith.subf %95, %98 : vector<16x16xf32>
    %100 = math.exp %99 : vector<16x16xf32>
    %cst_34 = arith.constant dense<0.000000e+00> : vector<16xf32>
    %101 = vector.multi_reduction <add>, %100, %cst_34 [1] : vector<16x16xf32> to vector<16xf32>
    %102 = vector.shape_cast %101 : vector<16xf32> to vector<16x1xf32>
    %103 = tpu.reciprocal %102 {approx = true} : vector<16x1xf32> -> vector<16x1xf32>
    %104 = vector.broadcast %103 : vector<16x1xf32> to vector<16x16xf32>
    %105 = arith.mulf %100, %104 : vector<16x16xf32>
    %cst_35 = arith.constant dense<0.000000e+00> : vector<16x8xf32>
    %106 = tpu.matmul %105, %91, %cst_35 {dimension_numbers = #tpu.dot_dimension_numbers<[1], [0], [0], [1], [0, 0, 1, 1], [], []>} : vector<16x16xf32>, vector<16x8xf32>, vector<16x8xf32> -> vector<16x8xf32>
    %107 = tpu.concatenate %52, %70, %88, %106 in 1 : vector<16x8xf32>, vector<16x8xf32>, vector<16x8xf32>, vector<16x8xf32> -> vector<16x32xf32>
    %c0_36 = arith.constant 0 : index
    %c0_37 = arith.constant 0 : index
    %c0_38 = arith.constant 0 : index
    %108 = vector.load %arg4[%c0_36, %c0_37, %c0_38] : memref<2x32x32xf32, #tpu.memory_space<vmem>>, vector<1x32x32xf32>
    %109 = vector.shape_cast %108 : vector<1x32x32xf32> to vector<32x32xf32>
    %cst_39 = arith.constant dense<0.000000e+00> : vector<16x32xf32>
    %110 = tpu.matmul %107, %109, %cst_39 {dimension_numbers = #tpu.dot_dimension_numbers<[1], [0], [0], [1], [0, 0, 1, 1], [], []>} : vector<16x32xf32>, vector<32x32xf32>, vector<16x32xf32> -> vector<16x32xf32>
    %111 = arith.addf %7, %110 : vector<16x32xf32>
    %c0_40 = arith.constant 0 : index
    %c0_41 = arith.constant 0 : index
    %c0_42 = arith.constant 0 : index
    %112 = vector.load %arg5[%c0_40, %c0_41, %c0_42] : memref<2x1x32xf32, #tpu.memory_space<vmem>>, vector<1x1x32xf32>
    %113 = vector.shape_cast %112 : vector<1x1x32xf32> to vector<1x32xf32>
    %114 = vector.broadcast %113 : vector<1x32xf32> to vector<16x32xf32>
    %115 = arith.addf %111, %114 : vector<16x32xf32>
    %116 = arith.mulf %115, %115 : vector<16x32xf32>
    %cst_43 = arith.constant dense<0.000000e+00> : vector<16xf32>
    %117 = vector.multi_reduction <add>, %116, %cst_43 [1] : vector<16x32xf32> to vector<16xf32>
    %118 = vector.shape_cast %117 : vector<16xf32> to vector<16x1xf32>
    %cst_44 = arith.constant 3.200000e+01 : f32
    %119 = vector.broadcast %cst_44 : f32 to vector<16x1xf32>
    %120 = arith.divf %118, %119 : vector<16x1xf32>
    %cst_45 = arith.constant 1.1920929E-7 : f32
    %121 = vector.broadcast %cst_45 : f32 to vector<16x1xf32>
    %122 = arith.addf %120, %121 : vector<16x1xf32>
    %123 = math.rsqrt %122 : vector<16x1xf32>
    %124 = vector.broadcast %123 : vector<16x1xf32> to vector<16x32xf32>
    %125 = arith.mulf %115, %124 : vector<16x32xf32>
    %c0_46 = arith.constant 0 : index
    %c0_47 = arith.constant 0 : index
    %c0_48 = arith.constant 0 : index
    %126 = vector.load %arg6[%c0_46, %c0_47, %c0_48] : memref<2x32x128xf32, #tpu.memory_space<vmem>>, vector<1x32x128xf32>
    %127 = vector.shape_cast %126 : vector<1x32x128xf32> to vector<32x128xf32>
    %cst_49 = arith.constant dense<0.000000e+00> : vector<16x128xf32>
    %128 = tpu.matmul %125, %127, %cst_49 {dimension_numbers = #tpu.dot_dimension_numbers<[1], [0], [0], [1], [0, 0, 1, 1], [], []>} : vector<16x32xf32>, vector<32x128xf32>, vector<16x128xf32> -> vector<16x128xf32>
    %c0_50 = arith.constant 0 : index
    %c0_51 = arith.constant 0 : index
    %c0_52 = arith.constant 0 : index
    %129 = vector.load %arg7[%c0_50, %c0_51, %c0_52] : memref<2x1x128xf32, #tpu.memory_space<vmem>>, vector<1x1x128xf32>
    %130 = vector.shape_cast %129 : vector<1x1x128xf32> to vector<1x128xf32>
    %131 = vector.broadcast %130 : vector<1x128xf32> to vector<16x128xf32>
    %132 = arith.addf %128, %131 : vector<16x128xf32>
    %133 = vector.extract_strided_slice %132 {offsets = [0, 0], sizes = [16, 64], strides = [1, 1]} : vector<16x128xf32> to vector<16x64xf32>
    %134 = vector.extract_strided_slice %132 {offsets = [0, 64], sizes = [16, 64], strides = [1, 1]} : vector<16x128xf32> to vector<16x64xf32>
    %cst_53 = arith.constant 0.000000e+00 : f32
    %135 = vector.broadcast %cst_53 : f32 to vector<16x64xf32>
    %136 = arith.subf %135, %133 : vector<16x64xf32>
    %137 = math.exp %136 : vector<16x64xf32>
    %cst_54 = arith.constant 1.000000e+00 : f32
    %138 = vector.broadcast %cst_54 : f32 to vector<16x64xf32>
    %139 = arith.addf %138, %137 : vector<16x64xf32>
    %140 = tpu.reciprocal %139 {approx = true} : vector<16x64xf32> -> vector<16x64xf32>
    %141 = arith.mulf %133, %140 : vector<16x64xf32>
    %142 = arith.mulf %141, %134 : vector<16x64xf32>
    %c0_55 = arith.constant 0 : index
    %c0_56 = arith.constant 0 : index
    %c0_57 = arith.constant 0 : index
    %143 = vector.load %arg8[%c0_55, %c0_56, %c0_57] : memref<2x64x32xf32, #tpu.memory_space<vmem>>, vector<1x64x32xf32>
    %144 = vector.shape_cast %143 : vector<1x64x32xf32> to vector<64x32xf32>
    %cst_58 = arith.constant dense<0.000000e+00> : vector<16x32xf32>
    %145 = tpu.matmul %142, %144, %cst_58 {dimension_numbers = #tpu.dot_dimension_numbers<[1], [0], [0], [1], [0, 0, 1, 1], [], []>} : vector<16x64xf32>, vector<64x32xf32>, vector<16x32xf32> -> vector<16x32xf32>
    %146 = arith.addf %115, %145 : vector<16x32xf32>
    %c0_59 = arith.constant 0 : index
    %c0_60 = arith.constant 0 : index
    %c0_61 = arith.constant 0 : index
    %147 = vector.load %arg9[%c0_59, %c0_60, %c0_61] : memref<2x1x32xf32, #tpu.memory_space<vmem>>, vector<1x1x32xf32>
    %148 = vector.shape_cast %147 : vector<1x1x32xf32> to vector<1x32xf32>
    %149 = vector.broadcast %148 : vector<1x32xf32> to vector<16x32xf32>
    %150 = arith.addf %146, %149 : vector<16x32xf32>
    %151 = arith.mulf %150, %150 : vector<16x32xf32>
    %cst_62 = arith.constant dense<0.000000e+00> : vector<16xf32>
    %152 = vector.multi_reduction <add>, %151, %cst_62 [1] : vector<16x32xf32> to vector<16xf32>
    %153 = vector.shape_cast %152 : vector<16xf32> to vector<16x1xf32>
    %cst_63 = arith.constant 3.200000e+01 : f32
    %154 = vector.broadcast %cst_63 : f32 to vector<16x1xf32>
    %155 = arith.divf %153, %154 : vector<16x1xf32>
    %cst_64 = arith.constant 1.1920929E-7 : f32
    %156 = vector.broadcast %cst_64 : f32 to vector<16x1xf32>
    %157 = arith.addf %155, %156 : vector<16x1xf32>
    %158 = math.rsqrt %157 : vector<16x1xf32>
    %159 = vector.broadcast %158 : vector<16x1xf32> to vector<16x32xf32>
    %160 = arith.mulf %150, %159 : vector<16x32xf32>
    %c1 = arith.constant 1 : index
    %c0_65 = arith.constant 0 : index
    %c0_66 = arith.constant 0 : index
    %161 = vector.load %arg2[%c1, %c0_65, %c0_66] : memref<2x32x96xf32, #tpu.memory_space<vmem>>, vector<1x32x96xf32>
    %162 = vector.shape_cast %161 : vector<1x32x96xf32> to vector<32x96xf32>
    %cst_67 = arith.constant dense<0.000000e+00> : vector<16x96xf32>
    %163 = tpu.matmul %160, %162, %cst_67 {dimension_numbers = #tpu.dot_dimension_numbers<[1], [0], [0], [1], [0, 0, 1, 1], [], []>} : vector<16x32xf32>, vector<32x96xf32>, vector<16x96xf32> -> vector<16x96xf32>
    %c1_68 = arith.constant 1 : index
    %c0_69 = arith.constant 0 : index
    %c0_70 = arith.constant 0 : index
    %164 = vector.load %arg3[%c1_68, %c0_69, %c0_70] : memref<2x1x96xf32, #tpu.memory_space<vmem>>, vector<1x1x96xf32>
    %165 = vector.shape_cast %164 : vector<1x1x96xf32> to vector<1x96xf32>
    %166 = vector.broadcast %165 : vector<1x96xf32> to vector<16x96xf32>
    %167 = arith.addf %163, %166 : vector<16x96xf32>
    %168 = vector.extract_strided_slice %167 {offsets = [0, 0], sizes = [16, 8], strides = [1, 1]} : vector<16x96xf32> to vector<16x8xf32>
    %169 = vector.extract_strided_slice %167 {offsets = [0, 32], sizes = [16, 8], strides = [1, 1]} : vector<16x96xf32> to vector<16x8xf32>
    %170 = vector.extract_strided_slice %167 {offsets = [0, 64], sizes = [16, 8], strides = [1, 1]} : vector<16x96xf32> to vector<16x8xf32>
    %cst_71 = arith.constant dense<0.000000e+00> : vector<16x16xf32>
    %171 = tpu.matmul %168, %169, %cst_71 {dimension_numbers = #tpu.dot_dimension_numbers<[1], [1], [0], [0], [0, 0, 1, 0], [], []>} : vector<16x8xf32>, vector<16x8xf32>, vector<16x16xf32> -> vector<16x16xf32>
    %cst_72 = arith.constant 0.353553385 : f32
    %172 = vector.broadcast %cst_72 : f32 to vector<16x16xf32>
    %173 = arith.mulf %171, %172 : vector<16x16xf32>
    %174 = arith.addf %173, %17 : vector<16x16xf32>
    %cst_73 = arith.constant dense<0xFF800000> : vector<16xf32>
    %175 = vector.multi_reduction <maximumf>, %174, %cst_73 [1] : vector<16x16xf32> to vector<16xf32>
    %176 = vector.shape_cast %175 : vector<16xf32> to vector<16x1xf32>
    %177 = vector.broadcast %176 : vector<16x1xf32> to vector<16x16xf32>
    %178 = arith.subf %174, %177 : vector<16x16xf32>
    %179 = math.exp %178 : vector<16x16xf32>
    %cst_74 = arith.constant dense<0.000000e+00> : vector<16xf32>
    %180 = vector.multi_reduction <add>, %179, %cst_74 [1] : vector<16x16xf32> to vector<16xf32>
    %181 = vector.shape_cast %180 : vector<16xf32> to vector<16x1xf32>
    %182 = tpu.reciprocal %181 {approx = true} : vector<16x1xf32> -> vector<16x1xf32>
    %183 = vector.broadcast %182 : vector<16x1xf32> to vector<16x16xf32>
    %184 = arith.mulf %179, %183 : vector<16x16xf32>
    %cst_75 = arith.constant dense<0.000000e+00> : vector<16x8xf32>
    %185 = tpu.matmul %184, %170, %cst_75 {dimension_numbers = #tpu.dot_dimension_numbers<[1], [0], [0], [1], [0, 0, 1, 1], [], []>} : vector<16x16xf32>, vector<16x8xf32>, vector<16x8xf32> -> vector<16x8xf32>
    %186 = vector.extract_strided_slice %167 {offsets = [0, 8], sizes = [16, 8], strides = [1, 1]} : vector<16x96xf32> to vector<16x8xf32>
    %187 = vector.extract_strided_slice %167 {offsets = [0, 40], sizes = [16, 8], strides = [1, 1]} : vector<16x96xf32> to vector<16x8xf32>
    %188 = vector.extract_strided_slice %167 {offsets = [0, 72], sizes = [16, 8], strides = [1, 1]} : vector<16x96xf32> to vector<16x8xf32>
    %cst_76 = arith.constant dense<0.000000e+00> : vector<16x16xf32>
    %189 = tpu.matmul %186, %187, %cst_76 {dimension_numbers = #tpu.dot_dimension_numbers<[1], [1], [0], [0], [0, 0, 1, 0], [], []>} : vector<16x8xf32>, vector<16x8xf32>, vector<16x16xf32> -> vector<16x16xf32>
    %cst_77 = arith.constant 0.353553385 : f32
    %190 = vector.broadcast %cst_77 : f32 to vector<16x16xf32>
    %191 = arith.mulf %189, %190 : vector<16x16xf32>
    %192 = arith.addf %191, %17 : vector<16x16xf32>
    %cst_78 = arith.constant dense<0xFF800000> : vector<16xf32>
    %193 = vector.multi_reduction <maximumf>, %192, %cst_78 [1] : vector<16x16xf32> to vector<16xf32>
    %194 = vector.shape_cast %193 : vector<16xf32> to vector<16x1xf32>
    %195 = vector.broadcast %194 : vector<16x1xf32> to vector<16x16xf32>
    %196 = arith.subf %192, %195 : vector<16x16xf32>
    %197 = math.exp %196 : vector<16x16xf32>
    %cst_79 = arith.constant dense<0.000000e+00> : vector<16xf32>
    %198 = vector.multi_reduction <add>, %197, %cst_79 [1] : vector<16x16xf32> to vector<16xf32>
    %199 = vector.shape_cast %198 : vector<16xf32> to vector<16x1xf32>
    %200 = tpu.reciprocal %199 {approx = true} : vector<16x1xf32> -> vector<16x1xf32>
    %201 = vector.broadcast %200 : vector<16x1xf32> to vector<16x16xf32>
    %202 = arith.mulf %197, %201 : vector<16x16xf32>
    %cst_80 = arith.constant dense<0.000000e+00> : vector<16x8xf32>
    %203 = tpu.matmul %202, %188, %cst_80 {dimension_numbers = #tpu.dot_dimension_numbers<[1], [0], [0], [1], [0, 0, 1, 1], [], []>} : vector<16x16xf32>, vector<16x8xf32>, vector<16x8xf32> -> vector<16x8xf32>
    %204 = vector.extract_strided_slice %167 {offsets = [0, 16], sizes = [16, 8], strides = [1, 1]} : vector<16x96xf32> to vector<16x8xf32>
    %205 = vector.extract_strided_slice %167 {offsets = [0, 48], sizes = [16, 8], strides = [1, 1]} : vector<16x96xf32> to vector<16x8xf32>
    %206 = vector.extract_strided_slice %167 {offsets = [0, 80], sizes = [16, 8], strides = [1, 1]} : vector<16x96xf32> to vector<16x8xf32>
    %cst_81 = arith.constant dense<0.000000e+00> : vector<16x16xf32>
    %207 = tpu.matmul %204, %205, %cst_81 {dimension_numbers = #tpu.dot_dimension_numbers<[1], [1], [0], [0], [0, 0, 1, 0], [], []>} : vector<16x8xf32>, vector<16x8xf32>, vector<16x16xf32> -> vector<16x16xf32>
    %cst_82 = arith.constant 0.353553385 : f32
    %208 = vector.broadcast %cst_82 : f32 to vector<16x16xf32>
    %209 = arith.mulf %207, %208 : vector<16x16xf32>
    %210 = arith.addf %209, %17 : vector<16x16xf32>
    %cst_83 = arith.constant dense<0xFF800000> : vector<16xf32>
    %211 = vector.multi_reduction <maximumf>, %210, %cst_83 [1] : vector<16x16xf32> to vector<16xf32>
    %212 = vector.shape_cast %211 : vector<16xf32> to vector<16x1xf32>
    %213 = vector.broadcast %212 : vector<16x1xf32> to vector<16x16xf32>
    %214 = arith.subf %210, %213 : vector<16x16xf32>
    %215 = math.exp %214 : vector<16x16xf32>
    %cst_84 = arith.constant dense<0.000000e+00> : vector<16xf32>
    %216 = vector.multi_reduction <add>, %215, %cst_84 [1] : vector<16x16xf32> to vector<16xf32>
    %217 = vector.shape_cast %216 : vector<16xf32> to vector<16x1xf32>
    %218 = tpu.reciprocal %217 {approx = true} : vector<16x1xf32> -> vector<16x1xf32>
    %219 = vector.broadcast %218 : vector<16x1xf32> to vector<16x16xf32>
    %220 = arith.mulf %215, %219 : vector<16x16xf32>
    %cst_85 = arith.constant dense<0.000000e+00> : vector<16x8xf32>
    %221 = tpu.matmul %220, %206, %cst_85 {dimension_numbers = #tpu.dot_dimension_numbers<[1], [0], [0], [1], [0, 0, 1, 1], [], []>} : vector<16x16xf32>, vector<16x8xf32>, vector<16x8xf32> -> vector<16x8xf32>
    %222 = vector.extract_strided_slice %167 {offsets = [0, 24], sizes = [16, 8], strides = [1, 1]} : vector<16x96xf32> to vector<16x8xf32>
    %223 = vector.extract_strided_slice %167 {offsets = [0, 56], sizes = [16, 8], strides = [1, 1]} : vector<16x96xf32> to vector<16x8xf32>
    %224 = vector.extract_strided_slice %167 {offsets = [0, 88], sizes = [16, 8], strides = [1, 1]} : vector<16x96xf32> to vector<16x8xf32>
    %cst_86 = arith.constant dense<0.000000e+00> : vector<16x16xf32>
    %225 = tpu.matmul %222, %223, %cst_86 {dimension_numbers = #tpu.dot_dimension_numbers<[1], [1], [0], [0], [0, 0, 1, 0], [], []>} : vector<16x8xf32>, vector<16x8xf32>, vector<16x16xf32> -> vector<16x16xf32>
    %cst_87 = arith.constant 0.353553385 : f32
    %226 = vector.broadcast %cst_87 : f32 to vector<16x16xf32>
    %227 = arith.mulf %225, %226 : vector<16x16xf32>
    %228 = arith.addf %227, %17 : vector<16x16xf32>
    %cst_88 = arith.constant dense<0xFF800000> : vector<16xf32>
    %229 = vector.multi_reduction <maximumf>, %228, %cst_88 [1] : vector<16x16xf32> to vector<16xf32>
    %230 = vector.shape_cast %229 : vector<16xf32> to vector<16x1xf32>
    %231 = vector.broadcast %230 : vector<16x1xf32> to vector<16x16xf32>
    %232 = arith.subf %228, %231 : vector<16x16xf32>
    %233 = math.exp %232 : vector<16x16xf32>
    %cst_89 = arith.constant dense<0.000000e+00> : vector<16xf32>
    %234 = vector.multi_reduction <add>, %233, %cst_89 [1] : vector<16x16xf32> to vector<16xf32>
    %235 = vector.shape_cast %234 : vector<16xf32> to vector<16x1xf32>
    %236 = tpu.reciprocal %235 {approx = true} : vector<16x1xf32> -> vector<16x1xf32>
    %237 = vector.broadcast %236 : vector<16x1xf32> to vector<16x16xf32>
    %238 = arith.mulf %233, %237 : vector<16x16xf32>
    %cst_90 = arith.constant dense<0.000000e+00> : vector<16x8xf32>
    %239 = tpu.matmul %238, %224, %cst_90 {dimension_numbers = #tpu.dot_dimension_numbers<[1], [0], [0], [1], [0, 0, 1, 1], [], []>} : vector<16x16xf32>, vector<16x8xf32>, vector<16x8xf32> -> vector<16x8xf32>
    %240 = tpu.concatenate %185, %203, %221, %239 in 1 : vector<16x8xf32>, vector<16x8xf32>, vector<16x8xf32>, vector<16x8xf32> -> vector<16x32xf32>
    %c1_91 = arith.constant 1 : index
    %c0_92 = arith.constant 0 : index
    %c0_93 = arith.constant 0 : index
    %241 = vector.load %arg4[%c1_91, %c0_92, %c0_93] : memref<2x32x32xf32, #tpu.memory_space<vmem>>, vector<1x32x32xf32>
    %242 = vector.shape_cast %241 : vector<1x32x32xf32> to vector<32x32xf32>
    %cst_94 = arith.constant dense<0.000000e+00> : vector<16x32xf32>
    %243 = tpu.matmul %240, %242, %cst_94 {dimension_numbers = #tpu.dot_dimension_numbers<[1], [0], [0], [1], [0, 0, 1, 1], [], []>} : vector<16x32xf32>, vector<32x32xf32>, vector<16x32xf32> -> vector<16x32xf32>
    %244 = arith.addf %150, %243 : vector<16x32xf32>
    %c1_95 = arith.constant 1 : index
    %c0_96 = arith.constant 0 : index
    %c0_97 = arith.constant 0 : index
    %245 = vector.load %arg5[%c1_95, %c0_96, %c0_97] : memref<2x1x32xf32, #tpu.memory_space<vmem>>, vector<1x1x32xf32>
    %246 = vector.shape_cast %245 : vector<1x1x32xf32> to vector<1x32xf32>
    %247 = vector.broadcast %246 : vector<1x32xf32> to vector<16x32xf32>
    %248 = arith.addf %244, %247 : vector<16x32xf32>
    %249 = arith.mulf %248, %248 : vector<16x32xf32>
    %cst_98 = arith.constant dense<0.000000e+00> : vector<16xf32>
    %250 = vector.multi_reduction <add>, %249, %cst_98 [1] : vector<16x32xf32> to vector<16xf32>
    %251 = vector.shape_cast %250 : vector<16xf32> to vector<16x1xf32>
    %cst_99 = arith.constant 3.200000e+01 : f32
    %252 = vector.broadcast %cst_99 : f32 to vector<16x1xf32>
    %253 = arith.divf %251, %252 : vector<16x1xf32>
    %cst_100 = arith.constant 1.1920929E-7 : f32
    %254 = vector.broadcast %cst_100 : f32 to vector<16x1xf32>
    %255 = arith.addf %253, %254 : vector<16x1xf32>
    %256 = math.rsqrt %255 : vector<16x1xf32>
    %257 = vector.broadcast %256 : vector<16x1xf32> to vector<16x32xf32>
    %258 = arith.mulf %248, %257 : vector<16x32xf32>
    %c1_101 = arith.constant 1 : index
    %c0_102 = arith.constant 0 : index
    %c0_103 = arith.constant 0 : index
    %259 = vector.load %arg6[%c1_101, %c0_102, %c0_103] : memref<2x32x128xf32, #tpu.memory_space<vmem>>, vector<1x32x128xf32>
    %260 = vector.shape_cast %259 : vector<1x32x128xf32> to vector<32x128xf32>
    %cst_104 = arith.constant dense<0.000000e+00> : vector<16x128xf32>
    %261 = tpu.matmul %258, %260, %cst_104 {dimension_numbers = #tpu.dot_dimension_numbers<[1], [0], [0], [1], [0, 0, 1, 1], [], []>} : vector<16x32xf32>, vector<32x128xf32>, vector<16x128xf32> -> vector<16x128xf32>
    %c1_105 = arith.constant 1 : index
    %c0_106 = arith.constant 0 : index
    %c0_107 = arith.constant 0 : index
    %262 = vector.load %arg7[%c1_105, %c0_106, %c0_107] : memref<2x1x128xf32, #tpu.memory_space<vmem>>, vector<1x1x128xf32>
    %263 = vector.shape_cast %262 : vector<1x1x128xf32> to vector<1x128xf32>
    %264 = vector.broadcast %263 : vector<1x128xf32> to vector<16x128xf32>
    %265 = arith.addf %261, %264 : vector<16x128xf32>
    %266 = vector.extract_strided_slice %265 {offsets = [0, 0], sizes = [16, 64], strides = [1, 1]} : vector<16x128xf32> to vector<16x64xf32>
    %267 = vector.extract_strided_slice %265 {offsets = [0, 64], sizes = [16, 64], strides = [1, 1]} : vector<16x128xf32> to vector<16x64xf32>
    %cst_108 = arith.constant 0.000000e+00 : f32
    %268 = vector.broadcast %cst_108 : f32 to vector<16x64xf32>
    %269 = arith.subf %268, %266 : vector<16x64xf32>
    %270 = math.exp %269 : vector<16x64xf32>
    %cst_109 = arith.constant 1.000000e+00 : f32
    %271 = vector.broadcast %cst_109 : f32 to vector<16x64xf32>
    %272 = arith.addf %271, %270 : vector<16x64xf32>
    %273 = tpu.reciprocal %272 {approx = true} : vector<16x64xf32> -> vector<16x64xf32>
    %274 = arith.mulf %266, %273 : vector<16x64xf32>
    %275 = arith.mulf %274, %267 : vector<16x64xf32>
    %c1_110 = arith.constant 1 : index
    %c0_111 = arith.constant 0 : index
    %c0_112 = arith.constant 0 : index
    %276 = vector.load %arg8[%c1_110, %c0_111, %c0_112] : memref<2x64x32xf32, #tpu.memory_space<vmem>>, vector<1x64x32xf32>
    %277 = vector.shape_cast %276 : vector<1x64x32xf32> to vector<64x32xf32>
    %cst_113 = arith.constant dense<0.000000e+00> : vector<16x32xf32>
    %278 = tpu.matmul %275, %277, %cst_113 {dimension_numbers = #tpu.dot_dimension_numbers<[1], [0], [0], [1], [0, 0, 1, 1], [], []>} : vector<16x64xf32>, vector<64x32xf32>, vector<16x32xf32> -> vector<16x32xf32>
    %279 = arith.addf %248, %278 : vector<16x32xf32>
    %c1_114 = arith.constant 1 : index
    %c0_115 = arith.constant 0 : index
    %c0_116 = arith.constant 0 : index
    %280 = vector.load %arg9[%c1_114, %c0_115, %c0_116] : memref<2x1x32xf32, #tpu.memory_space<vmem>>, vector<1x1x32xf32>
    %281 = vector.shape_cast %280 : vector<1x1x32xf32> to vector<1x32xf32>
    %282 = vector.broadcast %281 : vector<1x32xf32> to vector<16x32xf32>
    %283 = arith.addf %279, %282 : vector<16x32xf32>
    %284 = arith.mulf %283, %283 : vector<16x32xf32>
    %cst_117 = arith.constant dense<0.000000e+00> : vector<16xf32>
    %285 = vector.multi_reduction <add>, %284, %cst_117 [1] : vector<16x32xf32> to vector<16xf32>
    %286 = vector.shape_cast %285 : vector<16xf32> to vector<16x1xf32>
    %cst_118 = arith.constant 3.200000e+01 : f32
    %287 = vector.broadcast %cst_118 : f32 to vector<16x1xf32>
    %288 = arith.divf %286, %287 : vector<16x1xf32>
    %cst_119 = arith.constant 1.1920929E-7 : f32
    %289 = vector.broadcast %cst_119 : f32 to vector<16x1xf32>
    %290 = arith.addf %288, %289 : vector<16x1xf32>
    %291 = math.rsqrt %290 : vector<16x1xf32>
    %292 = vector.broadcast %291 : vector<16x1xf32> to vector<16x32xf32>
    %293 = arith.mulf %283, %292 : vector<16x32xf32>
    %c0_120 = arith.constant 0 : index
    %c0_121 = arith.constant 0 : index
    %294 = vector.load %arg10[%c0_120, %c0_121] : memref<32x128xf32, #tpu.memory_space<vmem>>, vector<32x128xf32>
    %cst_122 = arith.constant dense<0.000000e+00> : vector<16x128xf32>
    %295 = tpu.matmul %293, %294, %cst_122 {dimension_numbers = #tpu.dot_dimension_numbers<[1], [0], [0], [1], [0, 0, 1, 1], [], []>} : vector<16x32xf32>, vector<32x128xf32>, vector<16x128xf32> -> vector<16x128xf32>
    %c0_123 = arith.constant 0 : index
    %c0_124 = arith.constant 0 : index
    %296 = vector.load %arg11[%c0_123, %c0_124] : memref<16x128xf32, #tpu.memory_space<vmem>>, vector<16x128xf32>
    tpu.vector_store %arg11[%c0_123, %c0_124], %295 {strides = array<i32>} : memref<16x128xf32, #tpu.memory_space<vmem>>, vector<16x128xf32>,
    return
  }
}

</mosaic_0001>

<llo_original>
// kernel: mock_gemma_forward.1
$region0: #{mock_gemma_forward.1}
  #allocation0 [shape = 'u32[]', space=smem, size = 0x4, offset = 0x4, fixed_abs, tag = 'smem constant byte address 0x4 - core index']
  #allocation1 [shape = 'u32[144,128]{1,0:T(1,128)}', space=vmem, size = 0x12000, scoped, tag = 'internal scratch']
  %s0 = inlined_call_operand.vmem [shape: s32[16,1], index: 0, kind: input, shape index: {}]
  %s1 = inlined_call_operand.vmem [shape: f32[128,32], index: 1, kind: input, shape index: {}]
  %s2 = inlined_call_operand.vmem [shape: f32[2,32,96], index: 2, kind: input, shape index: {}]
  %s3 = inlined_call_operand.vmem [shape: f32[2,1,96], index: 3, kind: input, shape index: {}]
  %s4 = inlined_call_operand.vmem [shape: f32[2,32,32], index: 4, kind: input, shape index: {}]
  %s5 = inlined_call_operand.vmem [shape: f32[2,1,32], index: 5, kind: input, shape index: {}]
  %s6 = inlined_call_operand.vmem [shape: f32[2,32,128], index: 6, kind: input, shape index: {}]
  %s7 = inlined_call_operand.vmem [shape: f32[2,1,128], index: 7, kind: input, shape index: {}]
  %s8 = inlined_call_operand.vmem [shape: f32[2,64,32], index: 8, kind: input, shape index: {}]
  %s9 = inlined_call_operand.vmem [shape: f32[2,1,32], index: 9, kind: input, shape index: {}]
  %s10 = inlined_call_operand.vmem [shape: f32[32,128], index: 10, kind: input, shape index: {}]
  %s11 = inlined_call_operand.hbm [shape: f32[16,128], index: 11, kind: output, shape index: {}]
  %s12 = sld [smem:[#allocation0]]
  $region54: #{mock_gemma_forward.1} parent=0
    _
  %s14 = ssub.s32 1, %s12
  %s15 = scalar_select 0, %s14, %s12
  $region1: #{mock_gemma_forward.1} parent=0
    #allocation2 [shape = 'u8[8192]{0}', space=vmem, size = 0x2000, scoped, tag = 'output window, operand 0, single buffered']
    #allocation3 [shape = 's32[1]{0}', space=sflag, size = 0x4, scoped, tag = 'scoped memory for mock_gemma_forward.1']
    %16 = vsyncpa [#allocation3], 0
    // Predicated region
    $region2: #{mock_gemma_forward.1} parent=1 // pred_check
      _
    $region3: #{mock_gemma_forward.1} parent=1 // pred_check_branch
      %18 = sbr.rel (0) target = $region5
    $region4: #{mock_gemma_forward.1} parent=1 // pred_region
      _
    $region5: #{mock_gemma_forward.1} parent=1 // pred_fallthru
      _
    // Predicated region
    $region6: #{mock_gemma_forward.1} parent=1 // pred_check
      _
    $region7: #{mock_gemma_forward.1} parent=1 // pred_check_branch
      %20 = sbr.rel (0) target = $region9
    $region8: #{mock_gemma_forward.1} parent=1 // pred_region
      _
    $region9: #{mock_gemma_forward.1} parent=1 // pred_fallthru
      _
    // Predicated region
    $region10: #{mock_gemma_forward.1} parent=1 // pred_check
      _
    $region11: #{mock_gemma_forward.1} parent=1 // pred_check_branch
      %22 = sbr.rel (0) target = $region13
    $region12: #{mock_gemma_forward.1} parent=1 // pred_region
      _
    $region13: #{mock_gemma_forward.1} parent=1 // pred_fallthru
      _
    // Predicated region
    $region14: #{mock_gemma_forward.1} parent=1 // pred_check
      _
    $region15: #{mock_gemma_forward.1} parent=1 // pred_check_branch
      %24 = sbr.rel (0) target = $region17
    $region16: #{mock_gemma_forward.1} parent=1 // pred_region
      _
    $region17: #{mock_gemma_forward.1} parent=1 // pred_fallthru
      _
    // Predicated region
    $region18: #{mock_gemma_forward.1} parent=1 // pred_check
      _
    $region19: #{mock_gemma_forward.1} parent=1 // pred_check_branch
      %26 = sbr.rel (0) target = $region21
    $region20: #{mock_gemma_forward.1} parent=1 // pred_region
      _
    $region21: #{mock_gemma_forward.1} parent=1 // pred_fallthru
      _
    // Predicated region
    $region22: #{mock_gemma_forward.1} parent=1 // pred_check
      _
    $region23: #{mock_gemma_forward.1} parent=1 // pred_check_branch
      %28 = sbr.rel (0) target = $region25
    $region24: #{mock_gemma_forward.1} parent=1 // pred_region
      _
    $region25: #{mock_gemma_forward.1} parent=1 // pred_fallthru
      _
    // Predicated region
    $region26: #{mock_gemma_forward.1} parent=1 // pred_check
      _
    $region27: #{mock_gemma_forward.1} parent=1 // pred_check_branch
      %30 = sbr.rel (0) target = $region29
    $region28: #{mock_gemma_forward.1} parent=1 // pred_region
      _
    $region29: #{mock_gemma_forward.1} parent=1 // pred_fallthru
      _
    // Predicated region
    $region30: #{mock_gemma_forward.1} parent=1 // pred_check
      _
    $region31: #{mock_gemma_forward.1} parent=1 // pred_check_branch
      %32 = sbr.rel (0) target = $region33
    $region32: #{mock_gemma_forward.1} parent=1 // pred_region
      _
    $region33: #{mock_gemma_forward.1} parent=1 // pred_fallthru
      _
    // Predicated region
    $region34: #{mock_gemma_forward.1} parent=1 // pred_check
      _
    $region35: #{mock_gemma_forward.1} parent=1 // pred_check_branch
      %34 = sbr.rel (0) target = $region37
    $region36: #{mock_gemma_forward.1} parent=1 // pred_region
      _
    $region37: #{mock_gemma_forward.1} parent=1 // pred_fallthru
      _
    // Predicated region
    $region38: #{mock_gemma_forward.1} parent=1 // pred_check
      _
    $region39: #{mock_gemma_forward.1} parent=1 // pred_check_branch
      %36 = sbr.rel (0) target = $region41
    $region40: #{mock_gemma_forward.1} parent=1 // pred_region
      _
    $region41: #{mock_gemma_forward.1} parent=1 // pred_fallthru
      _
    // Predicated region
    $region42: #{mock_gemma_forward.1} parent=1 // pred_check
      _
    $region43: #{mock_gemma_forward.1} parent=1 // pred_check_branch
      %38 = sbr.rel (0) target = $region45
    $region44: #{mock_gemma_forward.1} parent=1 // pred_region
      _
    $region45: #{mock_gemma_forward.1} parent=1 // pred_fallthru
      _
    %v39 = vld [vmem:[%s0] sm:$0xff]
    %v40 = vld [vmem:[%s0 + $0x8] sm:$0xff]
    %v41 = vlaneseq
    %v42 = vand.u32 %v41, 127
    %43 = vset.pattern.permute.xlu0 0
    %44 = vperm.xlu0 %43, %v39
    %v45 = vpop.permute.xlu0 %44
    %46 = vset.pattern.permute.xlu0 0
    %47 = vperm.xlu0 %46, %v40
    %v48 = vpop.permute.xlu0 %47
    %vm49 = vcmp.eq.s32.totalorder %v42, %v45
    %vm50 = vcmp.eq.s32.totalorder %v42, %v48
    %v51 = vsel %vm49, 1, 0
    %v52 = vsel %vm50, 1, 0
    %v53 = vcvt.s32.f32 %v51
    %v54 = vcvt.s32.f32 %v52
    %v55 = vld [vmem:[%s1] sm:$0xff]
    %v56 = vld [vmem:[%s1 + $0x8] sm:$0xff]
    %v57 = vld [vmem:[%s1 + $0x10] sm:$0xff]
    %v58 = vld [vmem:[%s1 + $0x18] sm:$0xff]
    %v59 = vld [vmem:[%s1 + $0x20] sm:$0xff]
    %v60 = vld [vmem:[%s1 + $0x28] sm:$0xff]
    %v61 = vld [vmem:[%s1 + $0x30] sm:$0xff]
    %v62 = vld [vmem:[%s1 + $0x38] sm:$0xff]
    %v63 = vld [vmem:[%s1 + $0x40] sm:$0xff]
    %v64 = vld [vmem:[%s1 + $0x48] sm:$0xff]
    %v65 = vld [vmem:[%s1 + $0x50] sm:$0xff]
    %v66 = vld [vmem:[%s1 + $0x58] sm:$0xff]
    %v67 = vld [vmem:[%s1 + $0x60] sm:$0xff]
    %v68 = vld [vmem:[%s1 + $0x68] sm:$0xff]
    %v69 = vld [vmem:[%s1 + $0x70] sm:$0xff]
    %v70 = vld [vmem:[%s1 + $0x78] sm:$0xff]
    %71 = vmatprep.subr.mxu0 0.0
    %72 = vmatpush1.msra.mxu0 %v55
    %73 = vmatprep.subr.mxu0 0.0
    %74 = vmatpush1.msra.mxu0 %v56
    %75 = vmatprep.subr.mxu0 0.0
    %76 = vmatpush1.msra.mxu0 %v57
    %77 = vmatprep.subr.mxu0 0.0
    %78 = vmatpush1.msra.mxu0 %v58
    %79 = vmatprep.subr.mxu0 0.0
    %80 = vmatpush1.msra.mxu0 %v59
    %81 = vmatprep.subr.mxu0 0.0
    %82 = vmatpush1.msra.mxu0 %v60
    %83 = vmatprep.subr.mxu0 0.0
    %84 = vmatpush1.msra.mxu0 %v61
    %85 = vmatprep.subr.mxu0 0.0
    %86 = vmatpush1.msra.mxu0 %v62
    %87 = vmatprep.subr.mxu0 0.0
    %88 = vmatpush1.msra.mxu0 %v63
    %89 = vmatprep.subr.mxu0 0.0
    %90 = vmatpush1.msra.mxu0 %v64
    %91 = vmatprep.subr.mxu0 0.0
    %92 = vmatpush1.msra.mxu0 %v65
    %93 = vmatprep.subr.mxu0 0.0
    %94 = vmatpush1.msra.mxu0 %v66
    %95 = vmatprep.subr.mxu0 0.0
    %96 = vmatpush1.msra.mxu0 %v67
    %97 = vmatprep.subr.mxu0 0.0
    %98 = vmatpush1.msra.mxu0 %v68
    %99 = vmatprep.subr.mxu0 0.0
    %100 = vmatpush1.msra.mxu0 %v69
    %101 = vmatprep.subr.mxu0 0.0
    %102 = vmatpush1.msra.mxu0 %v70
    %103 = vmatprep.subr.mxu0 0.0
    %104 = vmatpush1.msra.mxu0 0.0
    %105 = vmatprep.subr.mxu0 0.0
    %106 = vmatpush1.msra.mxu0 0.0
    %107 = vmatprep.subr.mxu0 0.0
    %108 = vmatpush1.msra.mxu0 0.0
    %109 = vmatprep.subr.mxu0 0.0
    %110 = vmatpush1.msra.mxu0 0.0
    %111 = vmatprep.subr.mxu0 0.0
    %112 = vmatpush1.msra.mxu0 0.0
    %113 = vmatprep.subr.mxu0 0.0
    %114 = vmatpush1.msra.mxu0 0.0
    %115 = vmatprep.subr.mxu0 0.0
    %116 = vmatpush1.msra.mxu0 0.0
    %117 = vmatprep.subr.mxu0 0.0
    %118 = vmatpush1.msra.mxu0 0.0
    %119 = vmatprep.subr.mxu0 0.0
    %120 = vmatpush1.msra.mxu0 0.0
    %121 = vmatprep.subr.mxu0 0.0
    %122 = vmatpush1.msra.mxu0 0.0
    %123 = vmatprep.subr.mxu0 0.0
    %124 = vmatpush1.msra.mxu0 0.0
    %125 = vmatprep.subr.mxu0 0.0
    %126 = vmatpush1.msra.mxu0 0.0
    %127 = vmatprep.subr.mxu0 0.0
    %128 = vmatpush1.msra.mxu0 0.0
    %129 = vmatprep.subr.mxu0 0.0
    %130 = vmatpush1.msra.mxu0 0.0
    %131 = vmatprep.subr.mxu0 0.0
    %132 = vmatpush1.msra.mxu0 0.0
    %133 = vmatprep.subr.mxu0 0.0
    %134 = vmatpush1.msra.mxu0 0.0
    %135 = vmatprep.mubr.f32.mxu0 0.0
    %136 = vmatmul.mubr.f32.gmra.mrb[0].mxu0 %v53
    %v137 = vpop.f32.mrb[0].mxu0
    %v138 = vadd.f32 0.0, %v137
    %v139 = vpop.f32.mrb[0].mxu0
    %140 = vmatprep.mubr.f32.mxu0 0.0
    %141 = vmatmul.mubr.f32.gmra.mrb[0].mxu0 %v54
    %v142 = vpop.f32.mrb[0].mxu0
    %v143 = vadd.f32 0.0, %v142
    %v144 = vpop.f32.mrb[0].mxu0
    %145 = vdwg.mxu0
    %v146 = vlaneseq
    %v147 = vshrl.u32 %v146, 7
    %v148 = vadd.s32 %v147, 8
    %v149 = vshra.s32 %v147, 3
    %v150 = vshra.s32 %v148, 3
    %v151 = vshra.s32 %v42, 3
    %vm152 = vcmp.eq.s32.totalorder %v149, %v151
    %vm153 = vcmp.eq.s32.totalorder %v150, %v151
    %v154 = vsel %vm152, 0.0, -1e+30
    %v155 = vsel %vm153, 0.0, -1e+30
    %v156 = vmul.f32 %v138, %v138
    %v157 = vmul.f32 %v143, %v143
    %vm158 = vcmask 261120
    %v159 = vsel %vm158, %v156, 0.0
    %160 = vadd.xlane.f32.xlu0 %v159
    %v161 = vpop.xlane.xlu0 %160
    %v162 = vsel %vm158, %v157, 0.0
    %163 = vadd.xlane.f32.xlu0 %v162
    %v164 = vpop.xlane.xlu0 %163
    %v165 = vrcp.pop 32.0
    %v166 = vmul.f32 %v161, %v165
    %v167 = vmul.f32 %v164, %v165
    %v168 = vadd.f32 %v166, 1.1920929e-07
    %v169 = vadd.f32 %v167, 1.1920929e-07
    %v170 = vrsqrt.pop %v168
    %v171 = vrsqrt.pop %v169
    %v172 = vmul.f32 %v138, %v170
    %v173 = vmul.f32 %v143, %v171
    %v174 = vld [vmem:[%s2] sm:$0xff]
    %v175 = vld [vmem:[%s2 + $0x8] sm:$0xff]
    %v176 = vld [vmem:[%s2 + $0x10] sm:$0xff]
    %v177 = vld [vmem:[%s2 + $0x18] sm:$0xff]
    %v178 = vld [vmem:[%s3] sm:$0x1]
    %v180 = vlaneseq
    %v181 = vshrl.u32 %v180, 7
    %v182 = vsub.s32 0, %v181
    %v183 = vrot.slane %v178, %v182
    %v186 = vsel %vm158, %v172, 0
    %v189 = vsel %vm158, %v173, 0
    %191 = vmatprep.subr.mxu0 0.0
    %192 = vmatpush1.msra.mxu0 %v174
    %193 = vmatprep.subr.mxu0 0.0
    %194 = vmatpush1.msra.mxu0 %v175
    %195 = vmatprep.subr.mxu0 0.0
    %196 = vmatpush1.msra.mxu0 %v176
    %197 = vmatprep.subr.mxu0 0.0
    %198 = vmatpush1.msra.mxu0 %v177
    %199 = vmatprep.subr.mxu0 0.0
    %200 = vmatpush1.msra.mxu0 0.0
    %201 = vmatprep.subr.mxu0 0.0
    %202 = vmatpush1.msra.mxu0 0.0
    %203 = vmatprep.subr.mxu0 0.0
    %204 = vmatpush1.msra.mxu0 0.0
    %205 = vmatprep.subr.mxu0 0.0
    %206 = vmatpush1.msra.mxu0 0.0
    %207 = vmatprep.subr.mxu0 0.0
    %208 = vmatpush1.msra.mxu0 0.0
    %209 = vmatprep.subr.mxu0 0.0
    %210 = vmatpush1.msra.mxu0 0.0
    %211 = vmatprep.subr.mxu0 0.0
    %212 = vmatpush1.msra.mxu0 0.0
    %213 = vmatprep.subr.mxu0 0.0
    %214 = vmatpush1.msra.mxu0 0.0
    %215 = vmatprep.subr.mxu0 0.0
    %216 = vmatpush1.msra.mxu0 0.0
    %217 = vmatprep.subr.mxu0 0.0
    %218 = vmatpush1.msra.mxu0 0.0
    %219 = vmatprep.subr.mxu0 0.0
    %220 = vmatpush1.msra.mxu0 0.0
    %221 = vmatprep.subr.mxu0 0.0
    %222 = vmatpush1.msra.mxu0 0.0
    %223 = vmatprep.subr.mxu0 0.0
    %224 = vmatpush1.msra.mxu0 0.0
    %225 = vmatprep.subr.mxu0 0.0
    %226 = vmatpush1.msra.mxu0 0.0
    %227 = vmatprep.subr.mxu0 0.0
    %228 = vmatpush1.msra.mxu0 0.0
    %229 = vmatprep.subr.mxu0 0.0
    %230 = vmatpush1.msra.mxu0 0.0
    %231 = vmatprep.subr.mxu0 0.0
    %232 = vmatpush1.msra.mxu0 0.0
    %233 = vmatprep.subr.mxu0 0.0
    %234 = vmatpush1.msra.mxu0 0.0
    %235 = vmatprep.subr.mxu0 0.0
    %236 = vmatpush1.msra.mxu0 0.0
    %237 = vmatprep.subr.mxu0 0.0
    %238 = vmatpush1.msra.mxu0 0.0
    %239 = vmatprep.subr.mxu0 0.0
    %240 = vmatpush1.msra.mxu0 0.0
    %241 = vmatprep.subr.mxu0 0.0
    %242 = vmatpush1.msra.mxu0 0.0
    %243 = vmatprep.subr.mxu0 0.0
    %244 = vmatpush1.msra.mxu0 0.0
    %245 = vmatprep.subr.mxu0 0.0
    %246 = vmatpush1.msra.mxu0 0.0
    %247 = vmatprep.subr.mxu0 0.0
    %248 = vmatpush1.msra.mxu0 0.0
    %249 = vmatprep.subr.mxu0 0.0
    %250 = vmatpush1.msra.mxu0 0.0
    %251 = vmatprep.subr.mxu0 0.0
    %252 = vmatpush1.msra.mxu0 0.0
    %253 = vmatprep.subr.mxu0 0.0
    %254 = vmatpush1.msra.mxu0 0.0
    %255 = vmatprep.mubr.f32.mxu0 0.0
    %256 = vmatmul.mubr.f32.gmra.mrb[0].mxu0 %v186
    %v257 = vpop.f32.mrb[0].mxu0
    %v258 = vadd.f32 %v183, %v257
    %v259 = vpop.f32.mrb[0].mxu0
    %260 = vmatprep.mubr.f32.mxu0 0.0
    %261 = vmatmul.mubr.f32.gmra.mrb[0].mxu0 %v189
    %v262 = vpop.f32.mrb[0].mxu0
    %v263 = vadd.f32 %v183, %v262
    %v264 = vpop.f32.mrb[0].mxu0
    %265 = vdwg.mxu0
    %268 = vrot.lane.b32.xlu0 %v258, 96
    %v269 = vpop.permute.xlu0 %268
    %270 = vrot.lane.b32.xlu0 %v263, 96
    %v271 = vpop.permute.xlu0 %270
    %vm272 = vcmask 64512
    %v273 = vsel %vm272, %v258, 0
    %v275 = vsel %vm272, %v263, 0
    %v277 = vsel %vm272, %v269, 0
    %v279 = vsel %vm272, %v271, 0
    %281 = vmatprep.subr.mxu0 0.0
    %282 = vmatpush1.xpose.msra.mxu0 %v277
    %283 = vmatprep.subr.mxu0 0.0
    %284 = vmatpush1.xpose.msra.mxu0 %v279
    %285 = vmatprep.subr.mxu0 0.0
    %286 = vmatpush1.xpose.msra.mxu0 0.0
    %287 = vmatprep.subr.mxu0 0.0
    %288 = vmatpush1.xpose.msra.mxu0 0.0
    %289 = vmatprep.subr.mxu0 0.0
    %290 = vmatpush1.xpose.msra.mxu0 0.0
    %291 = vmatprep.subr.mxu0 0.0
    %292 = vmatpush1.xpose.msra.mxu0 0.0
    %293 = vmatprep.subr.mxu0 0.0
    %294 = vmatpush1.xpose.msra.mxu0 0.0
    %295 = vmatprep.subr.mxu0 0.0
    %296 = vmatpush1.xpose.msra.mxu0 0.0
    %297 = vmatprep.subr.mxu0 0.0
    %298 = vmatpush1.xpose.msra.mxu0 0.0
    %299 = vmatprep.subr.mxu0 0.0
    %300 = vmatpush1.xpose.msra.mxu0 0.0
    %301 = vmatprep.subr.mxu0 0.0
    %302 = vmatpush1.xpose.msra.mxu0 0.0
    %303 = vmatprep.subr.mxu0 0.0
    %304 = vmatpush1.xpose.msra.mxu0 0.0
    %305 = vmatprep.subr.mxu0 0.0
    %306 = vmatpush1.xpose.msra.mxu0 0.0
    %307 = vmatprep.subr.mxu0 0.0
    %308 = vmatpush1.xpose.msra.mxu0 0.0
    %309 = vmatprep.subr.mxu0 0.0
    %310 = vmatpush1.xpose.msra.mxu0 0.0
    %311 = vmatprep.subr.mxu0 0.0
    %312 = vmatpush1.xpose.msra.mxu0 0.0
    %313 = vmatprep.subr.mxu0 0.0
    %314 = vmatpush1.xpose.msra.mxu0 0.0
    %315 = vmatprep.subr.mxu0 0.0
    %316 = vmatpush1.xpose.msra.mxu0 0.0
    %317 = vmatprep.subr.mxu0 0.0
    %318 = vmatpush1.xpose.msra.mxu0 0.0
    %319 = vmatprep.subr.mxu0 0.0
    %320 = vmatpush1.xpose.msra.mxu0 0.0
    %321 = vmatprep.subr.mxu0 0.0
    %322 = vmatpush1.xpose.msra.mxu0 0.0
    %323 = vmatprep.subr.mxu0 0.0
    %324 = vmatpush1.xpose.msra.mxu0 0.0
    %325 = vmatprep.subr.mxu0 0.0
    %326 = vmatpush1.xpose.msra.mxu0 0.0
    %327 = vmatprep.subr.mxu0 0.0
    %328 = vmatpush1.xpose.msra.mxu0 0.0
    %329 = vmatprep.subr.mxu0 0.0
    %330 = vmatpush1.xpose.msra.mxu0 0.0
    %331 = vmatprep.subr.mxu0 0.0
    %332 = vmatpush1.xpose.msra.mxu0 0.0
    %333 = vmatprep.subr.mxu0 0.0
    %334 = vmatpush1.xpose.msra.mxu0 0.0
    %335 = vmatprep.subr.mxu0 0.0
    %336 = vmatpush1.xpose.msra.mxu0 0.0
    %337 = vmatprep.subr.mxu0 0.0
    %338 = vmatpush1.xpose.msra.mxu0 0.0
    %339 = vmatprep.subr.mxu0 0.0
    %340 = vmatpush1.xpose.msra.mxu0 0.0
    %341 = vmatprep.subr.mxu0 0.0
    %342 = vmatpush1.xpose.msra.mxu0 0.0
    %343 = vmatprep.subr.mxu0 0.0
    %344 = vmatpush1.xpose.msra.mxu0 0.0
    %345 = vmatprep.mubr.f32.mxu0 0.0
    %346 = vmatmul.mubr.f32.gmra.mrb[0].mxu0 %v273
    %v347 = vpop.f32.mrb[0].mxu0
    %v348 = vadd.f32 0.0, %v347
    %v349 = vpop.f32.mrb[0].mxu0
    %350 = vmatprep.mubr.f32.mxu0 0.0
    %351 = vmatmul.mubr.f32.gmra.mrb[0].mxu0 %v275
    %v352 = vpop.f32.mrb[0].mxu0
    %v353 = vadd.f32 0.0, %v352
    %v354 = vpop.f32.mrb[0].mxu0
    %355 = vdwg.mxu0
    %v356 = vmul.f32 %v348, 0.35355338
    %v357 = vmul.f32 %v353, 0.35355338
    %v358 = vadd.f32 %v356, %v154
    %v359 = vadd.f32 %v357, %v155
    %vm360 = vcmask 130048
    %v361 = vsel %vm360, %v358, -inf
    %362 = vmax.xlane.f32.xlu0 %v361
    %v363 = vpop.xlane.xlu0 %362
    %v364 = vsel %vm360, %v359, -inf
    %365 = vmax.xlane.f32.xlu0 %v364
    %v366 = vpop.xlane.xlu0 %365
    %v367 = vsub.f32 %v358, %v363
    %v368 = vsub.f32 %v359, %v366
    %v369 = vmul.f32 %v367, 1.442695
    %v370 = vpow.pop %v369
    %v371 = vmul.f32 %v368, 1.442695
    %v372 = vpow.pop %v371
    %v373 = vsel %vm360, %v370, 0.0
    %374 = vadd.xlane.f32.xlu0 %v373
    %v375 = vpop.xlane.xlu0 %374
    %v376 = vsel %vm360, %v372, 0.0
    %377 = vadd.xlane.f32.xlu0 %v376
    %v378 = vpop.xlane.xlu0 %377
    %v379 = vrcp.pop %v375
    %v380 = vrcp.pop %v378
    %v381 = vmul.f32 %v370, %v379
    %v382 = vmul.f32 %v372, %v380
    %383 = vrot.lane.b32.xlu0 %v258, 64
    %v384 = vpop.permute.xlu0 %383
    %385 = vrot.lane.b32.xlu0 %v263, 64
    %v386 = vpop.permute.xlu0 %385
    %v390 = vsel %vm360, %v381, 0
    %v393 = vsel %vm360, %v382, 0
    %395 = vmatprep.subr.mxu0 0.0
    %396 = vmatpush1.msra.mxu0 %v384
    %397 = vmatprep.subr.mxu0 0.0
    %398 = vmatpush1.msra.mxu0 %v386
    %399 = vmatprep.subr.mxu0 0.0
    %400 = vmatpush1.msra.mxu0 0.0
    %401 = vmatprep.subr.mxu0 0.0
    %402 = vmatpush1.msra.mxu0 0.0
    %403 = vmatprep.subr.mxu0 0.0
    %404 = vmatpush1.msra.mxu0 0.0
    %405 = vmatprep.subr.mxu0 0.0
    %406 = vmatpush1.msra.mxu0 0.0
    %407 = vmatprep.subr.mxu0 0.0
    %408 = vmatpush1.msra.mxu0 0.0
    %409 = vmatprep.subr.mxu0 0.0
    %410 = vmatpush1.msra.mxu0 0.0
    %411 = vmatprep.subr.mxu0 0.0
    %412 = vmatpush1.msra.mxu0 0.0
    %413 = vmatprep.subr.mxu0 0.0
    %414 = vmatpush1.msra.mxu0 0.0
    %415 = vmatprep.subr.mxu0 0.0
    %416 = vmatpush1.msra.mxu0 0.0
    %417 = vmatprep.subr.mxu0 0.0
    %418 = vmatpush1.msra.mxu0 0.0
    %419 = vmatprep.subr.mxu0 0.0
    %420 = vmatpush1.msra.mxu0 0.0
    %421 = vmatprep.subr.mxu0 0.0
    %422 = vmatpush1.msra.mxu0 0.0
    %423 = vmatprep.subr.mxu0 0.0
    %424 = vmatpush1.msra.mxu0 0.0
    %425 = vmatprep.subr.mxu0 0.0
    %426 = vmatpush1.msra.mxu0 0.0
    %427 = vmatprep.subr.mxu0 0.0
    %428 = vmatpush1.msra.mxu0 0.0
    %429 = vmatprep.subr.mxu0 0.0
    %430 = vmatpush1.msra.mxu0 0.0
    %431 = vmatprep.subr.mxu0 0.0
    %432 = vmatpush1.msra.mxu0 0.0
    %433 = vmatprep.subr.mxu0 0.0
    %434 = vmatpush1.msra.mxu0 0.0
    %435 = vmatprep.subr.mxu0 0.0
    %436 = vmatpush1.msra.mxu0 0.0
    %437 = vmatprep.subr.mxu0 0.0
    %438 = vmatpush1.msra.mxu0 0.0
    %439 = vmatprep.subr.mxu0 0.0
    %440 = vmatpush1.msra.mxu0 0.0
    %441 = vmatprep.subr.mxu0 0.0
    %442 = vmatpush1.msra.mxu0 0.0
    %443 = vmatprep.subr.mxu0 0.0
    %444 = vmatpush1.msra.mxu0 0.0
    %445 = vmatprep.subr.mxu0 0.0
    %446 = vmatpush1.msra.mxu0 0.0
    %447 = vmatprep.subr.mxu0 0.0
    %448 = vmatpush1.msra.mxu0 0.0
    %449 = vmatprep.subr.mxu0 0.0
    %450 = vmatpush1.msra.mxu0 0.0
    %451 = vmatprep.subr.mxu0 0.0
    %452 = vmatpush1.msra.mxu0 0.0
    %453 = vmatprep.subr.mxu0 0.0
    %454 = vmatpush1.msra.mxu0 0.0
    %455 = vmatprep.subr.mxu0 0.0
    %456 = vmatpush1.msra.mxu0 0.0
    %457 = vmatprep.subr.mxu0 0.0
    %458 = vmatpush1.msra.mxu0 0.0
    %459 = vmatprep.mubr.f32.mxu0 0.0
    %460 = vmatmul.mubr.f32.gmra.mrb[0].mxu0 %v390
    %v461 = vpop.f32.mrb[0].mxu0
    %v462 = vadd.f32 0.0, %v461
    %v463 = vpop.f32.mrb[0].mxu0
    %464 = vmatprep.mubr.f32.mxu0 0.0
    %465 = vmatmul.mubr.f32.gmra.mrb[0].mxu0 %v393
    %v466 = vpop.f32.mrb[0].mxu0
    %v467 = vadd.f32 0.0, %v466
    %v468 = vpop.f32.mrb[0].mxu0
    %469 = vdwg.mxu0
    %470 = vrot.lane.b32.xlu0 %v258, 120
    %v471 = vpop.permute.xlu0 %470
    %472 = vrot.lane.b32.xlu0 %v263, 120
    %v473 = vpop.permute.xlu0 %472
    %474 = vrot.lane.b32.xlu0 %v258, 88
    %v475 = vpop.permute.xlu0 %474
    %476 = vrot.lane.b32.xlu0 %v263, 88
    %v477 = vpop.permute.xlu0 %476
    %v478 = vsel %vm272, %v471, 0
    %v480 = vsel %vm272, %v473, 0
    %v482 = vsel %vm272, %v475, 0
    %v484 = vsel %vm272, %v477, 0
    %486 = vmatprep.subr.mxu0 0.0
    %487 = vmatpush1.xpose.msra.mxu0 %v482
    %488 = vmatprep.subr.mxu0 0.0
    %489 = vmatpush1.xpose.msra.mxu0 %v484
    %490 = vmatprep.subr.mxu0 0.0
    %491 = vmatpush1.xpose.msra.mxu0 0.0
    %492 = vmatprep.subr.mxu0 0.0
    %493 = vmatpush1.xpose.msra.mxu0 0.0
    %494 = vmatprep.subr.mxu0 0.0
    %495 = vmatpush1.xpose.msra.mxu0 0.0
    %496 = vmatprep.subr.mxu0 0.0
    %497 = vmatpush1.xpose.msra.mxu0 0.0
    %498 = vmatprep.subr.mxu0 0.0
    %499 = vmatpush1.xpose.msra.mxu0 0.0
    %500 = vmatprep.subr.mxu0 0.0
    %501 = vmatpush1.xpose.msra.mxu0 0.0
    %502 = vmatprep.subr.mxu0 0.0
    %503 = vmatpush1.xpose.msra.mxu0 0.0
    %504 = vmatprep.subr.mxu0 0.0
    %505 = vmatpush1.xpose.msra.mxu0 0.0
    %506 = vmatprep.subr.mxu0 0.0
    %507 = vmatpush1.xpose.msra.mxu0 0.0
    %508 = vmatprep.subr.mxu0 0.0
    %509 = vmatpush1.xpose.msra.mxu0 0.0
    %510 = vmatprep.subr.mxu0 0.0
    %511 = vmatpush1.xpose.msra.mxu0 0.0
    %512 = vmatprep.subr.mxu0 0.0
    %513 = vmatpush1.xpose.msra.mxu0 0.0
    %514 = vmatprep.subr.mxu0 0.0
    %515 = vmatpush1.xpose.msra.mxu0 0.0
    %516 = vmatprep.subr.mxu0 0.0
    %517 = vmatpush1.xpose.msra.mxu0 0.0
    %518 = vmatprep.subr.mxu0 0.0
    %519 = vmatpush1.xpose.msra.mxu0 0.0
    %520 = vmatprep.subr.mxu0 0.0
    %521 = vmatpush1.xpose.msra.mxu0 0.0
    %522 = vmatprep.subr.mxu0 0.0
    %523 = vmatpush1.xpose.msra.mxu0 0.0
    %524 = vmatprep.subr.mxu0 0.0
    %525 = vmatpush1.xpose.msra.mxu0 0.0
    %526 = vmatprep.subr.mxu0 0.0
    %527 = vmatpush1.xpose.msra.mxu0 0.0
    %528 = vmatprep.subr.mxu0 0.0
    %529 = vmatpush1.xpose.msra.mxu0 0.0
    %530 = vmatprep.subr.mxu0 0.0
    %531 = vmatpush1.xpose.msra.mxu0 0.0
    %532 = vmatprep.subr.mxu0 0.0
    %533 = vmatpush1.xpose.msra.mxu0 0.0
    %534 = vmatprep.subr.mxu0 0.0
    %535 = vmatpush1.xpose.msra.mxu0 0.0
    %536 = vmatprep.subr.mxu0 0.0
    %537 = vmatpush1.xpose.msra.mxu0 0.0
    %538 = vmatprep.subr.mxu0 0.0
    %539 = vmatpush1.xpose.msra.mxu0 0.0
    %540 = vmatprep.subr.mxu0 0.0
    %541 = vmatpush1.xpose.msra.mxu0 0.0
    %542 = vmatprep.subr.mxu0 0.0
    %543 = vmatpush1.xpose.msra.mxu0 0.0
    %544 = vmatprep.subr.mxu0 0.0
    %545 = vmatpush1.xpose.msra.mxu0 0.0
    %546 = vmatprep.subr.mxu0 0.0
    %547 = vmatpush1.xpose.msra.mxu0 0.0
    %548 = vmatprep.subr.mxu0 0.0
    %549 = vmatpush1.xpose.msra.mxu0 0.0
    %550 = vmatprep.mubr.f32.mxu0 0.0
    %551 = vmatmul.mubr.f32.gmra.mrb[0].mxu0 %v478
    %v552 = vpop.f32.mrb[0].mxu0
    %v553 = vadd.f32 0.0, %v552
    %v554 = vpop.f32.mrb[0].mxu0
    %555 = vmatprep.mubr.f32.mxu0 0.0
    %556 = vmatmul.mubr.f32.gmra.mrb[0].mxu0 %v480
    %v557 = vpop.f32.mrb[0].mxu0
    %v558 = vadd.f32 0.0, %v557
    %v559 = vpop.f32.mrb[0].mxu0
    %560 = vdwg.mxu0
    %v561 = vmul.f32 %v553, 0.35355338
    %v562 = vmul.f32 %v558, 0.35355338
    %v563 = vadd.f32 %v561, %v154
    %v564 = vadd.f32 %v562, %v155
    %v565 = vsel %vm360, %v563, -inf
    %566 = vmax.xlane.f32.xlu0 %v565
    %v567 = vpop.xlane.xlu0 %566
    %v568 = vsel %vm360, %v564, -inf
    %569 = vmax.xlane.f32.xlu0 %v568
    %v570 = vpop.xlane.xlu0 %569
    %v571 = vsub.f32 %v563, %v567
    %v572 = vsub.f32 %v564, %v570
    %v573 = vmul.f32 %v571, 1.442695
    %v574 = vpow.pop %v573
    %v575 = vmul.f32 %v572, 1.442695
    %v576 = vpow.pop %v575
    %v577 = vsel %vm360, %v574, 0.0
    %578 = vadd.xlane.f32.xlu0 %v577
    %v579 = vpop.xlane.xlu0 %578
    %v580 = vsel %vm360, %v576, 0.0
    %581 = vadd.xlane.f32.xlu0 %v580
    %v582 = vpop.xlane.xlu0 %581
    %v583 = vrcp.pop %v579
    %v584 = vrcp.pop %v582
    %v585 = vmul.f32 %v574, %v583
    %v586 = vmul.f32 %v576, %v584
    %587 = vrot.lane.b32.xlu0 %v258, 56
    %v588 = vpop.permute.xlu0 %587
    %589 = vrot.lane.b32.xlu0 %v263, 56
    %v590 = vpop.permute.xlu0 %589
    %v594 = vsel %vm360, %v585, 0
    %v597 = vsel %vm360, %v586, 0
    %599 = vmatprep.subr.mxu0 0.0
    %600 = vmatpush1.msra.mxu0 %v588
    %601 = vmatprep.subr.mxu0 0.0
    %602 = vmatpush1.msra.mxu0 %v590
    %603 = vmatprep.subr.mxu0 0.0
    %604 = vmatpush1.msra.mxu0 0.0
    %605 = vmatprep.subr.mxu0 0.0
    %606 = vmatpush1.msra.mxu0 0.0
    %607 = vmatprep.subr.mxu0 0.0
    %608 = vmatpush1.msra.mxu0 0.0
    %609 = vmatprep.subr.mxu0 0.0
    %610 = vmatpush1.msra.mxu0 0.0
    %611 = vmatprep.subr.mxu0 0.0
    %612 = vmatpush1.msra.mxu0 0.0
    %613 = vmatprep.subr.mxu0 0.0
    %614 = vmatpush1.msra.mxu0 0.0
    %615 = vmatprep.subr.mxu0 0.0
    %616 = vmatpush1.msra.mxu0 0.0
    %617 = vmatprep.subr.mxu0 0.0
    %618 = vmatpush1.msra.mxu0 0.0
    %619 = vmatprep.subr.mxu0 0.0
    %620 = vmatpush1.msra.mxu0 0.0
    %621 = vmatprep.subr.mxu0 0.0
    %622 = vmatpush1.msra.mxu0 0.0
    %623 = vmatprep.subr.mxu0 0.0
    %624 = vmatpush1.msra.mxu0 0.0
    %625 = vmatprep.subr.mxu0 0.0
    %626 = vmatpush1.msra.mxu0 0.0
    %627 = vmatprep.subr.mxu0 0.0
    %628 = vmatpush1.msra.mxu0 0.0
    %629 = vmatprep.subr.mxu0 0.0
    %630 = vmatpush1.msra.mxu0 0.0
    %631 = vmatprep.subr.mxu0 0.0
    %632 = vmatpush1.msra.mxu0 0.0
    %633 = vmatprep.subr.mxu0 0.0
    %634 = vmatpush1.msra.mxu0 0.0
    %635 = vmatprep.subr.mxu0 0.0
    %636 = vmatpush1.msra.mxu0 0.0
    %637 = vmatprep.subr.mxu0 0.0
    %638 = vmatpush1.msra.mxu0 0.0
    %639 = vmatprep.subr.mxu0 0.0
    %640 = vmatpush1.msra.mxu0 0.0
    %641 = vmatprep.subr.mxu0 0.0
    %642 = vmatpush1.msra.mxu0 0.0
    %643 = vmatprep.subr.mxu0 0.0
    %644 = vmatpush1.msra.mxu0 0.0
    %645 = vmatprep.subr.mxu0 0.0
    %646 = vmatpush1.msra.mxu0 0.0
    %647 = vmatprep.subr.mxu0 0.0
    %648 = vmatpush1.msra.mxu0 0.0
    %649 = vmatprep.subr.mxu0 0.0
    %650 = vmatpush1.msra.mxu0 0.0
    %651 = vmatprep.subr.mxu0 0.0
    %652 = vmatpush1.msra.mxu0 0.0
    %653 = vmatprep.subr.mxu0 0.0
    %654 = vmatpush1.msra.mxu0 0.0
    %655 = vmatprep.subr.mxu0 0.0
    %656 = vmatpush1.msra.mxu0 0.0
    %657 = vmatprep.subr.mxu0 0.0
    %658 = vmatpush1.msra.mxu0 0.0
    %659 = vmatprep.subr.mxu0 0.0
    %660 = vmatpush1.msra.mxu0 0.0
    %661 = vmatprep.subr.mxu0 0.0
    %662 = vmatpush1.msra.mxu0 0.0
    %663 = vmatprep.mubr.f32.mxu0 0.0
    %664 = vmatmul.mubr.f32.gmra.mrb[0].mxu0 %v594
    %v665 = vpop.f32.mrb[0].mxu0
    %v666 = vadd.f32 0.0, %v665
    %v667 = vpop.f32.mrb[0].mxu0
    %668 = vmatprep.mubr.f32.mxu0 0.0
    %669 = vmatmul.mubr.f32.gmra.mrb[0].mxu0 %v597
    %v670 = vpop.f32.mrb[0].mxu0
    %v671 = vadd.f32 0.0, %v670
    %v672 = vpop.f32.mrb[0].mxu0
    %673 = vdwg.mxu0
    %674 = vrot.lane.b32.xlu0 %v258, 112
    %v675 = vpop.permute.xlu0 %674
    %676 = vrot.lane.b32.xlu0 %v263, 112
    %v677 = vpop.permute.xlu0 %676
    %678 = vrot.lane.b32.xlu0 %v258, 80
    %v679 = vpop.permute.xlu0 %678
    %680 = vrot.lane.b32.xlu0 %v263, 80
    %v681 = vpop.permute.xlu0 %680
    %v682 = vsel %vm272, %v675, 0
    %v684 = vsel %vm272, %v677, 0
    %v686 = vsel %vm272, %v679, 0
    %v688 = vsel %vm272, %v681, 0
    %690 = vmatprep.subr.mxu0 0.0
    %691 = vmatpush1.xpose.msra.mxu0 %v686
    %692 = vmatprep.subr.mxu0 0.0
    %693 = vmatpush1.xpose.msra.mxu0 %v688
    %694 = vmatprep.subr.mxu0 0.0
    %695 = vmatpush1.xpose.msra.mxu0 0.0
    %696 = vmatprep.subr.mxu0 0.0
    %697 = vmatpush1.xpose.msra.mxu0 0.0
    %698 = vmatprep.subr.mxu0 0.0
    %699 = vmatpush1.xpose.msra.mxu0 0.0
    %700 = vmatprep.subr.mxu0 0.0
    %701 = vmatpush1.xpose.msra.mxu0 0.0
    %702 = vmatprep.subr.mxu0 0.0
    %703 = vmatpush1.xpose.msra.mxu0 0.0
    %704 = vmatprep.subr.mxu0 0.0
    %705 = vmatpush1.xpose.msra.mxu0 0.0
    %706 = vmatprep.subr.mxu0 0.0
    %707 = vmatpush1.xpose.msra.mxu0 0.0
    %708 = vmatprep.subr.mxu0 0.0
    %709 = vmatpush1.xpose.msra.mxu0 0.0
    %710 = vmatprep.subr.mxu0 0.0
    %711 = vmatpush1.xpose.msra.mxu0 0.0
    %712 = vmatprep.subr.mxu0 0.0
    %713 = vmatpush1.xpose.msra.mxu0 0.0
    %714 = vmatprep.subr.mxu0 0.0
    %715 = vmatpush1.xpose.msra.mxu0 0.0
    %716 = vmatprep.subr.mxu0 0.0
    %717 = vmatpush1.xpose.msra.mxu0 0.0
    %718 = vmatprep.subr.mxu0 0.0
    %719 = vmatpush1.xpose.msra.mxu0 0.0
    %720 = vmatprep.subr.mxu0 0.0
    %721 = vmatpush1.xpose.msra.mxu0 0.0
    %722 = vmatprep.subr.mxu0 0.0
    %723 = vmatpush1.xpose.msra.mxu0 0.0
    %724 = vmatprep.subr.mxu0 0.0
    %725 = vmatpush1.xpose.msra.mxu0 0.0
    %726 = vmatprep.subr.mxu0 0.0
    %727 = vmatpush1.xpose.msra.mxu0 0.0
    %728 = vmatprep.subr.mxu0 0.0
    %729 = vmatpush1.xpose.msra.mxu0 0.0
    %730 = vmatprep.subr.mxu0 0.0
    %731 = vmatpush1.xpose.msra.mxu0 0.0
    %732 = vmatprep.subr.mxu0 0.0
    %733 = vmatpush1.xpose.msra.mxu0 0.0
    %734 = vmatprep.subr.mxu0 0.0
    %735 = vmatpush1.xpose.msra.mxu0 0.0
    %736 = vmatprep.subr.mxu0 0.0
    %737 = vmatpush1.xpose.msra.mxu0 0.0
    %738 = vmatprep.subr.mxu0 0.0
    %739 = vmatpush1.xpose.msra.mxu0 0.0
    %740 = vmatprep.subr.mxu0 0.0
    %741 = vmatpush1.xpose.msra.mxu0 0.0
    %742 = vmatprep.subr.mxu0 0.0
    %743 = vmatpush1.xpose.msra.mxu0 0.0
    %744 = vmatprep.subr.mxu0 0.0
    %745 = vmatpush1.xpose.msra.mxu0 0.0
    %746 = vmatprep.subr.mxu0 0.0
    %747 = vmatpush1.xpose.msra.mxu0 0.0
    %748 = vmatprep.subr.mxu0 0.0
    %749 = vmatpush1.xpose.msra.mxu0 0.0
    %750 = vmatprep.subr.mxu0 0.0
    %751 = vmatpush1.xpose.msra.mxu0 0.0
    %752 = vmatprep.subr.mxu0 0.0
    %753 = vmatpush1.xpose.msra.mxu0 0.0
    %754 = vmatprep.mubr.f32.mxu0 0.0
    %755 = vmatmul.mubr.f32.gmra.mrb[0].mxu0 %v682
    %v756 = vpop.f32.mrb[0].mxu0
    %v757 = vadd.f32 0.0, %v756
    %v758 = vpop.f32.mrb[0].mxu0
    %759 = vmatprep.mubr.f32.mxu0 0.0
    %760 = vmatmul.mubr.f32.gmra.mrb[0].mxu0 %v684
    %v761 = vpop.f32.mrb[0].mxu0
    %v762 = vadd.f32 0.0, %v761
    %v763 = vpop.f32.mrb[0].mxu0
    %764 = vdwg.mxu0
    %v765 = vmul.f32 %v757, 0.35355338
    %v766 = vmul.f32 %v762, 0.35355338
    %v767 = vadd.f32 %v765, %v154
    %v768 = vadd.f32 %v766, %v155
    %v769 = vsel %vm360, %v767, -inf
    %770 = vmax.xlane.f32.xlu0 %v769
    %v771 = vpop.xlane.xlu0 %770
    %v772 = vsel %vm360, %v768, -inf
    %773 = vmax.xlane.f32.xlu0 %v772
    %v774 = vpop.xlane.xlu0 %773
    %v775 = vsub.f32 %v767, %v771
    %v776 = vsub.f32 %v768, %v774
    %v777 = vmul.f32 %v775, 1.442695
    %v778 = vpow.pop %v777
    %v779 = vmul.f32 %v776, 1.442695
    %v780 = vpow.pop %v779
    %v781 = vsel %vm360, %v778, 0.0
    %782 = vadd.xlane.f32.xlu0 %v781
    %v783 = vpop.xlane.xlu0 %782
    %v784 = vsel %vm360, %v780, 0.0
    %785 = vadd.xlane.f32.xlu0 %v784
    %v786 = vpop.xlane.xlu0 %785
    %v787 = vrcp.pop %v783
    %v788 = vrcp.pop %v786
    %v789 = vmul.f32 %v778, %v787
    %v790 = vmul.f32 %v780, %v788
    %791 = vrot.lane.b32.xlu0 %v258, 48
    %v792 = vpop.permute.xlu0 %791
    %793 = vrot.lane.b32.xlu0 %v263, 48
    %v794 = vpop.permute.xlu0 %793
    %v798 = vsel %vm360, %v789, 0
    %v801 = vsel %vm360, %v790, 0
    %803 = vmatprep.subr.mxu0 0.0
    %804 = vmatpush1.msra.mxu0 %v792
    %805 = vmatprep.subr.mxu0 0.0
    %806 = vmatpush1.msra.mxu0 %v794
    %807 = vmatprep.subr.mxu0 0.0
    %808 = vmatpush1.msra.mxu0 0.0
    %809 = vmatprep.subr.mxu0 0.0
    %810 = vmatpush1.msra.mxu0 0.0
    %811 = vmatprep.subr.mxu0 0.0
    %812 = vmatpush1.msra.mxu0 0.0
    %813 = vmatprep.subr.mxu0 0.0
    %814 = vmatpush1.msra.mxu0 0.0
    %815 = vmatprep.subr.mxu0 0.0
    %816 = vmatpush1.msra.mxu0 0.0
    %817 = vmatprep.subr.mxu0 0.0
    %818 = vmatpush1.msra.mxu0 0.0
    %819 = vmatprep.subr.mxu0 0.0
    %820 = vmatpush1.msra.mxu0 0.0
    %821 = vmatprep.subr.mxu0 0.0
    %822 = vmatpush1.msra.mxu0 0.0
    %823 = vmatprep.subr.mxu0 0.0
    %824 = vmatpush1.msra.mxu0 0.0
    %825 = vmatprep.subr.mxu0 0.0
    %826 = vmatpush1.msra.mxu0 0.0
    %827 = vmatprep.subr.mxu0 0.0
    %828 = vmatpush1.msra.mxu0 0.0
    %829 = vmatprep.subr.mxu0 0.0
    %830 = vmatpush1.msra.mxu0 0.0
    %831 = vmatprep.subr.mxu0 0.0
    %832 = vmatpush1.msra.mxu0 0.0
    %833 = vmatprep.subr.mxu0 0.0
    %834 = vmatpush1.msra.mxu0 0.0
    %835 = vmatprep.subr.mxu0 0.0
    %836 = vmatpush1.msra.mxu0 0.0
    %837 = vmatprep.subr.mxu0 0.0
    %838 = vmatpush1.msra.mxu0 0.0
    %839 = vmatprep.subr.mxu0 0.0
    %840 = vmatpush1.msra.mxu0 0.0
    %841 = vmatprep.subr.mxu0 0.0
    %842 = vmatpush1.msra.mxu0 0.0
    %843 = vmatprep.subr.mxu0 0.0
    %844 = vmatpush1.msra.mxu0 0.0
    %845 = vmatprep.subr.mxu0 0.0
    %846 = vmatpush1.msra.mxu0 0.0
    %847 = vmatprep.subr.mxu0 0.0
    %848 = vmatpush1.msra.mxu0 0.0
    %849 = vmatprep.subr.mxu0 0.0
    %850 = vmatpush1.msra.mxu0 0.0
    %851 = vmatprep.subr.mxu0 0.0
    %852 = vmatpush1.msra.mxu0 0.0
    %853 = vmatprep.subr.mxu0 0.0
    %854 = vmatpush1.msra.mxu0 0.0
    %855 = vmatprep.subr.mxu0 0.0
    %856 = vmatpush1.msra.mxu0 0.0
    %857 = vmatprep.subr.mxu0 0.0
    %858 = vmatpush1.msra.mxu0 0.0
    %859 = vmatprep.subr.mxu0 0.0
    %860 = vmatpush1.msra.mxu0 0.0
    %861 = vmatprep.subr.mxu0 0.0
    %862 = vmatpush1.msra.mxu0 0.0
    %863 = vmatprep.subr.mxu0 0.0
    %864 = vmatpush1.msra.mxu0 0.0
    %865 = vmatprep.subr.mxu0 0.0
    %866 = vmatpush1.msra.mxu0 0.0
    %867 = vmatprep.mubr.f32.mxu0 0.0
    %868 = vmatmul.mubr.f32.gmra.mrb[0].mxu0 %v798
    %v869 = vpop.f32.mrb[0].mxu0
    %v870 = vadd.f32 0.0, %v869
    %v871 = vpop.f32.mrb[0].mxu0
    %872 = vmatprep.mubr.f32.mxu0 0.0
    %873 = vmatmul.mubr.f32.gmra.mrb[0].mxu0 %v801
    %v874 = vpop.f32.mrb[0].mxu0
    %v875 = vadd.f32 0.0, %v874
    %v876 = vpop.f32.mrb[0].mxu0
    %877 = vdwg.mxu0
    %878 = vrot.lane.b32.xlu0 %v258, 104
    %v879 = vpop.permute.xlu0 %878
    %880 = vrot.lane.b32.xlu0 %v263, 104
    %v881 = vpop.permute.xlu0 %880
    %882 = vrot.lane.b32.xlu0 %v258, 72
    %v883 = vpop.permute.xlu0 %882
    %884 = vrot.lane.b32.xlu0 %v263, 72
    %v885 = vpop.permute.xlu0 %884
    %v886 = vsel %vm272, %v879, 0
    %v888 = vsel %vm272, %v881, 0
    %v890 = vsel %vm272, %v883, 0
    %v892 = vsel %vm272, %v885, 0
    %894 = vmatprep.subr.mxu0 0.0
    %895 = vmatpush1.xpose.msra.mxu0 %v890
    %896 = vmatprep.subr.mxu0 0.0
    %897 = vmatpush1.xpose.msra.mxu0 %v892
    %898 = vmatprep.subr.mxu0 0.0
    %899 = vmatpush1.xpose.msra.mxu0 0.0
    %900 = vmatprep.subr.mxu0 0.0
    %901 = vmatpush1.xpose.msra.mxu0 0.0
    %902 = vmatprep.subr.mxu0 0.0
    %903 = vmatpush1.xpose.msra.mxu0 0.0
    %904 = vmatprep.subr.mxu0 0.0
    %905 = vmatpush1.xpose.msra.mxu0 0.0
    %906 = vmatprep.subr.mxu0 0.0
    %907 = vmatpush1.xpose.msra.mxu0 0.0
    %908 = vmatprep.subr.mxu0 0.0
    %909 = vmatpush1.xpose.msra.mxu0 0.0
    %910 = vmatprep.subr.mxu0 0.0
    %911 = vmatpush1.xpose.msra.mxu0 0.0
    %912 = vmatprep.subr.mxu0 0.0
    %913 = vmatpush1.xpose.msra.mxu0 0.0
    %914 = vmatprep.subr.mxu0 0.0
    %915 = vmatpush1.xpose.msra.mxu0 0.0
    %916 = vmatprep.subr.mxu0 0.0
    %917 = vmatpush1.xpose.msra.mxu0 0.0
    %918 = vmatprep.subr.mxu0 0.0
    %919 = vmatpush1.xpose.msra.mxu0 0.0
    %920 = vmatprep.subr.mxu0 0.0
    %921 = vmatpush1.xpose.msra.mxu0 0.0
    %922 = vmatprep.subr.mxu0 0.0
    %923 = vmatpush1.xpose.msra.mxu0 0.0
    %924 = vmatprep.subr.mxu0 0.0
    %925 = vmatpush1.xpose.msra.mxu0 0.0
    %926 = vmatprep.subr.mxu0 0.0
    %927 = vmatpush1.xpose.msra.mxu0 0.0
    %928 = vmatprep.subr.mxu0 0.0
    %929 = vmatpush1.xpose.msra.mxu0 0.0
    %930 = vmatprep.subr.mxu0 0.0
    %931 = vmatpush1.xpose.msra.mxu0 0.0
    %932 = vmatprep.subr.mxu0 0.0
    %933 = vmatpush1.xpose.msra.mxu0 0.0
    %934 = vmatprep.subr.mxu0 0.0
    %935 = vmatpush1.xpose.msra.mxu0 0.0
    %936 = vmatprep.subr.mxu0 0.0
    %937 = vmatpush1.xpose.msra.mxu0 0.0
    %938 = vmatprep.subr.mxu0 0.0
    %939 = vmatpush1.xpose.msra.mxu0 0.0
    %940 = vmatprep.subr.mxu0 0.0
    %941 = vmatpush1.xpose.msra.mxu0 0.0
    %942 = vmatprep.subr.mxu0 0.0
    %943 = vmatpush1.xpose.msra.mxu0 0.0
    %944 = vmatprep.subr.mxu0 0.0
    %945 = vmatpush1.xpose.msra.mxu0 0.0
    %946 = vmatprep.subr.mxu0 0.0
    %947 = vmatpush1.xpose.msra.mxu0 0.0
    %948 = vmatprep.subr.mxu0 0.0
    %949 = vmatpush1.xpose.msra.mxu0 0.0
    %950 = vmatprep.subr.mxu0 0.0
    %951 = vmatpush1.xpose.msra.mxu0 0.0
    %952 = vmatprep.subr.mxu0 0.0
    %953 = vmatpush1.xpose.msra.mxu0 0.0
    %954 = vmatprep.subr.mxu0 0.0
    %955 = vmatpush1.xpose.msra.mxu0 0.0
    %956 = vmatprep.subr.mxu0 0.0
    %957 = vmatpush1.xpose.msra.mxu0 0.0
    %958 = vmatprep.mubr.f32.mxu0 0.0
    %959 = vmatmul.mubr.f32.gmra.mrb[0].mxu0 %v886
    %v960 = vpop.f32.mrb[0].mxu0
    %v961 = vadd.f32 0.0, %v960
    %v962 = vpop.f32.mrb[0].mxu0
    %963 = vmatprep.mubr.f32.mxu0 0.0
    %964 = vmatmul.mubr.f32.gmra.mrb[0].mxu0 %v888
    %v965 = vpop.f32.mrb[0].mxu0
    %v966 = vadd.f32 0.0, %v965
    %v967 = vpop.f32.mrb[0].mxu0
    %968 = vdwg.mxu0
    %v969 = vmul.f32 %v961, 0.35355338
    %v970 = vmul.f32 %v966, 0.35355338
    %v971 = vadd.f32 %v969, %v154
    %v972 = vadd.f32 %v970, %v155
    %v973 = vsel %vm360, %v971, -inf
    %974 = vmax.xlane.f32.xlu0 %v973
    %v975 = vpop.xlane.xlu0 %974
    %v976 = vsel %vm360, %v972, -inf
    %977 = vmax.xlane.f32.xlu0 %v976
    %v978 = vpop.xlane.xlu0 %977
    %v979 = vsub.f32 %v971, %v975
    %v980 = vsub.f32 %v972, %v978
    %v981 = vmul.f32 %v979, 1.442695
    %v982 = vpow.pop %v981
    %v983 = vmul.f32 %v980, 1.442695
    %v984 = vpow.pop %v983
    %v985 = vsel %vm360, %v982, 0.0
    %986 = vadd.xlane.f32.xlu0 %v985
    %v987 = vpop.xlane.xlu0 %986
    %v988 = vsel %vm360, %v984, 0.0
    %989 = vadd.xlane.f32.xlu0 %v988
    %v990 = vpop.xlane.xlu0 %989
    %v991 = vrcp.pop %v987
    %v992 = vrcp.pop %v990
    %v993 = vmul.f32 %v982, %v991
    %v994 = vmul.f32 %v984, %v992
    %995 = vrot.lane.b32.xlu0 %v258, 40
    %v996 = vpop.permute.xlu0 %995
    %997 = vrot.lane.b32.xlu0 %v263, 40
    %v998 = vpop.permute.xlu0 %997
    %v1002 = vsel %vm360, %v993, 0
    %v1005 = vsel %vm360, %v994, 0
    %1007 = vmatprep.subr.mxu0 0.0
    %1008 = vmatpush1.msra.mxu0 %v996
    %1009 = vmatprep.subr.mxu0 0.0
    %1010 = vmatpush1.msra.mxu0 %v998
    %1011 = vmatprep.subr.mxu0 0.0
    %1012 = vmatpush1.msra.mxu0 0.0
    %1013 = vmatprep.subr.mxu0 0.0
    %1014 = vmatpush1.msra.mxu0 0.0
    %1015 = vmatprep.subr.mxu0 0.0
    %1016 = vmatpush1.msra.mxu0 0.0
    %1017 = vmatprep.subr.mxu0 0.0
    %1018 = vmatpush1.msra.mxu0 0.0
    %1019 = vmatprep.subr.mxu0 0.0
    %1020 = vmatpush1.msra.mxu0 0.0
    %1021 = vmatprep.subr.mxu0 0.0
    %1022 = vmatpush1.msra.mxu0 0.0
    %1023 = vmatprep.subr.mxu0 0.0
    %1024 = vmatpush1.msra.mxu0 0.0
    %1025 = vmatprep.subr.mxu0 0.0
    %1026 = vmatpush1.msra.mxu0 0.0
    %1027 = vmatprep.subr.mxu0 0.0
    %1028 = vmatpush1.msra.mxu0 0.0
    %1029 = vmatprep.subr.mxu0 0.0
    %1030 = vmatpush1.msra.mxu0 0.0
    %1031 = vmatprep.subr.mxu0 0.0
    %1032 = vmatpush1.msra.mxu0 0.0
    %1033 = vmatprep.subr.mxu0 0.0
    %1034 = vmatpush1.msra.mxu0 0.0
    %1035 = vmatprep.subr.mxu0 0.0
    %1036 = vmatpush1.msra.mxu0 0.0
    %1037 = vmatprep.subr.mxu0 0.0
    %1038 = vmatpush1.msra.mxu0 0.0
    %1039 = vmatprep.subr.mxu0 0.0
    %1040 = vmatpush1.msra.mxu0 0.0
    %1041 = vmatprep.subr.mxu0 0.0
    %1042 = vmatpush1.msra.mxu0 0.0
    %1043 = vmatprep.subr.mxu0 0.0
    %1044 = vmatpush1.msra.mxu0 0.0
    %1045 = vmatprep.subr.mxu0 0.0
    %1046 = vmatpush1.msra.mxu0 0.0
    %1047 = vmatprep.subr.mxu0 0.0
    %1048 = vmatpush1.msra.mxu0 0.0
    %1049 = vmatprep.subr.mxu0 0.0
    %1050 = vmatpush1.msra.mxu0 0.0
    %1051 = vmatprep.subr.mxu0 0.0
    %1052 = vmatpush1.msra.mxu0 0.0
    %1053 = vmatprep.subr.mxu0 0.0
    %1054 = vmatpush1.msra.mxu0 0.0
    %1055 = vmatprep.subr.mxu0 0.0
    %1056 = vmatpush1.msra.mxu0 0.0
    %1057 = vmatprep.subr.mxu0 0.0
    %1058 = vmatpush1.msra.mxu0 0.0
    %1059 = vmatprep.subr.mxu0 0.0
    %1060 = vmatpush1.msra.mxu0 0.0
    %1061 = vmatprep.subr.mxu0 0.0
    %1062 = vmatpush1.msra.mxu0 0.0
    %1063 = vmatprep.subr.mxu0 0.0
    %1064 = vmatpush1.msra.mxu0 0.0
    %1065 = vmatprep.subr.mxu0 0.0
    %1066 = vmatpush1.msra.mxu0 0.0
    %1067 = vmatprep.subr.mxu0 0.0
    %1068 = vmatpush1.msra.mxu0 0.0
    %1069 = vmatprep.subr.mxu0 0.0
    %1070 = vmatpush1.msra.mxu0 0.0
    %1071 = vmatprep.mubr.f32.mxu0 0.0
    %1072 = vmatmul.mubr.f32.gmra.mrb[0].mxu0 %v1002
    %v1073 = vpop.f32.mrb[0].mxu0
    %v1074 = vadd.f32 0.0, %v1073
    %v1075 = vpop.f32.mrb[0].mxu0
    %1076 = vmatprep.mubr.f32.mxu0 0.0
    %1077 = vmatmul.mubr.f32.gmra.mrb[0].mxu0 %v1005
    %v1078 = vpop.f32.mrb[0].mxu0
    %v1079 = vadd.f32 0.0, %v1078
    %v1080 = vpop.f32.mrb[0].mxu0
    %1081 = vdwg.mxu0
    %1084 = vrot.lane.b32.xlu0 %v666, 8
    %v1085 = vpop.permute.xlu0 %1084
    %1086 = vrot.lane.b32.xlu0 %v671, 8
    %v1087 = vpop.permute.xlu0 %1086
    %1092 = vrot.lane.b32.xlu0 %v870, 16
    %v1093 = vpop.permute.xlu0 %1092
    %1094 = vrot.lane.b32.xlu0 %v875, 16
    %v1095 = vpop.permute.xlu0 %1094
    %1100 = vrot.lane.b32.xlu0 %v1074, 24
    %v1101 = vpop.permute.xlu0 %1100
    %1102 = vrot.lane.b32.xlu0 %v1079, 24
    %v1103 = vpop.permute.xlu0 %1102
    %v1106 = vsel %vm272, %v462, %v1085
    %v1107 = vsel %vm272, %v467, %v1087
    %v1108 = vsel %vm360, %v1106, %v1093
    %v1109 = vsel %vm360, %v1107, %v1095
    %vm1110 = vcmask 195584
    %v1111 = vsel %vm1110, %v1108, %v1101
    %v1112 = vsel %vm1110, %v1109, %v1103
    %v1113 = vld [vmem:[%s4] sm:$0xff]
    %v1114 = vld [vmem:[%s4 + $0x8] sm:$0xff]
    %v1115 = vld [vmem:[%s4 + $0x10] sm:$0xff]
    %v1116 = vld [vmem:[%s4 + $0x18] sm:$0xff]
    %v1118 = vsel %vm158, %v1111, 0
    %v1121 = vsel %vm158, %v1112, 0
    %1123 = vmatprep.subr.mxu0 0.0
    %1124 = vmatpush1.msra.mxu0 %v1113
    %1125 = vmatprep.subr.mxu0 0.0
    %1126 = vmatpush1.msra.mxu0 %v1114
    %1127 = vmatprep.subr.mxu0 0.0
    %1128 = vmatpush1.msra.mxu0 %v1115
    %1129 = vmatprep.subr.mxu0 0.0
    %1130 = vmatpush1.msra.mxu0 %v1116
    %1131 = vmatprep.subr.mxu0 0.0
    %1132 = vmatpush1.msra.mxu0 0.0
    %1133 = vmatprep.subr.mxu0 0.0
    %1134 = vmatpush1.msra.mxu0 0.0
    %1135 = vmatprep.subr.mxu0 0.0
    %1136 = vmatpush1.msra.mxu0 0.0
    %1137 = vmatprep.subr.mxu0 0.0
    %1138 = vmatpush1.msra.mxu0 0.0
    %1139 = vmatprep.subr.mxu0 0.0
    %1140 = vmatpush1.msra.mxu0 0.0
    %1141 = vmatprep.subr.mxu0 0.0
    %1142 = vmatpush1.msra.mxu0 0.0
    %1143 = vmatprep.subr.mxu0 0.0
    %1144 = vmatpush1.msra.mxu0 0.0
    %1145 = vmatprep.subr.mxu0 0.0
    %1146 = vmatpush1.msra.mxu0 0.0
    %1147 = vmatprep.subr.mxu0 0.0
    %1148 = vmatpush1.msra.mxu0 0.0
    %1149 = vmatprep.subr.mxu0 0.0
    %1150 = vmatpush1.msra.mxu0 0.0
    %1151 = vmatprep.subr.mxu0 0.0
    %1152 = vmatpush1.msra.mxu0 0.0
    %1153 = vmatprep.subr.mxu0 0.0
    %1154 = vmatpush1.msra.mxu0 0.0
    %1155 = vmatprep.subr.mxu0 0.0
    %1156 = vmatpush1.msra.mxu0 0.0
    %1157 = vmatprep.subr.mxu0 0.0
    %1158 = vmatpush1.msra.mxu0 0.0
    %1159 = vmatprep.subr.mxu0 0.0
    %1160 = vmatpush1.msra.mxu0 0.0
    %1161 = vmatprep.subr.mxu0 0.0
    %1162 = vmatpush1.msra.mxu0 0.0
    %1163 = vmatprep.subr.mxu0 0.0
    %1164 = vmatpush1.msra.mxu0 0.0
    %1165 = vmatprep.subr.mxu0 0.0
    %1166 = vmatpush1.msra.mxu0 0.0
    %1167 = vmatprep.subr.mxu0 0.0
    %1168 = vmatpush1.msra.mxu0 0.0
    %1169 = vmatprep.subr.mxu0 0.0
    %1170 = vmatpush1.msra.mxu0 0.0
    %1171 = vmatprep.subr.mxu0 0.0
    %1172 = vmatpush1.msra.mxu0 0.0
    %1173 = vmatprep.subr.mxu0 0.0
    %1174 = vmatpush1.msra.mxu0 0.0
    %1175 = vmatprep.subr.mxu0 0.0
    %1176 = vmatpush1.msra.mxu0 0.0
    %1177 = vmatprep.subr.mxu0 0.0
    %1178 = vmatpush1.msra.mxu0 0.0
    %1179 = vmatprep.subr.mxu0 0.0
    %1180 = vmatpush1.msra.mxu0 0.0
    %1181 = vmatprep.subr.mxu0 0.0
    %1182 = vmatpush1.msra.mxu0 0.0
    %1183 = vmatprep.subr.mxu0 0.0
    %1184 = vmatpush1.msra.mxu0 0.0
    %1185 = vmatprep.subr.mxu0 0.0
    %1186 = vmatpush1.msra.mxu0 0.0
    %1187 = vmatprep.mubr.f32.mxu0 0.0
    %1188 = vmatmul.mubr.f32.gmra.mrb[0].mxu0 %v1118
    %v1189 = vpop.f32.mrb[0].mxu0
    %v1190 = vadd.f32 0.0, %v1189
    %v1191 = vpop.f32.mrb[0].mxu0
    %1192 = vmatprep.mubr.f32.mxu0 0.0
    %1193 = vmatmul.mubr.f32.gmra.mrb[0].mxu0 %v1121
    %v1194 = vpop.f32.mrb[0].mxu0
    %v1195 = vadd.f32 0.0, %v1194
    %v1196 = vpop.f32.mrb[0].mxu0
    %1197 = vdwg.mxu0
    %v1198 = vadd.f32 %v138, %v1190
    %v1199 = vadd.f32 %v143, %v1195
    %v1200 = vld [vmem:[%s5] sm:$0x1]
    %v1202 = vlaneseq
    %v1203 = vshrl.u32 %v1202, 7
    %v1204 = vsub.s32 0, %v1203
    %v1205 = vrot.slane %v1200, %v1204
    %v1207 = vadd.f32 %v1198, %v1205
    %v1208 = vadd.f32 %v1199, %v1205
    %v1209 = vmul.f32 %v1207, %v1207
    %v1210 = vmul.f32 %v1208, %v1208
    %v1211 = vsel %vm158, %v1209, 0.0
    %1212 = vadd.xlane.f32.xlu0 %v1211
    %v1213 = vpop.xlane.xlu0 %1212
    %v1214 = vsel %vm158, %v1210, 0.0
    %1215 = vadd.xlane.f32.xlu0 %v1214
    %v1216 = vpop.xlane.xlu0 %1215
    %v1217 = vmul.f32 %v1213, %v165
    %v1218 = vmul.f32 %v1216, %v165
    %v1219 = vadd.f32 %v1217, 1.1920929e-07
    %v1220 = vadd.f32 %v1218, 1.1920929e-07
    %v1221 = vrsqrt.pop %v1219
    %v1222 = vrsqrt.pop %v1220
    %v1223 = vmul.f32 %v1207, %v1221
    %v1224 = vmul.f32 %v1208, %v1222
    %v1225 = vld [vmem:[%s6] sm:$0xff]
    %v1226 = vld [vmem:[%s6 + $0x8] sm:$0xff]
    %v1227 = vld [vmem:[%s6 + $0x10] sm:$0xff]
    %v1228 = vld [vmem:[%s6 + $0x18] sm:$0xff]
    %v1229 = vld [vmem:[%s7] sm:$0x1]
    %v1231 = vlaneseq
    %v1232 = vshrl.u32 %v1231, 7
    %v1233 = vsub.s32 0, %v1232
    %v1234 = vrot.slane %v1229, %v1233
    %v1237 = vsel %vm158, %v1223, 0
    %v1240 = vsel %vm158, %v1224, 0
    %1242 = vmatprep.subr.mxu0 0.0
    %1243 = vmatpush1.msra.mxu0 %v1225
    %1244 = vmatprep.subr.mxu0 0.0
    %1245 = vmatpush1.msra.mxu0 %v1226
    %1246 = vmatprep.subr.mxu0 0.0
    %1247 = vmatpush1.msra.mxu0 %v1227
    %1248 = vmatprep.subr.mxu0 0.0
    %1249 = vmatpush1.msra.mxu0 %v1228
    %1250 = vmatprep.subr.mxu0 0.0
    %1251 = vmatpush1.msra.mxu0 0.0
    %1252 = vmatprep.subr.mxu0 0.0
    %1253 = vmatpush1.msra.mxu0 0.0
    %1254 = vmatprep.subr.mxu0 0.0
    %1255 = vmatpush1.msra.mxu0 0.0
    %1256 = vmatprep.subr.mxu0 0.0
    %1257 = vmatpush1.msra.mxu0 0.0
    %1258 = vmatprep.subr.mxu0 0.0
    %1259 = vmatpush1.msra.mxu0 0.0
    %1260 = vmatprep.subr.mxu0 0.0
    %1261 = vmatpush1.msra.mxu0 0.0
    %1262 = vmatprep.subr.mxu0 0.0
    %1263 = vmatpush1.msra.mxu0 0.0
    %1264 = vmatprep.subr.mxu0 0.0
    %1265 = vmatpush1.msra.mxu0 0.0
    %1266 = vmatprep.subr.mxu0 0.0
    %1267 = vmatpush1.msra.mxu0 0.0
    %1268 = vmatprep.subr.mxu0 0.0
    %1269 = vmatpush1.msra.mxu0 0.0
    %1270 = vmatprep.subr.mxu0 0.0
    %1271 = vmatpush1.msra.mxu0 0.0
    %1272 = vmatprep.subr.mxu0 0.0
    %1273 = vmatpush1.msra.mxu0 0.0
    %1274 = vmatprep.subr.mxu0 0.0
    %1275 = vmatpush1.msra.mxu0 0.0
    %1276 = vmatprep.subr.mxu0 0.0
    %1277 = vmatpush1.msra.mxu0 0.0
    %1278 = vmatprep.subr.mxu0 0.0
    %1279 = vmatpush1.msra.mxu0 0.0
    %1280 = vmatprep.subr.mxu0 0.0
    %1281 = vmatpush1.msra.mxu0 0.0
    %1282 = vmatprep.subr.mxu0 0.0
    %1283 = vmatpush1.msra.mxu0 0.0
    %1284 = vmatprep.subr.mxu0 0.0
    %1285 = vmatpush1.msra.mxu0 0.0
    %1286 = vmatprep.subr.mxu0 0.0
    %1287 = vmatpush1.msra.mxu0 0.0
    %1288 = vmatprep.subr.mxu0 0.0
    %1289 = vmatpush1.msra.mxu0 0.0
    %1290 = vmatprep.subr.mxu0 0.0
    %1291 = vmatpush1.msra.mxu0 0.0
    %1292 = vmatprep.subr.mxu0 0.0
    %1293 = vmatpush1.msra.mxu0 0.0
    %1294 = vmatprep.subr.mxu0 0.0
    %1295 = vmatpush1.msra.mxu0 0.0
    %1296 = vmatprep.subr.mxu0 0.0
    %1297 = vmatpush1.msra.mxu0 0.0
    %1298 = vmatprep.subr.mxu0 0.0
    %1299 = vmatpush1.msra.mxu0 0.0
    %1300 = vmatprep.subr.mxu0 0.0
    %1301 = vmatpush1.msra.mxu0 0.0
    %1302 = vmatprep.subr.mxu0 0.0
    %1303 = vmatpush1.msra.mxu0 0.0
    %1304 = vmatprep.subr.mxu0 0.0
    %1305 = vmatpush1.msra.mxu0 0.0
    %1306 = vmatprep.mubr.f32.mxu0 0.0
    %1307 = vmatmul.mubr.f32.gmra.mrb[0].mxu0 %v1237
    %v1308 = vpop.f32.mrb[0].mxu0
    %v1309 = vadd.f32 %v1234, %v1308
    %v1310 = vpop.f32.mrb[0].mxu0
    %1311 = vmatprep.mubr.f32.mxu0 0.0
    %1312 = vmatmul.mubr.f32.gmra.mrb[0].mxu0 %v1240
    %v1313 = vpop.f32.mrb[0].mxu0
    %v1314 = vadd.f32 %v1234, %v1313
    %v1315 = vpop.f32.mrb[0].mxu0
    %1316 = vdwg.mxu0
    %v1317 = vsub.f32 0.0, %v1309
    %v1318 = vsub.f32 0.0, %v1314
    %v1319 = vmul.f32 %v1317, 1.442695
    %v1320 = vpow.pop %v1319
    %v1321 = vmul.f32 %v1318, 1.442695
    %v1322 = vpow.pop %v1321
    %v1323 = vadd.f32 %v1320, 1.0
    %v1324 = vadd.f32 %v1322, 1.0
    %v1325 = vrcp.pop %v1323
    %v1326 = vrcp.pop %v1324
    %v1327 = vmul.f32 %v1309, %v1325
    %v1328 = vmul.f32 %v1314, %v1326
    %1331 = vrot.lane.b32.xlu0 %v1309, 64
    %v1332 = vpop.permute.xlu0 %1331
    %1333 = vrot.lane.b32.xlu0 %v1314, 64
    %v1334 = vpop.permute.xlu0 %1333
    %v1337 = vmul.f32 %v1327, %v1332
    %v1338 = vmul.f32 %v1328, %v1334
    %v1339 = vld [vmem:[%s8] sm:$0xff]
    %v1340 = vld [vmem:[%s8 + $0x8] sm:$0xff]
    %v1341 = vld [vmem:[%s8 + $0x10] sm:$0xff]
    %v1342 = vld [vmem:[%s8 + $0x18] sm:$0xff]
    %v1343 = vld [vmem:[%s8 + $0x20] sm:$0xff]
    %v1344 = vld [vmem:[%s8 + $0x28] sm:$0xff]
    %v1345 = vld [vmem:[%s8 + $0x30] sm:$0xff]
    %v1346 = vld [vmem:[%s8 + $0x38] sm:$0xff]
    %vm1347 = vcmask 523264
    %v1349 = vsel %vm1347, %v1337, 0
    %v1352 = vsel %vm1347, %v1338, 0
    %1354 = vmatprep.subr.mxu0 0.0
    %1355 = vmatpush1.msra.mxu0 %v1339
    %1356 = vmatprep.subr.mxu0 0.0
    %1357 = vmatpush1.msra.mxu0 %v1340
    %1358 = vmatprep.subr.mxu0 0.0
    %1359 = vmatpush1.msra.mxu0 %v1341
    %1360 = vmatprep.subr.mxu0 0.0
    %1361 = vmatpush1.msra.mxu0 %v1342
    %1362 = vmatprep.subr.mxu0 0.0
    %1363 = vmatpush1.msra.mxu0 %v1343
    %1364 = vmatprep.subr.mxu0 0.0
    %1365 = vmatpush1.msra.mxu0 %v1344
    %1366 = vmatprep.subr.mxu0 0.0
    %1367 = vmatpush1.msra.mxu0 %v1345
    %1368 = vmatprep.subr.mxu0 0.0
    %1369 = vmatpush1.msra.mxu0 %v1346
    %1370 = vmatprep.subr.mxu0 0.0
    %1371 = vmatpush1.msra.mxu0 0.0
    %1372 = vmatprep.subr.mxu0 0.0
    %1373 = vmatpush1.msra.mxu0 0.0
    %1374 = vmatprep.subr.mxu0 0.0
    %1375 = vmatpush1.msra.mxu0 0.0
    %1376 = vmatprep.subr.mxu0 0.0
    %1377 = vmatpush1.msra.mxu0 0.0
    %1378 = vmatprep.subr.mxu0 0.0
    %1379 = vmatpush1.msra.mxu0 0.0
    %1380 = vmatprep.subr.mxu0 0.0
    %1381 = vmatpush1.msra.mxu0 0.0
    %1382 = vmatprep.subr.mxu0 0.0
    %1383 = vmatpush1.msra.mxu0 0.0
    %1384 = vmatprep.subr.mxu0 0.0
    %1385 = vmatpush1.msra.mxu0 0.0
    %1386 = vmatprep.subr.mxu0 0.0
    %1387 = vmatpush1.msra.mxu0 0.0
    %1388 = vmatprep.subr.mxu0 0.0
    %1389 = vmatpush1.msra.mxu0 0.0
    %1390 = vmatprep.subr.mxu0 0.0
    %1391 = vmatpush1.msra.mxu0 0.0
    %1392 = vmatprep.subr.mxu0 0.0
    %1393 = vmatpush1.msra.mxu0 0.0
    %1394 = vmatprep.subr.mxu0 0.0
    %1395 = vmatpush1.msra.mxu0 0.0
    %1396 = vmatprep.subr.mxu0 0.0
    %1397 = vmatpush1.msra.mxu0 0.0
    %1398 = vmatprep.subr.mxu0 0.0
    %1399 = vmatpush1.msra.mxu0 0.0
    %1400 = vmatprep.subr.mxu0 0.0
    %1401 = vmatpush1.msra.mxu0 0.0
    %1402 = vmatprep.subr.mxu0 0.0
    %1403 = vmatpush1.msra.mxu0 0.0
    %1404 = vmatprep.subr.mxu0 0.0
    %1405 = vmatpush1.msra.mxu0 0.0
    %1406 = vmatprep.subr.mxu0 0.0
    %1407 = vmatpush1.msra.mxu0 0.0
    %1408 = vmatprep.subr.mxu0 0.0
    %1409 = vmatpush1.msra.mxu0 0.0
    %1410 = vmatprep.subr.mxu0 0.0
    %1411 = vmatpush1.msra.mxu0 0.0
    %1412 = vmatprep.subr.mxu0 0.0
    %1413 = vmatpush1.msra.mxu0 0.0
    %1414 = vmatprep.subr.mxu0 0.0
    %1415 = vmatpush1.msra.mxu0 0.0
    %1416 = vmatprep.subr.mxu0 0.0
    %1417 = vmatpush1.msra.mxu0 0.0
    %1418 = vmatprep.mubr.f32.mxu0 0.0
    %1419 = vmatmul.mubr.f32.gmra.mrb[0].mxu0 %v1349
    %v1420 = vpop.f32.mrb[0].mxu0
    %v1421 = vadd.f32 0.0, %v1420
    %v1422 = vpop.f32.mrb[0].mxu0
    %1423 = vmatprep.mubr.f32.mxu0 0.0
    %1424 = vmatmul.mubr.f32.gmra.mrb[0].mxu0 %v1352
    %v1425 = vpop.f32.mrb[0].mxu0
    %v1426 = vadd.f32 0.0, %v1425
    %v1427 = vpop.f32.mrb[0].mxu0
    %1428 = vdwg.mxu0
    %v1429 = vadd.f32 %v1207, %v1421
    %v1430 = vadd.f32 %v1208, %v1426
    %v1431 = vld [vmem:[%s9] sm:$0x1]
    %v1433 = vlaneseq
    %v1434 = vshrl.u32 %v1433, 7
    %v1435 = vsub.s32 0, %v1434
    %v1436 = vrot.slane %v1431, %v1435
    %v1438 = vadd.f32 %v1429, %v1436
    %v1439 = vadd.f32 %v1430, %v1436
    %v1440 = vmul.f32 %v1438, %v1438
    %v1441 = vmul.f32 %v1439, %v1439
    %v1442 = vsel %vm158, %v1440, 0.0
    %1443 = vadd.xlane.f32.xlu0 %v1442
    %v1444 = vpop.xlane.xlu0 %1443
    %v1445 = vsel %vm158, %v1441, 0.0
    %1446 = vadd.xlane.f32.xlu0 %v1445
    %v1447 = vpop.xlane.xlu0 %1446
    %v1448 = vmul.f32 %v1444, %v165
    %v1449 = vmul.f32 %v1447, %v165
    %v1450 = vadd.f32 %v1448, 1.1920929e-07
    %v1451 = vadd.f32 %v1449, 1.1920929e-07
    %v1452 = vrsqrt.pop %v1450
    %v1453 = vrsqrt.pop %v1451
    %v1454 = vmul.f32 %v1438, %v1452
    %v1455 = vmul.f32 %v1439, %v1453
    %s1456 = scalar_lea.vmem %s2, 32
    %v1457 = vld [vmem:[%s1456] sm:$0xff]
    %v1458 = vld [vmem:[%s1456 + $0x8] sm:$0xff]
    %v1459 = vld [vmem:[%s1456 + $0x10] sm:$0xff]
    %v1460 = vld [vmem:[%s1456 + $0x18] sm:$0xff]
    %s1461 = scalar_lea.vmem %s3, 1
    %v1462 = vld [vmem:[%s1461] sm:$0x1]
    %v1464 = vlaneseq
    %v1465 = vshrl.u32 %v1464, 7
    %v1466 = vsub.s32 0, %v1465
    %v1467 = vrot.slane %v1462, %v1466
    %v1470 = vsel %vm158, %v1454, 0
    %v1473 = vsel %vm158, %v1455, 0
    %1475 = vmatprep.subr.mxu0 0.0
    %1476 = vmatpush1.msra.mxu0 %v1457
    %1477 = vmatprep.subr.mxu0 0.0
    %1478 = vmatpush1.msra.mxu0 %v1458
    %1479 = vmatprep.subr.mxu0 0.0
    %1480 = vmatpush1.msra.mxu0 %v1459
    %1481 = vmatprep.subr.mxu0 0.0
    %1482 = vmatpush1.msra.mxu0 %v1460
    %1483 = vmatprep.subr.mxu0 0.0
    %1484 = vmatpush1.msra.mxu0 0.0
    %1485 = vmatprep.subr.mxu0 0.0
    %1486 = vmatpush1.msra.mxu0 0.0
    %1487 = vmatprep.subr.mxu0 0.0
    %1488 = vmatpush1.msra.mxu0 0.0
    %1489 = vmatprep.subr.mxu0 0.0
    %1490 = vmatpush1.msra.mxu0 0.0
    %1491 = vmatprep.subr.mxu0 0.0
    %1492 = vmatpush1.msra.mxu0 0.0
    %1493 = vmatprep.subr.mxu0 0.0
    %1494 = vmatpush1.msra.mxu0 0.0
    %1495 = vmatprep.subr.mxu0 0.0
    %1496 = vmatpush1.msra.mxu0 0.0
    %1497 = vmatprep.subr.mxu0 0.0
    %1498 = vmatpush1.msra.mxu0 0.0
    %1499 = vmatprep.subr.mxu0 0.0
    %1500 = vmatpush1.msra.mxu0 0.0
    %1501 = vmatprep.subr.mxu0 0.0
    %1502 = vmatpush1.msra.mxu0 0.0
    %1503 = vmatprep.subr.mxu0 0.0
    %1504 = vmatpush1.msra.mxu0 0.0
    %1505 = vmatprep.subr.mxu0 0.0
    %1506 = vmatpush1.msra.mxu0 0.0
    %1507 = vmatprep.subr.mxu0 0.0
    %1508 = vmatpush1.msra.mxu0 0.0
    %1509 = vmatprep.subr.mxu0 0.0
    %1510 = vmatpush1.msra.mxu0 0.0
    %1511 = vmatprep.subr.mxu0 0.0
    %1512 = vmatpush1.msra.mxu0 0.0
    %1513 = vmatprep.subr.mxu0 0.0
    %1514 = vmatpush1.msra.mxu0 0.0
    %1515 = vmatprep.subr.mxu0 0.0
    %1516 = vmatpush1.msra.mxu0 0.0
    %1517 = vmatprep.subr.mxu0 0.0
    %1518 = vmatpush1.msra.mxu0 0.0
    %1519 = vmatprep.subr.mxu0 0.0
    %1520 = vmatpush1.msra.mxu0 0.0
    %1521 = vmatprep.subr.mxu0 0.0
    %1522 = vmatpush1.msra.mxu0 0.0
    %1523 = vmatprep.subr.mxu0 0.0
    %1524 = vmatpush1.msra.mxu0 0.0
    %1525 = vmatprep.subr.mxu0 0.0
    %1526 = vmatpush1.msra.mxu0 0.0
    %1527 = vmatprep.subr.mxu0 0.0
    %1528 = vmatpush1.msra.mxu0 0.0
    %1529 = vmatprep.subr.mxu0 0.0
    %1530 = vmatpush1.msra.mxu0 0.0
    %1531 = vmatprep.subr.mxu0 0.0
    %1532 = vmatpush1.msra.mxu0 0.0
    %1533 = vmatprep.subr.mxu0 0.0
    %1534 = vmatpush1.msra.mxu0 0.0
    %1535 = vmatprep.subr.mxu0 0.0
    %1536 = vmatpush1.msra.mxu0 0.0
    %1537 = vmatprep.subr.mxu0 0.0
    %1538 = vmatpush1.msra.mxu0 0.0
    %1539 = vmatprep.mubr.f32.mxu0 0.0
    %1540 = vmatmul.mubr.f32.gmra.mrb[0].mxu0 %v1470
    %v1541 = vpop.f32.mrb[0].mxu0
    %v1542 = vadd.f32 %v1467, %v1541
    %v1543 = vpop.f32.mrb[0].mxu0
    %1544 = vmatprep.mubr.f32.mxu0 0.0
    %1545 = vmatmul.mubr.f32.gmra.mrb[0].mxu0 %v1473
    %v1546 = vpop.f32.mrb[0].mxu0
    %v1547 = vadd.f32 %v1467, %v1546
    %v1548 = vpop.f32.mrb[0].mxu0
    %1549 = vdwg.mxu0
    %1552 = vrot.lane.b32.xlu0 %v1542, 96
    %v1553 = vpop.permute.xlu0 %1552
    %1554 = vrot.lane.b32.xlu0 %v1547, 96
    %v1555 = vpop.permute.xlu0 %1554
    %v1556 = vsel %vm272, %v1542, 0
    %v1558 = vsel %vm272, %v1547, 0
    %v1560 = vsel %vm272, %v1553, 0
    %v1562 = vsel %vm272, %v1555, 0
    %1564 = vmatprep.subr.mxu0 0.0
    %1565 = vmatpush1.xpose.msra.mxu0 %v1560
    %1566 = vmatprep.subr.mxu0 0.0
    %1567 = vmatpush1.xpose.msra.mxu0 %v1562
    %1568 = vmatprep.subr.mxu0 0.0
    %1569 = vmatpush1.xpose.msra.mxu0 0.0
    %1570 = vmatprep.subr.mxu0 0.0
    %1571 = vmatpush1.xpose.msra.mxu0 0.0
    %1572 = vmatprep.subr.mxu0 0.0
    %1573 = vmatpush1.xpose.msra.mxu0 0.0
    %1574 = vmatprep.subr.mxu0 0.0
    %1575 = vmatpush1.xpose.msra.mxu0 0.0
    %1576 = vmatprep.subr.mxu0 0.0
    %1577 = vmatpush1.xpose.msra.mxu0 0.0
    %1578 = vmatprep.subr.mxu0 0.0
    %1579 = vmatpush1.xpose.msra.mxu0 0.0
    %1580 = vmatprep.subr.mxu0 0.0
    %1581 = vmatpush1.xpose.msra.mxu0 0.0
    %1582 = vmatprep.subr.mxu0 0.0
    %1583 = vmatpush1.xpose.msra.mxu0 0.0
    %1584 = vmatprep.subr.mxu0 0.0
    %1585 = vmatpush1.xpose.msra.mxu0 0.0
    %1586 = vmatprep.subr.mxu0 0.0
    %1587 = vmatpush1.xpose.msra.mxu0 0.0
    %1588 = vmatprep.subr.mxu0 0.0
    %1589 = vmatpush1.xpose.msra.mxu0 0.0
    %1590 = vmatprep.subr.mxu0 0.0
    %1591 = vmatpush1.xpose.msra.mxu0 0.0
    %1592 = vmatprep.subr.mxu0 0.0
    %1593 = vmatpush1.xpose.msra.mxu0 0.0
    %1594 = vmatprep.subr.mxu0 0.0
    %1595 = vmatpush1.xpose.msra.mxu0 0.0
    %1596 = vmatprep.subr.mxu0 0.0
    %1597 = vmatpush1.xpose.msra.mxu0 0.0
    %1598 = vmatprep.subr.mxu0 0.0
    %1599 = vmatpush1.xpose.msra.mxu0 0.0
    %1600 = vmatprep.subr.mxu0 0.0
    %1601 = vmatpush1.xpose.msra.mxu0 0.0
    %1602 = vmatprep.subr.mxu0 0.0
    %1603 = vmatpush1.xpose.msra.mxu0 0.0
    %1604 = vmatprep.subr.mxu0 0.0
    %1605 = vmatpush1.xpose.msra.mxu0 0.0
    %1606 = vmatprep.subr.mxu0 0.0
    %1607 = vmatpush1.xpose.msra.mxu0 0.0
    %1608 = vmatprep.subr.mxu0 0.0
    %1609 = vmatpush1.xpose.msra.mxu0 0.0
    %1610 = vmatprep.subr.mxu0 0.0
    %1611 = vmatpush1.xpose.msra.mxu0 0.0
    %1612 = vmatprep.subr.mxu0 0.0
    %1613 = vmatpush1.xpose.msra.mxu0 0.0
    %1614 = vmatprep.subr.mxu0 0.0
    %1615 = vmatpush1.xpose.msra.mxu0 0.0
    %1616 = vmatprep.subr.mxu0 0.0
    %1617 = vmatpush1.xpose.msra.mxu0 0.0
    %1618 = vmatprep.subr.mxu0 0.0
    %1619 = vmatpush1.xpose.msra.mxu0 0.0
    %1620 = vmatprep.subr.mxu0 0.0
    %1621 = vmatpush1.xpose.msra.mxu0 0.0
    %1622 = vmatprep.subr.mxu0 0.0
    %1623 = vmatpush1.xpose.msra.mxu0 0.0
    %1624 = vmatprep.subr.mxu0 0.0
    %1625 = vmatpush1.xpose.msra.mxu0 0.0
    %1626 = vmatprep.subr.mxu0 0.0
    %1627 = vmatpush1.xpose.msra.mxu0 0.0
    %1628 = vmatprep.mubr.f32.mxu0 0.0
    %1629 = vmatmul.mubr.f32.gmra.mrb[0].mxu0 %v1556
    %v1630 = vpop.f32.mrb[0].mxu0
    %v1631 = vadd.f32 0.0, %v1630
    %v1632 = vpop.f32.mrb[0].mxu0
    %1633 = vmatprep.mubr.f32.mxu0 0.0
    %1634 = vmatmul.mubr.f32.gmra.mrb[0].mxu0 %v1558
    %v1635 = vpop.f32.mrb[0].mxu0
    %v1636 = vadd.f32 0.0, %v1635
    %v1637 = vpop.f32.mrb[0].mxu0
    %1638 = vdwg.mxu0
    %v1639 = vmul.f32 %v1631, 0.35355338
    %v1640 = vmul.f32 %v1636, 0.35355338
    %v1641 = vadd.f32 %v1639, %v154
    %v1642 = vadd.f32 %v1640, %v155
    %v1643 = vsel %vm360, %v1641, -inf
    %1644 = vmax.xlane.f32.xlu0 %v1643
    %v1645 = vpop.xlane.xlu0 %1644
    %v1646 = vsel %vm360, %v1642, -inf
    %1647 = vmax.xlane.f32.xlu0 %v1646
    %v1648 = vpop.xlane.xlu0 %1647
    %v1649 = vsub.f32 %v1641, %v1645
    %v1650 = vsub.f32 %v1642, %v1648
    %v1651 = vmul.f32 %v1649, 1.442695
    %v1652 = vpow.pop %v1651
    %v1653 = vmul.f32 %v1650, 1.442695
    %v1654 = vpow.pop %v1653
    %v1655 = vsel %vm360, %v1652, 0.0
    %1656 = vadd.xlane.f32.xlu0 %v1655
    %v1657 = vpop.xlane.xlu0 %1656
    %v1658 = vsel %vm360, %v1654, 0.0
    %1659 = vadd.xlane.f32.xlu0 %v1658
    %v1660 = vpop.xlane.xlu0 %1659
    %v1661 = vrcp.pop %v1657
    %v1662 = vrcp.pop %v1660
    %v1663 = vmul.f32 %v1652, %v1661
    %v1664 = vmul.f32 %v1654, %v1662
    %1665 = vrot.lane.b32.xlu0 %v1542, 64
    %v1666 = vpop.permute.xlu0 %1665
    %1667 = vrot.lane.b32.xlu0 %v1547, 64
    %v1668 = vpop.permute.xlu0 %1667
    %v1672 = vsel %vm360, %v1663, 0
    %v1675 = vsel %vm360, %v1664, 0
    %1677 = vmatprep.subr.mxu0 0.0
    %1678 = vmatpush1.msra.mxu0 %v1666
    %1679 = vmatprep.subr.mxu0 0.0
    %1680 = vmatpush1.msra.mxu0 %v1668
    %1681 = vmatprep.subr.mxu0 0.0
    %1682 = vmatpush1.msra.mxu0 0.0
    %1683 = vmatprep.subr.mxu0 0.0
    %1684 = vmatpush1.msra.mxu0 0.0
    %1685 = vmatprep.subr.mxu0 0.0
    %1686 = vmatpush1.msra.mxu0 0.0
    %1687 = vmatprep.subr.mxu0 0.0
    %1688 = vmatpush1.msra.mxu0 0.0
    %1689 = vmatprep.subr.mxu0 0.0
    %1690 = vmatpush1.msra.mxu0 0.0
    %1691 = vmatprep.subr.mxu0 0.0
    %1692 = vmatpush1.msra.mxu0 0.0
    %1693 = vmatprep.subr.mxu0 0.0
    %1694 = vmatpush1.msra.mxu0 0.0
    %1695 = vmatprep.subr.mxu0 0.0
    %1696 = vmatpush1.msra.mxu0 0.0
    %1697 = vmatprep.subr.mxu0 0.0
    %1698 = vmatpush1.msra.mxu0 0.0
    %1699 = vmatprep.subr.mxu0 0.0
    %1700 = vmatpush1.msra.mxu0 0.0
    %1701 = vmatprep.subr.mxu0 0.0
    %1702 = vmatpush1.msra.mxu0 0.0
    %1703 = vmatprep.subr.mxu0 0.0
    %1704 = vmatpush1.msra.mxu0 0.0
    %1705 = vmatprep.subr.mxu0 0.0
    %1706 = vmatpush1.msra.mxu0 0.0
    %1707 = vmatprep.subr.mxu0 0.0
    %1708 = vmatpush1.msra.mxu0 0.0
    %1709 = vmatprep.subr.mxu0 0.0
    %1710 = vmatpush1.msra.mxu0 0.0
    %1711 = vmatprep.subr.mxu0 0.0
    %1712 = vmatpush1.msra.mxu0 0.0
    %1713 = vmatprep.subr.mxu0 0.0
    %1714 = vmatpush1.msra.mxu0 0.0
    %1715 = vmatprep.subr.mxu0 0.0
    %1716 = vmatpush1.msra.mxu0 0.0
    %1717 = vmatprep.subr.mxu0 0.0
    %1718 = vmatpush1.msra.mxu0 0.0
    %1719 = vmatprep.subr.mxu0 0.0
    %1720 = vmatpush1.msra.mxu0 0.0
    %1721 = vmatprep.subr.mxu0 0.0
    %1722 = vmatpush1.msra.mxu0 0.0
    %1723 = vmatprep.subr.mxu0 0.0
    %1724 = vmatpush1.msra.mxu0 0.0
    %1725 = vmatprep.subr.mxu0 0.0
    %1726 = vmatpush1.msra.mxu0 0.0
    %1727 = vmatprep.subr.mxu0 0.0
    %1728 = vmatpush1.msra.mxu0 0.0
    %1729 = vmatprep.subr.mxu0 0.0
    %1730 = vmatpush1.msra.mxu0 0.0
    %1731 = vmatprep.subr.mxu0 0.0
    %1732 = vmatpush1.msra.mxu0 0.0
    %1733 = vmatprep.subr.mxu0 0.0
    %1734 = vmatpush1.msra.mxu0 0.0
    %1735 = vmatprep.subr.mxu0 0.0
    %1736 = vmatpush1.msra.mxu0 0.0
    %1737 = vmatprep.subr.mxu0 0.0
    %1738 = vmatpush1.msra.mxu0 0.0
    %1739 = vmatprep.subr.mxu0 0.0
    %1740 = vmatpush1.msra.mxu0 0.0
    %1741 = vmatprep.mubr.f32.mxu0 0.0
    %1742 = vmatmul.mubr.f32.gmra.mrb[0].mxu0 %v1672
    %v1743 = vpop.f32.mrb[0].mxu0
    %v1744 = vadd.f32 0.0, %v1743
    %v1745 = vpop.f32.mrb[0].mxu0
    %1746 = vmatprep.mubr.f32.mxu0 0.0
    %1747 = vmatmul.mubr.f32.gmra.mrb[0].mxu0 %v1675
    %v1748 = vpop.f32.mrb[0].mxu0
    %v1749 = vadd.f32 0.0, %v1748
    %v1750 = vpop.f32.mrb[0].mxu0
    %1751 = vdwg.mxu0
    %1752 = vrot.lane.b32.xlu0 %v1542, 120
    %v1753 = vpop.permute.xlu0 %1752
    %1754 = vrot.lane.b32.xlu0 %v1547, 120
    %v1755 = vpop.permute.xlu0 %1754
    %1756 = vrot.lane.b32.xlu0 %v1542, 88
    %v1757 = vpop.permute.xlu0 %1756
    %1758 = vrot.lane.b32.xlu0 %v1547, 88
    %v1759 = vpop.permute.xlu0 %1758
    %v1760 = vsel %vm272, %v1753, 0
    %v1762 = vsel %vm272, %v1755, 0
    %v1764 = vsel %vm272, %v1757, 0
    %v1766 = vsel %vm272, %v1759, 0
    %1768 = vmatprep.subr.mxu0 0.0
    %1769 = vmatpush1.xpose.msra.mxu0 %v1764
    %1770 = vmatprep.subr.mxu0 0.0
    %1771 = vmatpush1.xpose.msra.mxu0 %v1766
    %1772 = vmatprep.subr.mxu0 0.0
    %1773 = vmatpush1.xpose.msra.mxu0 0.0
    %1774 = vmatprep.subr.mxu0 0.0
    %1775 = vmatpush1.xpose.msra.mxu0 0.0
    %1776 = vmatprep.subr.mxu0 0.0
    %1777 = vmatpush1.xpose.msra.mxu0 0.0
    %1778 = vmatprep.subr.mxu0 0.0
    %1779 = vmatpush1.xpose.msra.mxu0 0.0
    %1780 = vmatprep.subr.mxu0 0.0
    %1781 = vmatpush1.xpose.msra.mxu0 0.0
    %1782 = vmatprep.subr.mxu0 0.0
    %1783 = vmatpush1.xpose.msra.mxu0 0.0
    %1784 = vmatprep.subr.mxu0 0.0
    %1785 = vmatpush1.xpose.msra.mxu0 0.0
    %1786 = vmatprep.subr.mxu0 0.0
    %1787 = vmatpush1.xpose.msra.mxu0 0.0
    %1788 = vmatprep.subr.mxu0 0.0
    %1789 = vmatpush1.xpose.msra.mxu0 0.0
    %1790 = vmatprep.subr.mxu0 0.0
    %1791 = vmatpush1.xpose.msra.mxu0 0.0
    %1792 = vmatprep.subr.mxu0 0.0
    %1793 = vmatpush1.xpose.msra.mxu0 0.0
    %1794 = vmatprep.subr.mxu0 0.0
    %1795 = vmatpush1.xpose.msra.mxu0 0.0
    %1796 = vmatprep.subr.mxu0 0.0
    %1797 = vmatpush1.xpose.msra.mxu0 0.0
    %1798 = vmatprep.subr.mxu0 0.0
    %1799 = vmatpush1.xpose.msra.mxu0 0.0
    %1800 = vmatprep.subr.mxu0 0.0
    %1801 = vmatpush1.xpose.msra.mxu0 0.0
    %1802 = vmatprep.subr.mxu0 0.0
    %1803 = vmatpush1.xpose.msra.mxu0 0.0
    %1804 = vmatprep.subr.mxu0 0.0
    %1805 = vmatpush1.xpose.msra.mxu0 0.0
    %1806 = vmatprep.subr.mxu0 0.0
    %1807 = vmatpush1.xpose.msra.mxu0 0.0
    %1808 = vmatprep.subr.mxu0 0.0
    %1809 = vmatpush1.xpose.msra.mxu0 0.0
    %1810 = vmatprep.subr.mxu0 0.0
    %1811 = vmatpush1.xpose.msra.mxu0 0.0
    %1812 = vmatprep.subr.mxu0 0.0
    %1813 = vmatpush1.xpose.msra.mxu0 0.0
    %1814 = vmatprep.subr.mxu0 0.0
    %1815 = vmatpush1.xpose.msra.mxu0 0.0
    %1816 = vmatprep.subr.mxu0 0.0
    %1817 = vmatpush1.xpose.msra.mxu0 0.0
    %1818 = vmatprep.subr.mxu0 0.0
    %1819 = vmatpush1.xpose.msra.mxu0 0.0
    %1820 = vmatprep.subr.mxu0 0.0
    %1821 = vmatpush1.xpose.msra.mxu0 0.0
    %1822 = vmatprep.subr.mxu0 0.0
    %1823 = vmatpush1.xpose.msra.mxu0 0.0
    %1824 = vmatprep.subr.mxu0 0.0
    %1825 = vmatpush1.xpose.msra.mxu0 0.0
    %1826 = vmatprep.subr.mxu0 0.0
    %1827 = vmatpush1.xpose.msra.mxu0 0.0
    %1828 = vmatprep.subr.mxu0 0.0
    %1829 = vmatpush1.xpose.msra.mxu0 0.0
    %1830 = vmatprep.subr.mxu0 0.0
    %1831 = vmatpush1.xpose.msra.mxu0 0.0
    %1832 = vmatprep.mubr.f32.mxu0 0.0
    %1833 = vmatmul.mubr.f32.gmra.mrb[0].mxu0 %v1760
    %v1834 = vpop.f32.mrb[0].mxu0
    %v1835 = vadd.f32 0.0, %v1834
    %v1836 = vpop.f32.mrb[0].mxu0
    %1837 = vmatprep.mubr.f32.mxu0 0.0
    %1838 = vmatmul.mubr.f32.gmra.mrb[0].mxu0 %v1762
    %v1839 = vpop.f32.mrb[0].mxu0
    %v1840 = vadd.f32 0.0, %v1839
    %v1841 = vpop.f32.mrb[0].mxu0
    %1842 = vdwg.mxu0
    %v1843 = vmul.f32 %v1835, 0.35355338
    %v1844 = vmul.f32 %v1840, 0.35355338
    %v1845 = vadd.f32 %v1843, %v154
    %v1846 = vadd.f32 %v1844, %v155
    %v1847 = vsel %vm360, %v1845, -inf
    %1848 = vmax.xlane.f32.xlu0 %v1847
    %v1849 = vpop.xlane.xlu0 %1848
    %v1850 = vsel %vm360, %v1846, -inf
    %1851 = vmax.xlane.f32.xlu0 %v1850
    %v1852 = vpop.xlane.xlu0 %1851
    %v1853 = vsub.f32 %v1845, %v1849
    %v1854 = vsub.f32 %v1846, %v1852
    %v1855 = vmul.f32 %v1853, 1.442695
    %v1856 = vpow.pop %v1855
    %v1857 = vmul.f32 %v1854, 1.442695
    %v1858 = vpow.pop %v1857
    %v1859 = vsel %vm360, %v1856, 0.0
    %1860 = vadd.xlane.f32.xlu0 %v1859
    %v1861 = vpop.xlane.xlu0 %1860
    %v1862 = vsel %vm360, %v1858, 0.0
    %1863 = vadd.xlane.f32.xlu0 %v1862
    %v1864 = vpop.xlane.xlu0 %1863
    %v1865 = vrcp.pop %v1861
    %v1866 = vrcp.pop %v1864
    %v1867 = vmul.f32 %v1856, %v1865
    %v1868 = vmul.f32 %v1858, %v1866
    %1869 = vrot.lane.b32.xlu0 %v1542, 56
    %v1870 = vpop.permute.xlu0 %1869
    %1871 = vrot.lane.b32.xlu0 %v1547, 56
    %v1872 = vpop.permute.xlu0 %1871
    %v1876 = vsel %vm360, %v1867, 0
    %v1879 = vsel %vm360, %v1868, 0
    %1881 = vmatprep.subr.mxu0 0.0
    %1882 = vmatpush1.msra.mxu0 %v1870
    %1883 = vmatprep.subr.mxu0 0.0
    %1884 = vmatpush1.msra.mxu0 %v1872
    %1885 = vmatprep.subr.mxu0 0.0
    %1886 = vmatpush1.msra.mxu0 0.0
    %1887 = vmatprep.subr.mxu0 0.0
    %1888 = vmatpush1.msra.mxu0 0.0
    %1889 = vmatprep.subr.mxu0 0.0
    %1890 = vmatpush1.msra.mxu0 0.0
    %1891 = vmatprep.subr.mxu0 0.0
    %1892 = vmatpush1.msra.mxu0 0.0
    %1893 = vmatprep.subr.mxu0 0.0
    %1894 = vmatpush1.msra.mxu0 0.0
    %1895 = vmatprep.subr.mxu0 0.0
    %1896 = vmatpush1.msra.mxu0 0.0
    %1897 = vmatprep.subr.mxu0 0.0
    %1898 = vmatpush1.msra.mxu0 0.0
    %1899 = vmatprep.subr.mxu0 0.0
    %1900 = vmatpush1.msra.mxu0 0.0
    %1901 = vmatprep.subr.mxu0 0.0
    %1902 = vmatpush1.msra.mxu0 0.0
    %1903 = vmatprep.subr.mxu0 0.0
    %1904 = vmatpush1.msra.mxu0 0.0
    %1905 = vmatprep.subr.mxu0 0.0
    %1906 = vmatpush1.msra.mxu0 0.0
    %1907 = vmatprep.subr.mxu0 0.0
    %1908 = vmatpush1.msra.mxu0 0.0
    %1909 = vmatprep.subr.mxu0 0.0
    %1910 = vmatpush1.msra.mxu0 0.0
    %1911 = vmatprep.subr.mxu0 0.0
    %1912 = vmatpush1.msra.mxu0 0.0
    %1913 = vmatprep.subr.mxu0 0.0
    %1914 = vmatpush1.msra.mxu0 0.0
    %1915 = vmatprep.subr.mxu0 0.0
    %1916 = vmatpush1.msra.mxu0 0.0
    %1917 = vmatprep.subr.mxu0 0.0
    %1918 = vmatpush1.msra.mxu0 0.0
    %1919 = vmatprep.subr.mxu0 0.0
    %1920 = vmatpush1.msra.mxu0 0.0
    %1921 = vmatprep.subr.mxu0 0.0
    %1922 = vmatpush1.msra.mxu0 0.0
    %1923 = vmatprep.subr.mxu0 0.0
    %1924 = vmatpush1.msra.mxu0 0.0
    %1925 = vmatprep.subr.mxu0 0.0
    %1926 = vmatpush1.msra.mxu0 0.0
    %1927 = vmatprep.subr.mxu0 0.0
    %1928 = vmatpush1.msra.mxu0 0.0
    %1929 = vmatprep.subr.mxu0 0.0
    %1930 = vmatpush1.msra.mxu0 0.0
    %1931 = vmatprep.subr.mxu0 0.0
    %1932 = vmatpush1.msra.mxu0 0.0
    %1933 = vmatprep.subr.mxu0 0.0
    %1934 = vmatpush1.msra.mxu0 0.0
    %1935 = vmatprep.subr.mxu0 0.0
    %1936 = vmatpush1.msra.mxu0 0.0
    %1937 = vmatprep.subr.mxu0 0.0
    %1938 = vmatpush1.msra.mxu0 0.0
    %1939 = vmatprep.subr.mxu0 0.0
    %1940 = vmatpush1.msra.mxu0 0.0
    %1941 = vmatprep.subr.mxu0 0.0
    %1942 = vmatpush1.msra.mxu0 0.0
    %1943 = vmatprep.subr.mxu0 0.0
    %1944 = vmatpush1.msra.mxu0 0.0
    %1945 = vmatprep.mubr.f32.mxu0 0.0
    %1946 = vmatmul.mubr.f32.gmra.mrb[0].mxu0 %v1876
    %v1947 = vpop.f32.mrb[0].mxu0
    %v1948 = vadd.f32 0.0, %v1947
    %v1949 = vpop.f32.mrb[0].mxu0
    %1950 = vmatprep.mubr.f32.mxu0 0.0
    %1951 = vmatmul.mubr.f32.gmra.mrb[0].mxu0 %v1879
    %v1952 = vpop.f32.mrb[0].mxu0
    %v1953 = vadd.f32 0.0, %v1952
    %v1954 = vpop.f32.mrb[0].mxu0
    %1955 = vdwg.mxu0
    %1956 = vrot.lane.b32.xlu0 %v1542, 112
    %v1957 = vpop.permute.xlu0 %1956
    %1958 = vrot.lane.b32.xlu0 %v1547, 112
    %v1959 = vpop.permute.xlu0 %1958
    %1960 = vrot.lane.b32.xlu0 %v1542, 80
    %v1961 = vpop.permute.xlu0 %1960
    %1962 = vrot.lane.b32.xlu0 %v1547, 80
    %v1963 = vpop.permute.xlu0 %1962
    %v1964 = vsel %vm272, %v1957, 0
    %v1966 = vsel %vm272, %v1959, 0
    %v1968 = vsel %vm272, %v1961, 0
    %v1970 = vsel %vm272, %v1963, 0
    %1972 = vmatprep.subr.mxu0 0.0
    %1973 = vmatpush1.xpose.msra.mxu0 %v1968
    %1974 = vmatprep.subr.mxu0 0.0
    %1975 = vmatpush1.xpose.msra.mxu0 %v1970
    %1976 = vmatprep.subr.mxu0 0.0
    %1977 = vmatpush1.xpose.msra.mxu0 0.0
    %1978 = vmatprep.subr.mxu0 0.0
    %1979 = vmatpush1.xpose.msra.mxu0 0.0
    %1980 = vmatprep.subr.mxu0 0.0
    %1981 = vmatpush1.xpose.msra.mxu0 0.0
    %1982 = vmatprep.subr.mxu0 0.0
    %1983 = vmatpush1.xpose.msra.mxu0 0.0
    %1984 = vmatprep.subr.mxu0 0.0
    %1985 = vmatpush1.xpose.msra.mxu0 0.0
    %1986 = vmatprep.subr.mxu0 0.0
    %1987 = vmatpush1.xpose.msra.mxu0 0.0
    %1988 = vmatprep.subr.mxu0 0.0
    %1989 = vmatpush1.xpose.msra.mxu0 0.0
    %1990 = vmatprep.subr.mxu0 0.0
    %1991 = vmatpush1.xpose.msra.mxu0 0.0
    %1992 = vmatprep.subr.mxu0 0.0
    %1993 = vmatpush1.xpose.msra.mxu0 0.0
    %1994 = vmatprep.subr.mxu0 0.0
    %1995 = vmatpush1.xpose.msra.mxu0 0.0
    %1996 = vmatprep.subr.mxu0 0.0
    %1997 = vmatpush1.xpose.msra.mxu0 0.0
    %1998 = vmatprep.subr.mxu0 0.0
    %1999 = vmatpush1.xpose.msra.mxu0 0.0
    %2000 = vmatprep.subr.mxu0 0.0
    %2001 = vmatpush1.xpose.msra.mxu0 0.0
    %2002 = vmatprep.subr.mxu0 0.0
    %2003 = vmatpush1.xpose.msra.mxu0 0.0
    %2004 = vmatprep.subr.mxu0 0.0
    %2005 = vmatpush1.xpose.msra.mxu0 0.0
    %2006 = vmatprep.subr.mxu0 0.0
    %2007 = vmatpush1.xpose.msra.mxu0 0.0
    %2008 = vmatprep.subr.mxu0 0.0
    %2009 = vmatpush1.xpose.msra.mxu0 0.0
    %2010 = vmatprep.subr.mxu0 0.0
    %2011 = vmatpush1.xpose.msra.mxu0 0.0
    %2012 = vmatprep.subr.mxu0 0.0
    %2013 = vmatpush1.xpose.msra.mxu0 0.0
    %2014 = vmatprep.subr.mxu0 0.0
    %2015 = vmatpush1.xpose.msra.mxu0 0.0
    %2016 = vmatprep.subr.mxu0 0.0
    %2017 = vmatpush1.xpose.msra.mxu0 0.0
    %2018 = vmatprep.subr.mxu0 0.0
    %2019 = vmatpush1.xpose.msra.mxu0 0.0
    %2020 = vmatprep.subr.mxu0 0.0
    %2021 = vmatpush1.xpose.msra.mxu0 0.0
    %2022 = vmatprep.subr.mxu0 0.0
    %2023 = vmatpush1.xpose.msra.mxu0 0.0
    %2024 = vmatprep.subr.mxu0 0.0
    %2025 = vmatpush1.xpose.msra.mxu0 0.0
    %2026 = vmatprep.subr.mxu0 0.0
    %2027 = vmatpush1.xpose.msra.mxu0 0.0
    %2028 = vmatprep.subr.mxu0 0.0
    %2029 = vmatpush1.xpose.msra.mxu0 0.0
    %2030 = vmatprep.subr.mxu0 0.0
    %2031 = vmatpush1.xpose.msra.mxu0 0.0
    %2032 = vmatprep.subr.mxu0 0.0
    %2033 = vmatpush1.xpose.msra.mxu0 0.0
    %2034 = vmatprep.subr.mxu0 0.0
    %2035 = vmatpush1.xpose.msra.mxu0 0.0
    %2036 = vmatprep.mubr.f32.mxu0 0.0
    %2037 = vmatmul.mubr.f32.gmra.mrb[0].mxu0 %v1964
    %v2038 = vpop.f32.mrb[0].mxu0
    %v2039 = vadd.f32 0.0, %v2038
    %v2040 = vpop.f32.mrb[0].mxu0
    %2041 = vmatprep.mubr.f32.mxu0 0.0
    %2042 = vmatmul.mubr.f32.gmra.mrb[0].mxu0 %v1966
    %v2043 = vpop.f32.mrb[0].mxu0
    %v2044 = vadd.f32 0.0, %v2043
    %v2045 = vpop.f32.mrb[0].mxu0
    %2046 = vdwg.mxu0
    %v2047 = vmul.f32 %v2039, 0.35355338
    %v2048 = vmul.f32 %v2044, 0.35355338
    %v2049 = vadd.f32 %v2047, %v154
    %v2050 = vadd.f32 %v2048, %v155
    %v2051 = vsel %vm360, %v2049, -inf
    %2052 = vmax.xlane.f32.xlu0 %v2051
    %v2053 = vpop.xlane.xlu0 %2052
    %v2054 = vsel %vm360, %v2050, -inf
    %2055 = vmax.xlane.f32.xlu0 %v2054
    %v2056 = vpop.xlane.xlu0 %2055
    %v2057 = vsub.f32 %v2049, %v2053
    %v2058 = vsub.f32 %v2050, %v2056
    %v2059 = vmul.f32 %v2057, 1.442695
    %v2060 = vpow.pop %v2059
    %v2061 = vmul.f32 %v2058, 1.442695
    %v2062 = vpow.pop %v2061
    %v2063 = vsel %vm360, %v2060, 0.0
    %2064 = vadd.xlane.f32.xlu0 %v2063
    %v2065 = vpop.xlane.xlu0 %2064
    %v2066 = vsel %vm360, %v2062, 0.0
    %2067 = vadd.xlane.f32.xlu0 %v2066
    %v2068 = vpop.xlane.xlu0 %2067
    %v2069 = vrcp.pop %v2065
    %v2070 = vrcp.pop %v2068
    %v2071 = vmul.f32 %v2060, %v2069
    %v2072 = vmul.f32 %v2062, %v2070
    %2073 = vrot.lane.b32.xlu0 %v1542, 48
    %v2074 = vpop.permute.xlu0 %2073
    %2075 = vrot.lane.b32.xlu0 %v1547, 48
    %v2076 = vpop.permute.xlu0 %2075
    %v2080 = vsel %vm360, %v2071, 0
    %v2083 = vsel %vm360, %v2072, 0
    %2085 = vmatprep.subr.mxu0 0.0
    %2086 = vmatpush1.msra.mxu0 %v2074
    %2087 = vmatprep.subr.mxu0 0.0
    %2088 = vmatpush1.msra.mxu0 %v2076
    %2089 = vmatprep.subr.mxu0 0.0
    %2090 = vmatpush1.msra.mxu0 0.0
    %2091 = vmatprep.subr.mxu0 0.0
    %2092 = vmatpush1.msra.mxu0 0.0
    %2093 = vmatprep.subr.mxu0 0.0
    %2094 = vmatpush1.msra.mxu0 0.0
    %2095 = vmatprep.subr.mxu0 0.0
    %2096 = vmatpush1.msra.mxu0 0.0
    %2097 = vmatprep.subr.mxu0 0.0
    %2098 = vmatpush1.msra.mxu0 0.0
    %2099 = vmatprep.subr.mxu0 0.0
    %2100 = vmatpush1.msra.mxu0 0.0
    %2101 = vmatprep.subr.mxu0 0.0
    %2102 = vmatpush1.msra.mxu0 0.0
    %2103 = vmatprep.subr.mxu0 0.0
    %2104 = vmatpush1.msra.mxu0 0.0
    %2105 = vmatprep.subr.mxu0 0.0
    %2106 = vmatpush1.msra.mxu0 0.0
    %2107 = vmatprep.subr.mxu0 0.0
    %2108 = vmatpush1.msra.mxu0 0.0
    %2109 = vmatprep.subr.mxu0 0.0
    %2110 = vmatpush1.msra.mxu0 0.0
    %2111 = vmatprep.subr.mxu0 0.0
    %2112 = vmatpush1.msra.mxu0 0.0
    %2113 = vmatprep.subr.mxu0 0.0
    %2114 = vmatpush1.msra.mxu0 0.0
    %2115 = vmatprep.subr.mxu0 0.0
    %2116 = vmatpush1.msra.mxu0 0.0
    %2117 = vmatprep.subr.mxu0 0.0
    %2118 = vmatpush1.msra.mxu0 0.0
    %2119 = vmatprep.subr.mxu0 0.0
    %2120 = vmatpush1.msra.mxu0 0.0
    %2121 = vmatprep.subr.mxu0 0.0
    %2122 = vmatpush1.msra.mxu0 0.0
    %2123 = vmatprep.subr.mxu0 0.0
    %2124 = vmatpush1.msra.mxu0 0.0
    %2125 = vmatprep.subr.mxu0 0.0
    %2126 = vmatpush1.msra.mxu0 0.0
    %2127 = vmatprep.subr.mxu0 0.0
    %2128 = vmatpush1.msra.mxu0 0.0
    %2129 = vmatprep.subr.mxu0 0.0
    %2130 = vmatpush1.msra.mxu0 0.0
    %2131 = vmatprep.subr.mxu0 0.0
    %2132 = vmatpush1.msra.mxu0 0.0
    %2133 = vmatprep.subr.mxu0 0.0
    %2134 = vmatpush1.msra.mxu0 0.0
    %2135 = vmatprep.subr.mxu0 0.0
    %2136 = vmatpush1.msra.mxu0 0.0
    %2137 = vmatprep.subr.mxu0 0.0
    %2138 = vmatpush1.msra.mxu0 0.0
    %2139 = vmatprep.subr.mxu0 0.0
    %2140 = vmatpush1.msra.mxu0 0.0
    %2141 = vmatprep.subr.mxu0 0.0
    %2142 = vmatpush1.msra.mxu0 0.0
    %2143 = vmatprep.subr.mxu0 0.0
    %2144 = vmatpush1.msra.mxu0 0.0
    %2145 = vmatprep.subr.mxu0 0.0
    %2146 = vmatpush1.msra.mxu0 0.0
    %2147 = vmatprep.subr.mxu0 0.0
    %2148 = vmatpush1.msra.mxu0 0.0
    %2149 = vmatprep.mubr.f32.mxu0 0.0
    %2150 = vmatmul.mubr.f32.gmra.mrb[0].mxu0 %v2080
    %v2151 = vpop.f32.mrb[0].mxu0
    %v2152 = vadd.f32 0.0, %v2151
    %v2153 = vpop.f32.mrb[0].mxu0
    %2154 = vmatprep.mubr.f32.mxu0 0.0
    %2155 = vmatmul.mubr.f32.gmra.mrb[0].mxu0 %v2083
    %v2156 = vpop.f32.mrb[0].mxu0
    %v2157 = vadd.f32 0.0, %v2156
    %v2158 = vpop.f32.mrb[0].mxu0
    %2159 = vdwg.mxu0
    %2160 = vrot.lane.b32.xlu0 %v1542, 104
    %v2161 = vpop.permute.xlu0 %2160
    %2162 = vrot.lane.b32.xlu0 %v1547, 104
    %v2163 = vpop.permute.xlu0 %2162
    %2164 = vrot.lane.b32.xlu0 %v1542, 72
    %v2165 = vpop.permute.xlu0 %2164
    %2166 = vrot.lane.b32.xlu0 %v1547, 72
    %v2167 = vpop.permute.xlu0 %2166
    %v2168 = vsel %vm272, %v2161, 0
    %v2170 = vsel %vm272, %v2163, 0
    %v2172 = vsel %vm272, %v2165, 0
    %v2174 = vsel %vm272, %v2167, 0
    %2176 = vmatprep.subr.mxu0 0.0
    %2177 = vmatpush1.xpose.msra.mxu0 %v2172
    %2178 = vmatprep.subr.mxu0 0.0
    %2179 = vmatpush1.xpose.msra.mxu0 %v2174
    %2180 = vmatprep.subr.mxu0 0.0
    %2181 = vmatpush1.xpose.msra.mxu0 0.0
    %2182 = vmatprep.subr.mxu0 0.0
    %2183 = vmatpush1.xpose.msra.mxu0 0.0
    %2184 = vmatprep.subr.mxu0 0.0
    %2185 = vmatpush1.xpose.msra.mxu0 0.0
    %2186 = vmatprep.subr.mxu0 0.0
    %2187 = vmatpush1.xpose.msra.mxu0 0.0
    %2188 = vmatprep.subr.mxu0 0.0
    %2189 = vmatpush1.xpose.msra.mxu0 0.0
    %2190 = vmatprep.subr.mxu0 0.0
    %2191 = vmatpush1.xpose.msra.mxu0 0.0
    %2192 = vmatprep.subr.mxu0 0.0
    %2193 = vmatpush1.xpose.msra.mxu0 0.0
    %2194 = vmatprep.subr.mxu0 0.0
    %2195 = vmatpush1.xpose.msra.mxu0 0.0
    %2196 = vmatprep.subr.mxu0 0.0
    %2197 = vmatpush1.xpose.msra.mxu0 0.0
    %2198 = vmatprep.subr.mxu0 0.0
    %2199 = vmatpush1.xpose.msra.mxu0 0.0
    %2200 = vmatprep.subr.mxu0 0.0
    %2201 = vmatpush1.xpose.msra.mxu0 0.0
    %2202 = vmatprep.subr.mxu0 0.0
    %2203 = vmatpush1.xpose.msra.mxu0 0.0
    %2204 = vmatprep.subr.mxu0 0.0
    %2205 = vmatpush1.xpose.msra.mxu0 0.0
    %2206 = vmatprep.subr.mxu0 0.0
    %2207 = vmatpush1.xpose.msra.mxu0 0.0
    %2208 = vmatprep.subr.mxu0 0.0
    %2209 = vmatpush1.xpose.msra.mxu0 0.0
    %2210 = vmatprep.subr.mxu0 0.0
    %2211 = vmatpush1.xpose.msra.mxu0 0.0
    %2212 = vmatprep.subr.mxu0 0.0
    %2213 = vmatpush1.xpose.msra.mxu0 0.0
    %2214 = vmatprep.subr.mxu0 0.0
    %2215 = vmatpush1.xpose.msra.mxu0 0.0
    %2216 = vmatprep.subr.mxu0 0.0
    %2217 = vmatpush1.xpose.msra.mxu0 0.0
    %2218 = vmatprep.subr.mxu0 0.0
    %2219 = vmatpush1.xpose.msra.mxu0 0.0
    %2220 = vmatprep.subr.mxu0 0.0
    %2221 = vmatpush1.xpose.msra.mxu0 0.0
    %2222 = vmatprep.subr.mxu0 0.0
    %2223 = vmatpush1.xpose.msra.mxu0 0.0
    %2224 = vmatprep.subr.mxu0 0.0
    %2225 = vmatpush1.xpose.msra.mxu0 0.0
    %2226 = vmatprep.subr.mxu0 0.0
    %2227 = vmatpush1.xpose.msra.mxu0 0.0
    %2228 = vmatprep.subr.mxu0 0.0
    %2229 = vmatpush1.xpose.msra.mxu0 0.0
    %2230 = vmatprep.subr.mxu0 0.0
    %2231 = vmatpush1.xpose.msra.mxu0 0.0
    %2232 = vmatprep.subr.mxu0 0.0
    %2233 = vmatpush1.xpose.msra.mxu0 0.0
    %2234 = vmatprep.subr.mxu0 0.0
    %2235 = vmatpush1.xpose.msra.mxu0 0.0
    %2236 = vmatprep.subr.mxu0 0.0
    %2237 = vmatpush1.xpose.msra.mxu0 0.0
    %2238 = vmatprep.subr.mxu0 0.0
    %2239 = vmatpush1.xpose.msra.mxu0 0.0
    %2240 = vmatprep.mubr.f32.mxu0 0.0
    %2241 = vmatmul.mubr.f32.gmra.mrb[0].mxu0 %v2168
    %v2242 = vpop.f32.mrb[0].mxu0
    %v2243 = vadd.f32 0.0, %v2242
    %v2244 = vpop.f32.mrb[0].mxu0
    %2245 = vmatprep.mubr.f32.mxu0 0.0
    %2246 = vmatmul.mubr.f32.gmra.mrb[0].mxu0 %v2170
    %v2247 = vpop.f32.mrb[0].mxu0
    %v2248 = vadd.f32 0.0, %v2247
    %v2249 = vpop.f32.mrb[0].mxu0
    %2250 = vdwg.mxu0
    %v2251 = vmul.f32 %v2243, 0.35355338
    %v2252 = vmul.f32 %v2248, 0.35355338
    %v2253 = vadd.f32 %v2251, %v154
    %v2254 = vadd.f32 %v2252, %v155
    %v2255 = vsel %vm360, %v2253, -inf
    %2256 = vmax.xlane.f32.xlu0 %v2255
    %v2257 = vpop.xlane.xlu0 %2256
    %v2258 = vsel %vm360, %v2254, -inf
    %2259 = vmax.xlane.f32.xlu0 %v2258
    %v2260 = vpop.xlane.xlu0 %2259
    %v2261 = vsub.f32 %v2253, %v2257
    %v2262 = vsub.f32 %v2254, %v2260
    %v2263 = vmul.f32 %v2261, 1.442695
    %v2264 = vpow.pop %v2263
    %v2265 = vmul.f32 %v2262, 1.442695
    %v2266 = vpow.pop %v2265
    %v2267 = vsel %vm360, %v2264, 0.0
    %2268 = vadd.xlane.f32.xlu0 %v2267
    %v2269 = vpop.xlane.xlu0 %2268
    %v2270 = vsel %vm360, %v2266, 0.0
    %2271 = vadd.xlane.f32.xlu0 %v2270
    %v2272 = vpop.xlane.xlu0 %2271
    %v2273 = vrcp.pop %v2269
    %v2274 = vrcp.pop %v2272
    %v2275 = vmul.f32 %v2264, %v2273
    %v2276 = vmul.f32 %v2266, %v2274
    %2277 = vrot.lane.b32.xlu0 %v1542, 40
    %v2278 = vpop.permute.xlu0 %2277
    %2279 = vrot.lane.b32.xlu0 %v1547, 40
    %v2280 = vpop.permute.xlu0 %2279
    %v2284 = vsel %vm360, %v2275, 0
    %v2287 = vsel %vm360, %v2276, 0
    %2289 = vmatprep.subr.mxu0 0.0
    %2290 = vmatpush1.msra.mxu0 %v2278
    %2291 = vmatprep.subr.mxu0 0.0
    %2292 = vmatpush1.msra.mxu0 %v2280
    %2293 = vmatprep.subr.mxu0 0.0
    %2294 = vmatpush1.msra.mxu0 0.0
    %2295 = vmatprep.subr.mxu0 0.0
    %2296 = vmatpush1.msra.mxu0 0.0
    %2297 = vmatprep.subr.mxu0 0.0
    %2298 = vmatpush1.msra.mxu0 0.0
    %2299 = vmatprep.subr.mxu0 0.0
    %2300 = vmatpush1.msra.mxu0 0.0
    %2301 = vmatprep.subr.mxu0 0.0
    %2302 = vmatpush1.msra.mxu0 0.0
    %2303 = vmatprep.subr.mxu0 0.0
    %2304 = vmatpush1.msra.mxu0 0.0
    %2305 = vmatprep.subr.mxu0 0.0
    %2306 = vmatpush1.msra.mxu0 0.0
    %2307 = vmatprep.subr.mxu0 0.0
    %2308 = vmatpush1.msra.mxu0 0.0
    %2309 = vmatprep.subr.mxu0 0.0
    %2310 = vmatpush1.msra.mxu0 0.0
    %2311 = vmatprep.subr.mxu0 0.0
    %2312 = vmatpush1.msra.mxu0 0.0
    %2313 = vmatprep.subr.mxu0 0.0
    %2314 = vmatpush1.msra.mxu0 0.0
    %2315 = vmatprep.subr.mxu0 0.0
    %2316 = vmatpush1.msra.mxu0 0.0
    %2317 = vmatprep.subr.mxu0 0.0
    %2318 = vmatpush1.msra.mxu0 0.0
    %2319 = vmatprep.subr.mxu0 0.0
    %2320 = vmatpush1.msra.mxu0 0.0
    %2321 = vmatprep.subr.mxu0 0.0
    %2322 = vmatpush1.msra.mxu0 0.0
    %2323 = vmatprep.subr.mxu0 0.0
    %2324 = vmatpush1.msra.mxu0 0.0
    %2325 = vmatprep.subr.mxu0 0.0
    %2326 = vmatpush1.msra.mxu0 0.0
    %2327 = vmatprep.subr.mxu0 0.0
    %2328 = vmatpush1.msra.mxu0 0.0
    %2329 = vmatprep.subr.mxu0 0.0
    %2330 = vmatpush1.msra.mxu0 0.0
    %2331 = vmatprep.subr.mxu0 0.0
    %2332 = vmatpush1.msra.mxu0 0.0
    %2333 = vmatprep.subr.mxu0 0.0
    %2334 = vmatpush1.msra.mxu0 0.0
    %2335 = vmatprep.subr.mxu0 0.0
    %2336 = vmatpush1.msra.mxu0 0.0
    %2337 = vmatprep.subr.mxu0 0.0
    %2338 = vmatpush1.msra.mxu0 0.0
    %2339 = vmatprep.subr.mxu0 0.0
    %2340 = vmatpush1.msra.mxu0 0.0
    %2341 = vmatprep.subr.mxu0 0.0
    %2342 = vmatpush1.msra.mxu0 0.0
    %2343 = vmatprep.subr.mxu0 0.0
    %2344 = vmatpush1.msra.mxu0 0.0
    %2345 = vmatprep.subr.mxu0 0.0
    %2346 = vmatpush1.msra.mxu0 0.0
    %2347 = vmatprep.subr.mxu0 0.0
    %2348 = vmatpush1.msra.mxu0 0.0
    %2349 = vmatprep.subr.mxu0 0.0
    %2350 = vmatpush1.msra.mxu0 0.0
    %2351 = vmatprep.subr.mxu0 0.0
    %2352 = vmatpush1.msra.mxu0 0.0
    %2353 = vmatprep.mubr.f32.mxu0 0.0
    %2354 = vmatmul.mubr.f32.gmra.mrb[0].mxu0 %v2284
    %v2355 = vpop.f32.mrb[0].mxu0
    %v2356 = vadd.f32 0.0, %v2355
    %v2357 = vpop.f32.mrb[0].mxu0
    %2358 = vmatprep.mubr.f32.mxu0 0.0
    %2359 = vmatmul.mubr.f32.gmra.mrb[0].mxu0 %v2287
    %v2360 = vpop.f32.mrb[0].mxu0
    %v2361 = vadd.f32 0.0, %v2360
    %v2362 = vpop.f32.mrb[0].mxu0
    %2363 = vdwg.mxu0
    %2366 = vrot.lane.b32.xlu0 %v1948, 8
    %v2367 = vpop.permute.xlu0 %2366
    %2368 = vrot.lane.b32.xlu0 %v1953, 8
    %v2369 = vpop.permute.xlu0 %2368
    %2374 = vrot.lane.b32.xlu0 %v2152, 16
    %v2375 = vpop.permute.xlu0 %2374
    %2376 = vrot.lane.b32.xlu0 %v2157, 16
    %v2377 = vpop.permute.xlu0 %2376
    %2382 = vrot.lane.b32.xlu0 %v2356, 24
    %v2383 = vpop.permute.xlu0 %2382
    %2384 = vrot.lane.b32.xlu0 %v2361, 24
    %v2385 = vpop.permute.xlu0 %2384
    %v2388 = vsel %vm272, %v1744, %v2367
    %v2389 = vsel %vm272, %v1749, %v2369
    %v2390 = vsel %vm360, %v2388, %v2375
    %v2391 = vsel %vm360, %v2389, %v2377
    %v2392 = vsel %vm1110, %v2390, %v2383
    %v2393 = vsel %vm1110, %v2391, %v2385
    %s2394 = scalar_lea.vmem %s4, 32
    %v2395 = vld [vmem:[%s2394] sm:$0xff]
    %v2396 = vld [vmem:[%s2394 + $0x8] sm:$0xff]
    %v2397 = vld [vmem:[%s2394 + $0x10] sm:$0xff]
    %v2398 = vld [vmem:[%s2394 + $0x18] sm:$0xff]
    %v2400 = vsel %vm158, %v2392, 0
    %v2403 = vsel %vm158, %v2393, 0
    %2405 = vmatprep.subr.mxu0 0.0
    %2406 = vmatpush1.msra.mxu0 %v2395
    %2407 = vmatprep.subr.mxu0 0.0
    %2408 = vmatpush1.msra.mxu0 %v2396
    %2409 = vmatprep.subr.mxu0 0.0
    %2410 = vmatpush1.msra.mxu0 %v2397
    %2411 = vmatprep.subr.mxu0 0.0
    %2412 = vmatpush1.msra.mxu0 %v2398
    %2413 = vmatprep.subr.mxu0 0.0
    %2414 = vmatpush1.msra.mxu0 0.0
    %2415 = vmatprep.subr.mxu0 0.0
    %2416 = vmatpush1.msra.mxu0 0.0
    %2417 = vmatprep.subr.mxu0 0.0
    %2418 = vmatpush1.msra.mxu0 0.0
    %2419 = vmatprep.subr.mxu0 0.0
    %2420 = vmatpush1.msra.mxu0 0.0
    %2421 = vmatprep.subr.mxu0 0.0
    %2422 = vmatpush1.msra.mxu0 0.0
    %2423 = vmatprep.subr.mxu0 0.0
    %2424 = vmatpush1.msra.mxu0 0.0
    %2425 = vmatprep.subr.mxu0 0.0
    %2426 = vmatpush1.msra.mxu0 0.0
    %2427 = vmatprep.subr.mxu0 0.0
    %2428 = vmatpush1.msra.mxu0 0.0
    %2429 = vmatprep.subr.mxu0 0.0
    %2430 = vmatpush1.msra.mxu0 0.0
    %2431 = vmatprep.subr.mxu0 0.0
    %2432 = vmatpush1.msra.mxu0 0.0
    %2433 = vmatprep.subr.mxu0 0.0
    %2434 = vmatpush1.msra.mxu0 0.0
    %2435 = vmatprep.subr.mxu0 0.0
    %2436 = vmatpush1.msra.mxu0 0.0
    %2437 = vmatprep.subr.mxu0 0.0
    %2438 = vmatpush1.msra.mxu0 0.0
    %2439 = vmatprep.subr.mxu0 0.0
    %2440 = vmatpush1.msra.mxu0 0.0
    %2441 = vmatprep.subr.mxu0 0.0
    %2442 = vmatpush1.msra.mxu0 0.0
    %2443 = vmatprep.subr.mxu0 0.0
    %2444 = vmatpush1.msra.mxu0 0.0
    %2445 = vmatprep.subr.mxu0 0.0
    %2446 = vmatpush1.msra.mxu0 0.0
    %2447 = vmatprep.subr.mxu0 0.0
    %2448 = vmatpush1.msra.mxu0 0.0
    %2449 = vmatprep.subr.mxu0 0.0
    %2450 = vmatpush1.msra.mxu0 0.0
    %2451 = vmatprep.subr.mxu0 0.0
    %2452 = vmatpush1.msra.mxu0 0.0
    %2453 = vmatprep.subr.mxu0 0.0
    %2454 = vmatpush1.msra.mxu0 0.0
    %2455 = vmatprep.subr.mxu0 0.0
    %2456 = vmatpush1.msra.mxu0 0.0
    %2457 = vmatprep.subr.mxu0 0.0
    %2458 = vmatpush1.msra.mxu0 0.0
    %2459 = vmatprep.subr.mxu0 0.0
    %2460 = vmatpush1.msra.mxu0 0.0
    %2461 = vmatprep.subr.mxu0 0.0
    %2462 = vmatpush1.msra.mxu0 0.0
    %2463 = vmatprep.subr.mxu0 0.0
    %2464 = vmatpush1.msra.mxu0 0.0
    %2465 = vmatprep.subr.mxu0 0.0
    %2466 = vmatpush1.msra.mxu0 0.0
    %2467 = vmatprep.subr.mxu0 0.0
    %2468 = vmatpush1.msra.mxu0 0.0
    %2469 = vmatprep.mubr.f32.mxu0 0.0
    %2470 = vmatmul.mubr.f32.gmra.mrb[0].mxu0 %v2400
    %v2471 = vpop.f32.mrb[0].mxu0
    %v2472 = vadd.f32 0.0, %v2471
    %v2473 = vpop.f32.mrb[0].mxu0
    %2474 = vmatprep.mubr.f32.mxu0 0.0
    %2475 = vmatmul.mubr.f32.gmra.mrb[0].mxu0 %v2403
    %v2476 = vpop.f32.mrb[0].mxu0
    %v2477 = vadd.f32 0.0, %v2476
    %v2478 = vpop.f32.mrb[0].mxu0
    %2479 = vdwg.mxu0
    %v2480 = vadd.f32 %v1438, %v2472
    %v2481 = vadd.f32 %v1439, %v2477
    %s2482 = scalar_lea.vmem %s5, 1
    %v2483 = vld [vmem:[%s2482] sm:$0x1]
    %v2485 = vlaneseq
    %v2486 = vshrl.u32 %v2485, 7
    %v2487 = vsub.s32 0, %v2486
    %v2488 = vrot.slane %v2483, %v2487
    %v2490 = vadd.f32 %v2480, %v2488
    %v2491 = vadd.f32 %v2481, %v2488
    %v2492 = vmul.f32 %v2490, %v2490
    %v2493 = vmul.f32 %v2491, %v2491
    %v2494 = vsel %vm158, %v2492, 0.0
    %2495 = vadd.xlane.f32.xlu0 %v2494
    %v2496 = vpop.xlane.xlu0 %2495
    %v2497 = vsel %vm158, %v2493, 0.0
    %2498 = vadd.xlane.f32.xlu0 %v2497
    %v2499 = vpop.xlane.xlu0 %2498
    %v2500 = vmul.f32 %v2496, %v165
    %v2501 = vmul.f32 %v2499, %v165
    %v2502 = vadd.f32 %v2500, 1.1920929e-07
    %v2503 = vadd.f32 %v2501, 1.1920929e-07
    %v2504 = vrsqrt.pop %v2502
    %v2505 = vrsqrt.pop %v2503
    %v2506 = vmul.f32 %v2490, %v2504
    %v2507 = vmul.f32 %v2491, %v2505
    %s2508 = scalar_lea.vmem %s6, 32
    %v2509 = vld [vmem:[%s2508] sm:$0xff]
    %v2510 = vld [vmem:[%s2508 + $0x8] sm:$0xff]
    %v2511 = vld [vmem:[%s2508 + $0x10] sm:$0xff]
    %v2512 = vld [vmem:[%s2508 + $0x18] sm:$0xff]
    %s2513 = scalar_lea.vmem %s7, 1
    %v2514 = vld [vmem:[%s2513] sm:$0x1]
    %v2516 = vlaneseq
    %v2517 = vshrl.u32 %v2516, 7
    %v2518 = vsub.s32 0, %v2517
    %v2519 = vrot.slane %v2514, %v2518
    %v2522 = vsel %vm158, %v2506, 0
    %v2525 = vsel %vm158, %v2507, 0
    %2527 = vmatprep.subr.mxu0 0.0
    %2528 = vmatpush1.msra.mxu0 %v2509
    %2529 = vmatprep.subr.mxu0 0.0
    %2530 = vmatpush1.msra.mxu0 %v2510
    %2531 = vmatprep.subr.mxu0 0.0
    %2532 = vmatpush1.msra.mxu0 %v2511
    %2533 = vmatprep.subr.mxu0 0.0
    %2534 = vmatpush1.msra.mxu0 %v2512
    %2535 = vmatprep.subr.mxu0 0.0
    %2536 = vmatpush1.msra.mxu0 0.0
    %2537 = vmatprep.subr.mxu0 0.0
    %2538 = vmatpush1.msra.mxu0 0.0
    %2539 = vmatprep.subr.mxu0 0.0
    %2540 = vmatpush1.msra.mxu0 0.0
    %2541 = vmatprep.subr.mxu0 0.0
    %2542 = vmatpush1.msra.mxu0 0.0
    %2543 = vmatprep.subr.mxu0 0.0
    %2544 = vmatpush1.msra.mxu0 0.0
    %2545 = vmatprep.subr.mxu0 0.0
    %2546 = vmatpush1.msra.mxu0 0.0
    %2547 = vmatprep.subr.mxu0 0.0
    %2548 = vmatpush1.msra.mxu0 0.0
    %2549 = vmatprep.subr.mxu0 0.0
    %2550 = vmatpush1.msra.mxu0 0.0
    %2551 = vmatprep.subr.mxu0 0.0
    %2552 = vmatpush1.msra.mxu0 0.0
    %2553 = vmatprep.subr.mxu0 0.0
    %2554 = vmatpush1.msra.mxu0 0.0
    %2555 = vmatprep.subr.mxu0 0.0
    %2556 = vmatpush1.msra.mxu0 0.0
    %2557 = vmatprep.subr.mxu0 0.0
    %2558 = vmatpush1.msra.mxu0 0.0
    %2559 = vmatprep.subr.mxu0 0.0
    %2560 = vmatpush1.msra.mxu0 0.0
    %2561 = vmatprep.subr.mxu0 0.0
    %2562 = vmatpush1.msra.mxu0 0.0
    %2563 = vmatprep.subr.mxu0 0.0
    %2564 = vmatpush1.msra.mxu0 0.0
    %2565 = vmatprep.subr.mxu0 0.0
    %2566 = vmatpush1.msra.mxu0 0.0
    %2567 = vmatprep.subr.mxu0 0.0
    %2568 = vmatpush1.msra.mxu0 0.0
    %2569 = vmatprep.subr.mxu0 0.0
    %2570 = vmatpush1.msra.mxu0 0.0
    %2571 = vmatprep.subr.mxu0 0.0
    %2572 = vmatpush1.msra.mxu0 0.0
    %2573 = vmatprep.subr.mxu0 0.0
    %2574 = vmatpush1.msra.mxu0 0.0
    %2575 = vmatprep.subr.mxu0 0.0
    %2576 = vmatpush1.msra.mxu0 0.0
    %2577 = vmatprep.subr.mxu0 0.0
    %2578 = vmatpush1.msra.mxu0 0.0
    %2579 = vmatprep.subr.mxu0 0.0
    %2580 = vmatpush1.msra.mxu0 0.0
    %2581 = vmatprep.subr.mxu0 0.0
    %2582 = vmatpush1.msra.mxu0 0.0
    %2583 = vmatprep.subr.mxu0 0.0
    %2584 = vmatpush1.msra.mxu0 0.0
    %2585 = vmatprep.subr.mxu0 0.0
    %2586 = vmatpush1.msra.mxu0 0.0
    %2587 = vmatprep.subr.mxu0 0.0
    %2588 = vmatpush1.msra.mxu0 0.0
    %2589 = vmatprep.subr.mxu0 0.0
    %2590 = vmatpush1.msra.mxu0 0.0
    %2591 = vmatprep.mubr.f32.mxu0 0.0
    %2592 = vmatmul.mubr.f32.gmra.mrb[0].mxu0 %v2522
    %v2593 = vpop.f32.mrb[0].mxu0
    %v2594 = vadd.f32 %v2519, %v2593
    %v2595 = vpop.f32.mrb[0].mxu0
    %2596 = vmatprep.mubr.f32.mxu0 0.0
    %2597 = vmatmul.mubr.f32.gmra.mrb[0].mxu0 %v2525
    %v2598 = vpop.f32.mrb[0].mxu0
    %v2599 = vadd.f32 %v2519, %v2598
    %v2600 = vpop.f32.mrb[0].mxu0
    %2601 = vdwg.mxu0
    %v2602 = vsub.f32 0.0, %v2594
    %v2603 = vsub.f32 0.0, %v2599
    %v2604 = vmul.f32 %v2602, 1.442695
    %v2605 = vpow.pop %v2604
    %v2606 = vmul.f32 %v2603, 1.442695
    %v2607 = vpow.pop %v2606
    %v2608 = vadd.f32 %v2605, 1.0
    %v2609 = vadd.f32 %v2607, 1.0
    %v2610 = vrcp.pop %v2608
    %v2611 = vrcp.pop %v2609
    %v2612 = vmul.f32 %v2594, %v2610
    %v2613 = vmul.f32 %v2599, %v2611
    %2616 = vrot.lane.b32.xlu0 %v2594, 64
    %v2617 = vpop.permute.xlu0 %2616
    %2618 = vrot.lane.b32.xlu0 %v2599, 64
    %v2619 = vpop.permute.xlu0 %2618
    %v2622 = vmul.f32 %v2612, %v2617
    %v2623 = vmul.f32 %v2613, %v2619
    %s2624 = scalar_lea.vmem %s8, 64
    %v2625 = vld [vmem:[%s2624] sm:$0xff]
    %v2626 = vld [vmem:[%s2624 + $0x8] sm:$0xff]
    %v2627 = vld [vmem:[%s2624 + $0x10] sm:$0xff]
    %v2628 = vld [vmem:[%s2624 + $0x18] sm:$0xff]
    %v2629 = vld [vmem:[%s2624 + $0x20] sm:$0xff]
    %v2630 = vld [vmem:[%s2624 + $0x28] sm:$0xff]
    %v2631 = vld [vmem:[%s2624 + $0x30] sm:$0xff]
    %v2632 = vld [vmem:[%s2624 + $0x38] sm:$0xff]
    %v2634 = vsel %vm1347, %v2622, 0
    %v2637 = vsel %vm1347, %v2623, 0
    %2639 = vmatprep.subr.mxu0 0.0
    %2640 = vmatpush1.msra.mxu0 %v2625
    %2641 = vmatprep.subr.mxu0 0.0
    %2642 = vmatpush1.msra.mxu0 %v2626
    %2643 = vmatprep.subr.mxu0 0.0
    %2644 = vmatpush1.msra.mxu0 %v2627
    %2645 = vmatprep.subr.mxu0 0.0
    %2646 = vmatpush1.msra.mxu0 %v2628
    %2647 = vmatprep.subr.mxu0 0.0
    %2648 = vmatpush1.msra.mxu0 %v2629
    %2649 = vmatprep.subr.mxu0 0.0
    %2650 = vmatpush1.msra.mxu0 %v2630
    %2651 = vmatprep.subr.mxu0 0.0
    %2652 = vmatpush1.msra.mxu0 %v2631
    %2653 = vmatprep.subr.mxu0 0.0
    %2654 = vmatpush1.msra.mxu0 %v2632
    %2655 = vmatprep.subr.mxu0 0.0
    %2656 = vmatpush1.msra.mxu0 0.0
    %2657 = vmatprep.subr.mxu0 0.0
    %2658 = vmatpush1.msra.mxu0 0.0
    %2659 = vmatprep.subr.mxu0 0.0
    %2660 = vmatpush1.msra.mxu0 0.0
    %2661 = vmatprep.subr.mxu0 0.0
    %2662 = vmatpush1.msra.mxu0 0.0
    %2663 = vmatprep.subr.mxu0 0.0
    %2664 = vmatpush1.msra.mxu0 0.0
    %2665 = vmatprep.subr.mxu0 0.0
    %2666 = vmatpush1.msra.mxu0 0.0
    %2667 = vmatprep.subr.mxu0 0.0
    %2668 = vmatpush1.msra.mxu0 0.0
    %2669 = vmatprep.subr.mxu0 0.0
    %2670 = vmatpush1.msra.mxu0 0.0
    %2671 = vmatprep.subr.mxu0 0.0
    %2672 = vmatpush1.msra.mxu0 0.0
    %2673 = vmatprep.subr.mxu0 0.0
    %2674 = vmatpush1.msra.mxu0 0.0
    %2675 = vmatprep.subr.mxu0 0.0
    %2676 = vmatpush1.msra.mxu0 0.0
    %2677 = vmatprep.subr.mxu0 0.0
    %2678 = vmatpush1.msra.mxu0 0.0
    %2679 = vmatprep.subr.mxu0 0.0
    %2680 = vmatpush1.msra.mxu0 0.0
    %2681 = vmatprep.subr.mxu0 0.0
    %2682 = vmatpush1.msra.mxu0 0.0
    %2683 = vmatprep.subr.mxu0 0.0
    %2684 = vmatpush1.msra.mxu0 0.0
    %2685 = vmatprep.subr.mxu0 0.0
    %2686 = vmatpush1.msra.mxu0 0.0
    %2687 = vmatprep.subr.mxu0 0.0
    %2688 = vmatpush1.msra.mxu0 0.0
    %2689 = vmatprep.subr.mxu0 0.0
    %2690 = vmatpush1.msra.mxu0 0.0
    %2691 = vmatprep.subr.mxu0 0.0
    %2692 = vmatpush1.msra.mxu0 0.0
    %2693 = vmatprep.subr.mxu0 0.0
    %2694 = vmatpush1.msra.mxu0 0.0
    %2695 = vmatprep.subr.mxu0 0.0
    %2696 = vmatpush1.msra.mxu0 0.0
    %2697 = vmatprep.subr.mxu0 0.0
    %2698 = vmatpush1.msra.mxu0 0.0
    %2699 = vmatprep.subr.mxu0 0.0
    %2700 = vmatpush1.msra.mxu0 0.0
    %2701 = vmatprep.subr.mxu0 0.0
    %2702 = vmatpush1.msra.mxu0 0.0
    %2703 = vmatprep.mubr.f32.mxu0 0.0
    %2704 = vmatmul.mubr.f32.gmra.mrb[0].mxu0 %v2634
    %v2705 = vpop.f32.mrb[0].mxu0
    %v2706 = vadd.f32 0.0, %v2705
    %v2707 = vpop.f32.mrb[0].mxu0
    %2708 = vmatprep.mubr.f32.mxu0 0.0
    %2709 = vmatmul.mubr.f32.gmra.mrb[0].mxu0 %v2637
    %v2710 = vpop.f32.mrb[0].mxu0
    %v2711 = vadd.f32 0.0, %v2710
    %v2712 = vpop.f32.mrb[0].mxu0
    %2713 = vdwg.mxu0
    %v2714 = vadd.f32 %v2490, %v2706
    %v2715 = vadd.f32 %v2491, %v2711
    %s2716 = scalar_lea.vmem %s9, 1
    %v2717 = vld [vmem:[%s2716] sm:$0x1]
    %v2719 = vlaneseq
    %v2720 = vshrl.u32 %v2719, 7
    %v2721 = vsub.s32 0, %v2720
    %v2722 = vrot.slane %v2717, %v2721
    %v2724 = vadd.f32 %v2714, %v2722
    %v2725 = vadd.f32 %v2715, %v2722
    %v2726 = vmul.f32 %v2724, %v2724
    %v2727 = vmul.f32 %v2725, %v2725
    %v2728 = vsel %vm158, %v2726, 0.0
    %2729 = vadd.xlane.f32.xlu0 %v2728
    %v2730 = vpop.xlane.xlu0 %2729
    %v2731 = vsel %vm158, %v2727, 0.0
    %2732 = vadd.xlane.f32.xlu0 %v2731
    %v2733 = vpop.xlane.xlu0 %2732
    %v2734 = vmul.f32 %v2730, %v165
    %v2735 = vmul.f32 %v2733, %v165
    %v2736 = vadd.f32 %v2734, 1.1920929e-07
    %v2737 = vadd.f32 %v2735, 1.1920929e-07
    %v2738 = vrsqrt.pop %v2736
    %v2739 = vrsqrt.pop %v2737
    %v2740 = vmul.f32 %v2724, %v2738
    %v2741 = vmul.f32 %v2725, %v2739
    %v2742 = vld [vmem:[%s10] sm:$0xff]
    %v2743 = vld [vmem:[%s10 + $0x8] sm:$0xff]
    %v2744 = vld [vmem:[%s10 + $0x10] sm:$0xff]
    %v2745 = vld [vmem:[%s10 + $0x18] sm:$0xff]
    %v2747 = vsel %vm158, %v2740, 0
    %v2750 = vsel %vm158, %v2741, 0
    %2752 = vmatprep.subr.mxu0 0.0
    %2753 = vmatpush1.msra.mxu0 %v2742
    %2754 = vmatprep.subr.mxu0 0.0
    %2755 = vmatpush1.msra.mxu0 %v2743
    %2756 = vmatprep.subr.mxu0 0.0
    %2757 = vmatpush1.msra.mxu0 %v2744
    %2758 = vmatprep.subr.mxu0 0.0
    %2759 = vmatpush1.msra.mxu0 %v2745
    %2760 = vmatprep.subr.mxu0 0.0
    %2761 = vmatpush1.msra.mxu0 0.0
    %2762 = vmatprep.subr.mxu0 0.0
    %2763 = vmatpush1.msra.mxu0 0.0
    %2764 = vmatprep.subr.mxu0 0.0
    %2765 = vmatpush1.msra.mxu0 0.0
    %2766 = vmatprep.subr.mxu0 0.0
    %2767 = vmatpush1.msra.mxu0 0.0
    %2768 = vmatprep.subr.mxu0 0.0
    %2769 = vmatpush1.msra.mxu0 0.0
    %2770 = vmatprep.subr.mxu0 0.0
    %2771 = vmatpush1.msra.mxu0 0.0
    %2772 = vmatprep.subr.mxu0 0.0
    %2773 = vmatpush1.msra.mxu0 0.0
    %2774 = vmatprep.subr.mxu0 0.0
    %2775 = vmatpush1.msra.mxu0 0.0
    %2776 = vmatprep.subr.mxu0 0.0
    %2777 = vmatpush1.msra.mxu0 0.0
    %2778 = vmatprep.subr.mxu0 0.0
    %2779 = vmatpush1.msra.mxu0 0.0
    %2780 = vmatprep.subr.mxu0 0.0
    %2781 = vmatpush1.msra.mxu0 0.0
    %2782 = vmatprep.subr.mxu0 0.0
    %2783 = vmatpush1.msra.mxu0 0.0
    %2784 = vmatprep.subr.mxu0 0.0
    %2785 = vmatpush1.msra.mxu0 0.0
    %2786 = vmatprep.subr.mxu0 0.0
    %2787 = vmatpush1.msra.mxu0 0.0
    %2788 = vmatprep.subr.mxu0 0.0
    %2789 = vmatpush1.msra.mxu0 0.0
    %2790 = vmatprep.subr.mxu0 0.0
    %2791 = vmatpush1.msra.mxu0 0.0
    %2792 = vmatprep.subr.mxu0 0.0
    %2793 = vmatpush1.msra.mxu0 0.0
    %2794 = vmatprep.subr.mxu0 0.0
    %2795 = vmatpush1.msra.mxu0 0.0
    %2796 = vmatprep.subr.mxu0 0.0
    %2797 = vmatpush1.msra.mxu0 0.0
    %2798 = vmatprep.subr.mxu0 0.0
    %2799 = vmatpush1.msra.mxu0 0.0
    %2800 = vmatprep.subr.mxu0 0.0
    %2801 = vmatpush1.msra.mxu0 0.0
    %2802 = vmatprep.subr.mxu0 0.0
    %2803 = vmatpush1.msra.mxu0 0.0
    %2804 = vmatprep.subr.mxu0 0.0
    %2805 = vmatpush1.msra.mxu0 0.0
    %2806 = vmatprep.subr.mxu0 0.0
    %2807 = vmatpush1.msra.mxu0 0.0
    %2808 = vmatprep.subr.mxu0 0.0
    %2809 = vmatpush1.msra.mxu0 0.0
    %2810 = vmatprep.subr.mxu0 0.0
    %2811 = vmatpush1.msra.mxu0 0.0
    %2812 = vmatprep.subr.mxu0 0.0
    %2813 = vmatpush1.msra.mxu0 0.0
    %2814 = vmatprep.subr.mxu0 0.0
    %2815 = vmatpush1.msra.mxu0 0.0
    %2816 = vmatprep.mubr.f32.mxu0 0.0
    %2817 = vmatmul.mubr.f32.gmra.mrb[0].mxu0 %v2747
    %v2818 = vpop.f32.mrb[0].mxu0
    %v2819 = vadd.f32 0.0, %v2818
    %v2820 = vpop.f32.mrb[0].mxu0
    %2821 = vmatprep.mubr.f32.mxu0 0.0
    %2822 = vmatmul.mubr.f32.gmra.mrb[0].mxu0 %v2750
    %v2823 = vpop.f32.mrb[0].mxu0
    %v2824 = vadd.f32 0.0, %v2823
    %v2825 = vpop.f32.mrb[0].mxu0
    %2826 = vdwg.mxu0
    %2827 = vst [vmem:[#allocation2] sm:$0xff] %v2819
    %2828 = vst [vmem:[#allocation2 + $0x8] sm:$0xff] %v2824
    // Predicated region
    $region46: #{mock_gemma_forward.1} parent=1 // pred_check
      _
    $region47: #{mock_gemma_forward.1} parent=1 // pred_check_branch
      %2830 = sbr.rel (0) target = $region49
    $region48: #{mock_gemma_forward.1} parent=1 // pred_region
      %s2832 = ssub.s32 256, 256
      %2833 = vsyncadd [#allocation3], %s2832
      %s2834 = sshll.u32 [#allocation2], 4
      %s2835 = int_to_ptr.vmem [resolvable:$true] %s2834
      %2840 = dma.vmem_to_hbm [thread:$0]  %s2835, 256, %s11, [#allocation3], 128, 128, 8
    $region49: #{mock_gemma_forward.1} parent=1 // pred_fallthru
      _
    // Predicated region
    $region50: #{mock_gemma_forward.1} parent=1 // pred_check
      _
    $region51: #{mock_gemma_forward.1} parent=1 // pred_check_branch
      %2842 = sbr.rel (0) target = $region53
    $region52: #{mock_gemma_forward.1} parent=1 // pred_region
      %2843 = dma.done [#allocation3], 256
    $region53: #{mock_gemma_forward.1} parent=1 // pred_fallthru
      _
    %2844 = vsyncpa [#allocation3], 1

</llo_original>
